<compile_context>
chip_gen: v6e
topology: v6e:2x2x1
jax: 0.10.0
libtpu: 0.0.40
codegen_flags: <defaults>
</compile_context>

<pallas_src>
import functools
import math

import numpy as np

import jax
import jax.numpy as jnp
from jax.experimental import pallas as pl
from jax.experimental.pallas import tpu as pltpu


_AMIN = 1e-10        # AmplitudeToDB('power') amin
_MULT = 10.0         # 'power' -> multiplier 10
_TOP_DB = 80.0
_LOG_OFFSET = 1e-6   # log_mels offset


def _round_up(x, m):
    return ((x + m - 1) // m) * m


# ---------------------------------------------------------------------------
# Trace-time constants: mel filterbank + DCT matrix (mirror torchaudio buffers)
# ---------------------------------------------------------------------------
def _hz_to_mel_htk(freq):
    return 2595.0 * np.log10(1.0 + freq / 700.0)


def _mel_to_hz_htk(mels):
    return 700.0 * (10.0 ** (mels / 2595.0) - 1.0)


def melscale_fbanks(n_freqs, f_min, f_max, n_mels, sample_rate):
    """torchaudio.functional.melscale_fbanks (htk scale, norm=None)."""
    all_freqs = np.linspace(0.0, sample_rate // 2, n_freqs)
    m_pts = np.linspace(_hz_to_mel_htk(f_min), _hz_to_mel_htk(f_max), n_mels + 2)
    f_pts = _mel_to_hz_htk(m_pts)
    f_diff = f_pts[1:] - f_pts[:-1]                  # (n_mels + 1,)
    slopes = f_pts[None, :] - all_freqs[:, None]     # (n_freqs, n_mels + 2)
    down = (-slopes[:, :-2]) / f_diff[:-1]
    up = slopes[:, 2:] / f_diff[1:]
    fb = np.maximum(0.0, np.minimum(down, up))
    return fb.astype(np.float32)                     # (n_freqs, n_mels)


def create_dct(n_mfcc, n_mels, norm="ortho"):
    """torchaudio.functional.create_dct -> (n_mels, n_mfcc)."""
    n = np.arange(n_mels, dtype=np.float64)
    k = np.arange(n_mfcc, dtype=np.float64)[:, None]
    dct = np.cos(np.pi / n_mels * (n + 0.5) * k)     # (n_mfcc, n_mels)
    if norm is None:
        dct *= 2.0
    else:
        dct[0] *= 1.0 / math.sqrt(2.0)
        dct *= math.sqrt(2.0 / n_mels)
    return np.ascontiguousarray(dct.T).astype(np.float32)   # (n_mels, n_mfcc)


# ---------------------------------------------------------------------------
# Pass 1: per-batch running max of mel (needed for the exact top_db clamp)
# ---------------------------------------------------------------------------
def _make_melmax_kernel(C, T_real, t_tile):
    def kernel(x_ref, fbT_ref, mx_ref):
        t = pl.program_id(1)

        @pl.when(t == 0)
        def _init():
            mx_ref[...] = jnp.full_like(mx_ref, -jnp.inf)

        fbT = fbT_ref[...]                                        # (M, F_pad) bf16
        # Mask zero-padded time columns so arbitrary (even negative) inputs can't
        # perturb the per-batch max.
        col = jax.lax.broadcasted_iota(jnp.int32, (fbT.shape[0], t_tile), 1)
        valid = (t * t_tile + col) < T_real

        m = mx_ref[...]                                           # (1, 8, 128)
        for c in range(C):                                        # C is small/static
            mel = jnp.dot(fbT, x_ref[0, c],
                          preferred_element_type=jnp.float32)     # (M, T_tile)
            m = jnp.maximum(m, jnp.max(jnp.where(valid, mel, -jnp.inf)))
        mx_ref[...] = m
    return kernel


# ---------------------------------------------------------------------------
# Pass 2: mel matmul -> dB -> top_db clamp -> DCT matmul (fused, time-tiled)
# ---------------------------------------------------------------------------
def _make_mfcc_kernel(C, log_mels):
    def kernel(thr_ref, x_ref, fbT_ref, dctT_ref, o_ref):
        fbT = fbT_ref[...]                                        # (M, F_pad) bf16
        dctT = dctT_ref[...]                                      # (K, M) f32
        if not log_mels:
            # Per-batch threshold tile holds the same value in every element.
            thr = jnp.max(thr_ref[...])
        for c in range(C):
            mel = jnp.dot(fbT, x_ref[0, c],
                          preferred_element_type=jnp.float32)     # (M, T_tile)
            if log_mels:
                feat = jnp.log(mel + _LOG_OFFSET)
            else:
                db = _MULT * jnp.log10(jnp.maximum(mel, _AMIN))
                # db_multiplier = log10(max(1.0, amin)) == 0 -> nothing to subtract.
                feat = jnp.maximum(db, thr)
            o_ref[0, c] = jnp.dot(dctT, feat,
                                  preferred_element_type=jnp.float32
                                  ).astype(o_ref.dtype)           # (K, T_tile)
    return kernel


@functools.partial(jax.jit, static_argnames=("log_mels", "t_tile"))
def specto_mfcc(x, fb, dct_mat, *, log_mels=False, t_tile=512):
    """JAX/Pallas equivalent of SpectoMFCC().forward(x).

    x       : power spectrogram, shape (B, C, n_freqs, T), float32
    fb      : (n_freqs, n_mels) mel filterbank
    dct_mat : (n_mels, n_mfcc) DCT matrix
    returns : (B, C, n_mfcc, T) float32
    """
    B, C, F, T = x.shape
    M = fb.shape[1]
    K = dct_mat.shape[1]

    F_pad = _round_up(F, 128)                   # 201 -> 256: clean MXU K-tiles
    t_eff = min(t_tile, _round_up(T, 128))      # lane-dense time tile (mult of 128)
    T_pad = _round_up(T, t_eff)
    n_t = T_pad // t_eff

    # bf16 cast + zero pad of the activation (one fused XLA pass; fuses into the
    # spectrogram producer in a real pipeline).  Pads are zeros in both x and fbT
    # so mel is unchanged.
    x_p = jnp.pad(x.astype(jnp.bfloat16),
                  ((0, 0), (0, 0), (0, F_pad - F), (0, T_pad - T)))
    fbT = jnp.pad(jnp.transpose(fb).astype(jnp.bfloat16),
                  ((0, 0), (0, F_pad - F)))                       # (M, F_pad)
    dctT = jnp.transpose(dct_mat).astype(jnp.float32)             # (K, M)

    x_spec = pl.BlockSpec((1, C, F_pad, t_eff), lambda b, t: (b, 0, 0, t))
    fbT_spec = pl.BlockSpec((M, F_pad), lambda b, t: (0, 0))      # VMEM-resident
    dctT_spec = pl.BlockSpec((K, M), lambda b, t: (0, 0))         # VMEM-resident
    thr_spec = pl.BlockSpec((1, 8, 128), lambda b, t: (b, 0, 0))  # per-batch tile

    vmem_limit = 32 * 1024 * 1024

    if log_mels:
        thr_tiles = jnp.zeros((B, 8, 128), jnp.float32)           # unused
    else:
        mx = pl.pallas_call(
            _make_melmax_kernel(C, T, t_eff),
            out_shape=jax.ShapeDtypeStruct((B, 8, 128), jnp.float32),
            grid_spec=pltpu.PrefetchScalarGridSpec(
                num_scalar_prefetch=0,
                grid=(B, n_t),
                in_specs=[x_spec, fbT_spec],
                out_specs=thr_spec),
            compiler_params=pltpu.CompilerParams(
                dimension_semantics=("parallel", "arbitrary"),
                vmem_limit_bytes=vmem_limit),
        )(x_p, fbT)
        # max(db) = 10*log10(max(mel_max, amin)); threshold = max(db) - top_db.
        thr_tiles = _MULT * jnp.log10(jnp.maximum(mx, _AMIN)) - _TOP_DB

    out = pl.pallas_call(
        _make_mfcc_kernel(C, log_mels),
        out_shape=jax.ShapeDtypeStruct((B, C, K, T_pad), jnp.float32),
        grid_spec=pltpu.PrefetchScalarGridSpec(
            num_scalar_prefetch=0,
            grid=(B, n_t),
            in_specs=[thr_spec, x_spec, fbT_spec, dctT_spec],
            out_specs=pl.BlockSpec((1, C, K, t_eff),
                                   lambda b, t: (b, 0, 0, t))),
        compiler_params=pltpu.CompilerParams(
            dimension_semantics=("parallel", "parallel"),
            vmem_limit_bytes=vmem_limit),
    )(thr_tiles, x_p, fbT, dctT)

    return out[:, :, :, :T]


# ---------------------------------------------------------------------------
# Pure-jnp reference mirroring the PyTorch module
# ---------------------------------------------------------------------------
def _reference(x, fb, dct_mat, *, log_mels=False):
    mel = jnp.einsum("bcft,fm->bcmt", x, fb,
                     preferred_element_type=jnp.float32)
    if log_mels:
        feat = jnp.log(mel + _LOG_OFFSET)
    else:
        db = _MULT * jnp.log10(jnp.maximum(mel, _AMIN))
        mx = jnp.max(db, axis=(1, 2, 3), keepdims=True)   # per-batch clamp
        feat = jnp.maximum(db, mx - _TOP_DB)
    return jnp.einsum("bcmt,mk->bckt", feat, dct_mat,
                      preferred_element_type=jnp.float32)


if __name__ == "__main__":
    key = jax.random.PRNGKey(0)

    sample_rate = 16000
    n_mfcc = 40
    n_mels = 128        # torchaudio MelScale default
    n_freqs = 201       # default n_fft=400 -> n_fft // 2 + 1
    B, C, T = 2, 4, 16  # small batch / channels / time frames

    # Input is a (non-negative) power spectrogram.
    x = jax.random.uniform(key, (B, C, n_freqs, T), dtype=jnp.float32)

    fb = jnp.asarray(melscale_fbanks(n_freqs, 0.0, float(sample_rate // 2),
                                     n_mels, sample_rate))
    dct_mat = jnp.asarray(create_dct(n_mfcc, n_mels, "ortho"))

    out = jax.block_until_ready(specto_mfcc(x, fb, dct_mat))
    ref = _reference(x, fb, dct_mat)

    assert out.shape == (B, C, n_mfcc, T), out.shape
    denom = float(jnp.maximum(jnp.max(jnp.abs(ref)), 1.0))
    rel_err = float(jnp.max(jnp.abs(out - ref))) / denom
    # Both paths use the MXU's bf16 matmul path (kernel casts explicitly, the
    # reference via default matmul precision); tolerance covers that plus the
    # log10 amplification on low-energy bins.
    assert rel_err < 2e-2, rel_err

    print("KERNEL_OK")
</pallas_src>

<mosaic_0001>
module attributes {stable_mosaic.version = 11 : i64} {
  func.func @kernel(%arg0: i32, %arg1: i32, %arg2: memref<1x4x256x128xbf16, #tpu.memory_space<vmem>>, %arg3: memref<128x256xbf16, #tpu.memory_space<vmem>>, %arg4: memref<1x8x128xf32, #tpu.memory_space<vmem>>) attributes {dimension_semantics = [#tpu.dimension_semantics<parallel>, #tpu.dimension_semantics<arbitrary>], iteration_bounds = array<i64: 2, 1>, scalar_prefetch = 0 : i64, scratch_operands = 0 : i64, tpu.core_type = #tpu.core_type<tc>, window_params = [{transform_indices = @transform_0, window_bounds = array<i64: 1, 4, 256, 128>}, {pipeline_mode = #tpu.pipeline_mode<synchronous>, transform_indices = @transform_1, window_bounds = array<i64: 128, 256>}, {transform_indices = @transform_2, window_bounds = array<i64: 1, 8, 128>}]} {
    %c0_i32 = arith.constant 0 : i32
    %0 = arith.cmpi eq, %arg1, %c0_i32 : i32
    %1 = arith.extui %0 : i1 to i32
    %c0_i32_0 = arith.constant 0 : i32
    %2 = arith.cmpi ne, %1, %c0_i32_0 : i32
    scf.if %2 {
      %cst_32 = arith.constant 0xFF800000 : f32
      %56 = vector.broadcast %cst_32 : f32 to vector<1x8x128xf32>
      %c0_33 = arith.constant 0 : index
      %c0_34 = arith.constant 0 : index
      %c0_35 = arith.constant 0 : index
      %57 = vector.load %arg4[%c0_33, %c0_34, %c0_35] : memref<1x8x128xf32, #tpu.memory_space<vmem>>, vector<1x8x128xf32>
      tpu.vector_store %arg4[%c0_33, %c0_34, %c0_35], %56 {strides = array<i32>} : memref<1x8x128xf32, #tpu.memory_space<vmem>>, vector<1x8x128xf32>,
    } else {
    }
    %c0 = arith.constant 0 : index
    %c0_1 = arith.constant 0 : index
    %3 = vector.load %arg3[%c0, %c0_1] : memref<128x256xbf16, #tpu.memory_space<vmem>>, vector<128x256xbf16>
    %4 = tpu.iota {dimensions = array<i32: 1>} : vector<128x128xi32>
    %c128_i32 = arith.constant 128 : i32
    %5 = arith.muli %arg1, %c128_i32 : i32
    %6 = vector.broadcast %5 : i32 to vector<128x128xi32>
    %7 = arith.addi %6, %4 : vector<128x128xi32>
    %c16_i32 = arith.constant 16 : i32
    %8 = vector.broadcast %c16_i32 : i32 to vector<128x128xi32>
    %9 = arith.cmpi slt, %7, %8 : vector<128x128xi32>
    %c0_2 = arith.constant 0 : index
    %c0_3 = arith.constant 0 : index
    %c0_4 = arith.constant 0 : index
    %10 = vector.load %arg4[%c0_2, %c0_3, %c0_4] : memref<1x8x128xf32, #tpu.memory_space<vmem>>, vector<1x8x128xf32>
    %c0_5 = arith.constant 0 : index
    %c0_6 = arith.constant 0 : index
    %c0_7 = arith.constant 0 : index
    %c0_8 = arith.constant 0 : index
    %11 = vector.load %arg2[%c0_5, %c0_6, %c0_7, %c0_8] : memref<1x4x256x128xbf16, #tpu.memory_space<vmem>>, vector<1x1x256x128xbf16>
    %12 = vector.shape_cast %11 : vector<1x1x256x128xbf16> to vector<256x128xbf16>
    %cst = arith.constant dense<0.000000e+00> : vector<128x128xf32>
    %13 = tpu.matmul %3, %12, %cst {dimension_numbers = #tpu.dot_dimension_numbers<[1], [0], [0], [1], [0, 0, 1, 1], [], []>} : vector<128x256xbf16>, vector<256x128xbf16>, vector<128x128xf32> -> vector<128x128xf32>
    %cst_9 = arith.constant 0xFF800000 : f32
    %14 = vector.broadcast %cst_9 : f32 to vector<128x128xf32>
    %15 = arith.select %9, %13, %14 : vector<128x128xi1>, vector<128x128xf32>
    %16 = vector.shape_cast %15 : vector<128x128xf32> to vector<1x128x128xf32>
    %cst_10 = arith.constant dense<0xFF800000> : vector<1xf32>
    %17 = vector.multi_reduction <maximumf>, %16, %cst_10 [1, 2] : vector<1x128x128xf32> to vector<1xf32>
    %18 = vector.shape_cast %17 : vector<1xf32> to vector<1x1x1xf32>
    %19 = vector.extract %18[0, 0, 0] : f32 from vector<1x1x1xf32>
    %20 = vector.broadcast %19 : f32 to vector<1x8x128xf32>
    %21 = arith.maximumf %10, %20 : vector<1x8x128xf32>
    %c0_11 = arith.constant 0 : index
    %c1 = arith.constant 1 : index
    %c0_12 = arith.constant 0 : index
    %c0_13 = arith.constant 0 : index
    %22 = vector.load %arg2[%c0_11, %c1, %c0_12, %c0_13] : memref<1x4x256x128xbf16, #tpu.memory_space<vmem>>, vector<1x1x256x128xbf16>
    %23 = vector.shape_cast %22 : vector<1x1x256x128xbf16> to vector<256x128xbf16>
    %cst_14 = arith.constant dense<0.000000e+00> : vector<128x128xf32>
    %24 = tpu.matmul %3, %23, %cst_14 {dimension_numbers = #tpu.dot_dimension_numbers<[1], [0], [0], [1], [0, 0, 1, 1], [], []>} : vector<128x256xbf16>, vector<256x128xbf16>, vector<128x128xf32> -> vector<128x128xf32>
    %cst_15 = arith.constant 0xFF800000 : f32
    %25 = vector.broadcast %cst_15 : f32 to vector<128x128xf32>
    %26 = arith.select %9, %24, %25 : vector<128x128xi1>, vector<128x128xf32>
    %27 = vector.shape_cast %26 : vector<128x128xf32> to vector<1x128x128xf32>
    %cst_16 = arith.constant dense<0xFF800000> : vector<1xf32>
    %28 = vector.multi_reduction <maximumf>, %27, %cst_16 [1, 2] : vector<1x128x128xf32> to vector<1xf32>
    %29 = vector.shape_cast %28 : vector<1xf32> to vector<1x1x1xf32>
    %30 = vector.extract %29[0, 0, 0] : f32 from vector<1x1x1xf32>
    %31 = vector.broadcast %30 : f32 to vector<1x8x128xf32>
    %32 = arith.maximumf %21, %31 : vector<1x8x128xf32>
    %c0_17 = arith.constant 0 : index
    %c2 = arith.constant 2 : index
    %c0_18 = arith.constant 0 : index
    %c0_19 = arith.constant 0 : index
    %33 = vector.load %arg2[%c0_17, %c2, %c0_18, %c0_19] : memref<1x4x256x128xbf16, #tpu.memory_space<vmem>>, vector<1x1x256x128xbf16>
    %34 = vector.shape_cast %33 : vector<1x1x256x128xbf16> to vector<256x128xbf16>
    %cst_20 = arith.constant dense<0.000000e+00> : vector<128x128xf32>
    %35 = tpu.matmul %3, %34, %cst_20 {dimension_numbers = #tpu.dot_dimension_numbers<[1], [0], [0], [1], [0, 0, 1, 1], [], []>} : vector<128x256xbf16>, vector<256x128xbf16>, vector<128x128xf32> -> vector<128x128xf32>
    %cst_21 = arith.constant 0xFF800000 : f32
    %36 = vector.broadcast %cst_21 : f32 to vector<128x128xf32>
    %37 = arith.select %9, %35, %36 : vector<128x128xi1>, vector<128x128xf32>
    %38 = vector.shape_cast %37 : vector<128x128xf32> to vector<1x128x128xf32>
    %cst_22 = arith.constant dense<0xFF800000> : vector<1xf32>
    %39 = vector.multi_reduction <maximumf>, %38, %cst_22 [1, 2] : vector<1x128x128xf32> to vector<1xf32>
    %40 = vector.shape_cast %39 : vector<1xf32> to vector<1x1x1xf32>
    %41 = vector.extract %40[0, 0, 0] : f32 from vector<1x1x1xf32>
    %42 = vector.broadcast %41 : f32 to vector<1x8x128xf32>
    %43 = arith.maximumf %32, %42 : vector<1x8x128xf32>
    %c0_23 = arith.constant 0 : index
    %c3 = arith.constant 3 : index
    %c0_24 = arith.constant 0 : index
    %c0_25 = arith.constant 0 : index
    %44 = vector.load %arg2[%c0_23, %c3, %c0_24, %c0_25] : memref<1x4x256x128xbf16, #tpu.memory_space<vmem>>, vector<1x1x256x128xbf16>
    %45 = vector.shape_cast %44 : vector<1x1x256x128xbf16> to vector<256x128xbf16>
    %cst_26 = arith.constant dense<0.000000e+00> : vector<128x128xf32>
    %46 = tpu.matmul %3, %45, %cst_26 {dimension_numbers = #tpu.dot_dimension_numbers<[1], [0], [0], [1], [0, 0, 1, 1], [], []>} : vector<128x256xbf16>, vector<256x128xbf16>, vector<128x128xf32> -> vector<128x128xf32>
    %cst_27 = arith.constant 0xFF800000 : f32
    %47 = vector.broadcast %cst_27 : f32 to vector<128x128xf32>
    %48 = arith.select %9, %46, %47 : vector<128x128xi1>, vector<128x128xf32>
    %49 = vector.shape_cast %48 : vector<128x128xf32> to vector<1x128x128xf32>
    %cst_28 = arith.constant dense<0xFF800000> : vector<1xf32>
    %50 = vector.multi_reduction <maximumf>, %49, %cst_28 [1, 2] : vector<1x128x128xf32> to vector<1xf32>
    %51 = vector.shape_cast %50 : vector<1xf32> to vector<1x1x1xf32>
    %52 = vector.extract %51[0, 0, 0] : f32 from vector<1x1x1xf32>
    %53 = vector.broadcast %52 : f32 to vector<1x8x128xf32>
    %54 = arith.maximumf %43, %53 : vector<1x8x128xf32>
    %c0_29 = arith.constant 0 : index
    %c0_30 = arith.constant 0 : index
    %c0_31 = arith.constant 0 : index
    %55 = vector.load %arg4[%c0_29, %c0_30, %c0_31] : memref<1x8x128xf32, #tpu.memory_space<vmem>>, vector<1x8x128xf32>
    tpu.vector_store %arg4[%c0_29, %c0_30, %c0_31], %54 {strides = array<i32>} : memref<1x8x128xf32, #tpu.memory_space<vmem>>, vector<1x8x128xf32>,
    return
  }
  func.func @transform_0(%arg0: i32, %arg1: i32) -> (i32, i32, i32, i32) {
    %c0_i32 = arith.constant 0 : i32
    %c0_i32_0 = arith.constant 0 : i32
    %c0_i32_1 = arith.constant 0 : i32
    return %arg0, %c0_i32, %c0_i32_0, %arg1 : i32, i32, i32, i32
  }
  func.func @transform_1(%arg0: i32, %arg1: i32) -> (i32, i32) {
    %c0_i32 = arith.constant 0 : i32
    %c0_i32_0 = arith.constant 0 : i32
    %c0_i32_1 = arith.constant 0 : i32
    return %c0_i32, %c0_i32_0 : i32, i32
  }
  func.func @transform_2(%arg0: i32, %arg1: i32) -> (i32, i32, i32) {
    %c0_i32 = arith.constant 0 : i32
    %c0_i32_0 = arith.constant 0 : i32
    %c0_i32_1 = arith.constant 0 : i32
    return %arg0, %c0_i32, %c0_i32_0 : i32, i32, i32
  }
}

module attributes {stable_mosaic.version = 11 : i64} {
  func.func @kernel(%arg0: i32, %arg1: i32, %arg2: memref<1x8x128xf32, #tpu.memory_space<vmem>>, %arg3: memref<1x4x256x128xbf16, #tpu.memory_space<vmem>>, %arg4: memref<128x256xbf16, #tpu.memory_space<vmem>>, %arg5: memref<40x128xf32, #tpu.memory_space<vmem>>, %arg6: memref<1x4x40x128xf32, #tpu.memory_space<vmem>>) attributes {dimension_semantics = [#tpu.dimension_semantics<parallel>, #tpu.dimension_semantics<parallel>], iteration_bounds = array<i64: 2, 1>, scalar_prefetch = 0 : i64, scratch_operands = 0 : i64, tpu.core_type = #tpu.core_type<tc>, window_params = [{transform_indices = @transform_0, window_bounds = array<i64: 1, 8, 128>}, {transform_indices = @transform_1, window_bounds = array<i64: 1, 4, 256, 128>}, {pipeline_mode = #tpu.pipeline_mode<synchronous>, transform_indices = @transform_2, window_bounds = array<i64: 128, 256>}, {pipeline_mode = #tpu.pipeline_mode<synchronous>, transform_indices = @transform_3, window_bounds = array<i64: 40, 128>}, {transform_indices = @transform_4, window_bounds = array<i64: 1, 4, 40, 128>}]} {
    %c0 = arith.constant 0 : index
    %c0_0 = arith.constant 0 : index
    %0 = vector.load %arg4[%c0, %c0_0] : memref<128x256xbf16, #tpu.memory_space<vmem>>, vector<128x256xbf16>
    %c0_1 = arith.constant 0 : index
    %c0_2 = arith.constant 0 : index
    %1 = vector.load %arg5[%c0_1, %c0_2] : memref<40x128xf32, #tpu.memory_space<vmem>>, vector<40x128xf32>
    %c0_3 = arith.constant 0 : index
    %c0_4 = arith.constant 0 : index
    %c0_5 = arith.constant 0 : index
    %2 = vector.load %arg2[%c0_3, %c0_4, %c0_5] : memref<1x8x128xf32, #tpu.memory_space<vmem>>, vector<1x8x128xf32>
    %3 = vector.shape_cast %2 : vector<1x8x128xf32> to vector<1x1x8x128xf32>
    %cst = arith.constant dense<0xFF800000> : vector<1xf32>
    %4 = vector.multi_reduction <maximumf>, %3, %cst [1, 2, 3] : vector<1x1x8x128xf32> to vector<1xf32>
    %5 = vector.shape_cast %4 : vector<1xf32> to vector<1x1x1x1xf32>
    %6 = vector.extract %5[0, 0, 0, 0] : f32 from vector<1x1x1x1xf32>
    %c0_6 = arith.constant 0 : index
    %c0_7 = arith.constant 0 : index
    %c0_8 = arith.constant 0 : index
    %c0_9 = arith.constant 0 : index
    %7 = vector.load %arg3[%c0_6, %c0_7, %c0_8, %c0_9] : memref<1x4x256x128xbf16, #tpu.memory_space<vmem>>, vector<1x1x256x128xbf16>
    %8 = vector.shape_cast %7 : vector<1x1x256x128xbf16> to vector<256x128xbf16>
    %cst_10 = arith.constant dense<0.000000e+00> : vector<128x128xf32>
    %9 = tpu.matmul %0, %8, %cst_10 {dimension_numbers = #tpu.dot_dimension_numbers<[1], [0], [0], [1], [0, 0, 1, 1], [], []>} : vector<128x256xbf16>, vector<256x128xbf16>, vector<128x128xf32> -> vector<128x128xf32>
    %cst_11 = arith.constant 1.000000e-10 : f32
    %10 = vector.broadcast %cst_11 : f32 to vector<128x128xf32>
    %11 = arith.maximumf %9, %10 : vector<128x128xf32>
    %12 = math.log %11 : vector<128x128xf32>
    %cst_12 = arith.constant 0.434294492 : f32
    %13 = vector.broadcast %cst_12 : f32 to vector<128x128xf32>
    %14 = arith.mulf %12, %13 : vector<128x128xf32>
    %cst_13 = arith.constant 1.000000e+01 : f32
    %15 = vector.broadcast %cst_13 : f32 to vector<128x128xf32>
    %16 = arith.mulf %15, %14 : vector<128x128xf32>
    %17 = vector.broadcast %6 : f32 to vector<128x128xf32>
    %18 = arith.maximumf %16, %17 : vector<128x128xf32>
    %cst_14 = arith.constant dense<0.000000e+00> : vector<40x128xf32>
    %19 = tpu.matmul %1, %18, %cst_14 {dimension_numbers = #tpu.dot_dimension_numbers<[1], [0], [0], [1], [0, 0, 1, 1], [], []>} : vector<40x128xf32>, vector<128x128xf32>, vector<40x128xf32> -> vector<40x128xf32>
    %c0_15 = arith.constant 0 : index
    %c0_16 = arith.constant 0 : index
    %c0_17 = arith.constant 0 : index
    %c0_18 = arith.constant 0 : index
    %20 = vector.load %arg6[%c0_15, %c0_16, %c0_17, %c0_18] : memref<1x4x40x128xf32, #tpu.memory_space<vmem>>, vector<1x1x40x128xf32>
    %21 = vector.shape_cast %20 : vector<1x1x40x128xf32> to vector<40x128xf32>
    %22 = vector.shape_cast %19 : vector<40x128xf32> to vector<1x1x40x128xf32>
    tpu.vector_store %arg6[%c0_15, %c0_16, %c0_17, %c0_18], %22 {strides = array<i32>} : memref<1x4x40x128xf32, #tpu.memory_space<vmem>>, vector<1x1x40x128xf32>,
    %c0_19 = arith.constant 0 : index
    %c1 = arith.constant 1 : index
    %c0_20 = arith.constant 0 : index
    %c0_21 = arith.constant 0 : index
    %23 = vector.load %arg3[%c0_19, %c1, %c0_20, %c0_21] : memref<1x4x256x128xbf16, #tpu.memory_space<vmem>>, vector<1x1x256x128xbf16>
    %24 = vector.shape_cast %23 : vector<1x1x256x128xbf16> to vector<256x128xbf16>
    %cst_22 = arith.constant dense<0.000000e+00> : vector<128x128xf32>
    %25 = tpu.matmul %0, %24, %cst_22 {dimension_numbers = #tpu.dot_dimension_numbers<[1], [0], [0], [1], [0, 0, 1, 1], [], []>} : vector<128x256xbf16>, vector<256x128xbf16>, vector<128x128xf32> -> vector<128x128xf32>
    %cst_23 = arith.constant 1.000000e-10 : f32
    %26 = vector.broadcast %cst_23 : f32 to vector<128x128xf32>
    %27 = arith.maximumf %25, %26 : vector<128x128xf32>
    %28 = math.log %27 : vector<128x128xf32>
    %cst_24 = arith.constant 0.434294492 : f32
    %29 = vector.broadcast %cst_24 : f32 to vector<128x128xf32>
    %30 = arith.mulf %28, %29 : vector<128x128xf32>
    %cst_25 = arith.constant 1.000000e+01 : f32
    %31 = vector.broadcast %cst_25 : f32 to vector<128x128xf32>
    %32 = arith.mulf %31, %30 : vector<128x128xf32>
    %33 = vector.broadcast %6 : f32 to vector<128x128xf32>
    %34 = arith.maximumf %32, %33 : vector<128x128xf32>
    %cst_26 = arith.constant dense<0.000000e+00> : vector<40x128xf32>
    %35 = tpu.matmul %1, %34, %cst_26 {dimension_numbers = #tpu.dot_dimension_numbers<[1], [0], [0], [1], [0, 0, 1, 1], [], []>} : vector<40x128xf32>, vector<128x128xf32>, vector<40x128xf32> -> vector<40x128xf32>
    %c0_27 = arith.constant 0 : index
    %c1_28 = arith.constant 1 : index
    %c0_29 = arith.constant 0 : index
    %c0_30 = arith.constant 0 : index
    %36 = vector.load %arg6[%c0_27, %c1_28, %c0_29, %c0_30] : memref<1x4x40x128xf32, #tpu.memory_space<vmem>>, vector<1x1x40x128xf32>
    %37 = vector.shape_cast %36 : vector<1x1x40x128xf32> to vector<40x128xf32>
    %38 = vector.shape_cast %35 : vector<40x128xf32> to vector<1x1x40x128xf32>
    tpu.vector_store %arg6[%c0_27, %c1_28, %c0_29, %c0_30], %38 {strides = array<i32>} : memref<1x4x40x128xf32, #tpu.memory_space<vmem>>, vector<1x1x40x128xf32>,
    %c0_31 = arith.constant 0 : index
    %c2 = arith.constant 2 : index
    %c0_32 = arith.constant 0 : index
    %c0_33 = arith.constant 0 : index
    %39 = vector.load %arg3[%c0_31, %c2, %c0_32, %c0_33] : memref<1x4x256x128xbf16, #tpu.memory_space<vmem>>, vector<1x1x256x128xbf16>
    %40 = vector.shape_cast %39 : vector<1x1x256x128xbf16> to vector<256x128xbf16>
    %cst_34 = arith.constant dense<0.000000e+00> : vector<128x128xf32>
    %41 = tpu.matmul %0, %40, %cst_34 {dimension_numbers = #tpu.dot_dimension_numbers<[1], [0], [0], [1], [0, 0, 1, 1], [], []>} : vector<128x256xbf16>, vector<256x128xbf16>, vector<128x128xf32> -> vector<128x128xf32>
    %cst_35 = arith.constant 1.000000e-10 : f32
    %42 = vector.broadcast %cst_35 : f32 to vector<128x128xf32>
    %43 = arith.maximumf %41, %42 : vector<128x128xf32>
    %44 = math.log %43 : vector<128x128xf32>
    %cst_36 = arith.constant 0.434294492 : f32
    %45 = vector.broadcast %cst_36 : f32 to vector<128x128xf32>
    %46 = arith.mulf %44, %45 : vector<128x128xf32>
    %cst_37 = arith.constant 1.000000e+01 : f32
    %47 = vector.broadcast %cst_37 : f32 to vector<128x128xf32>
    %48 = arith.mulf %47, %46 : vector<128x128xf32>
    %49 = vector.broadcast %6 : f32 to vector<128x128xf32>
    %50 = arith.maximumf %48, %49 : vector<128x128xf32>
    %cst_38 = arith.constant dense<0.000000e+00> : vector<40x128xf32>
    %51 = tpu.matmul %1, %50, %cst_38 {dimension_numbers = #tpu.dot_dimension_numbers<[1], [0], [0], [1], [0, 0, 1, 1], [], []>} : vector<40x128xf32>, vector<128x128xf32>, vector<40x128xf32> -> vector<40x128xf32>
    %c0_39 = arith.constant 0 : index
    %c2_40 = arith.constant 2 : index
    %c0_41 = arith.constant 0 : index
    %c0_42 = arith.constant 0 : index
    %52 = vector.load %arg6[%c0_39, %c2_40, %c0_41, %c0_42] : memref<1x4x40x128xf32, #tpu.memory_space<vmem>>, vector<1x1x40x128xf32>
    %53 = vector.shape_cast %52 : vector<1x1x40x128xf32> to vector<40x128xf32>
    %54 = vector.shape_cast %51 : vector<40x128xf32> to vector<1x1x40x128xf32>
    tpu.vector_store %arg6[%c0_39, %c2_40, %c0_41, %c0_42], %54 {strides = array<i32>} : memref<1x4x40x128xf32, #tpu.memory_space<vmem>>, vector<1x1x40x128xf32>,
    %c0_43 = arith.constant 0 : index
    %c3 = arith.constant 3 : index
    %c0_44 = arith.constant 0 : index
    %c0_45 = arith.constant 0 : index
    %55 = vector.load %arg3[%c0_43, %c3, %c0_44, %c0_45] : memref<1x4x256x128xbf16, #tpu.memory_space<vmem>>, vector<1x1x256x128xbf16>
    %56 = vector.shape_cast %55 : vector<1x1x256x128xbf16> to vector<256x128xbf16>
    %cst_46 = arith.constant dense<0.000000e+00> : vector<128x128xf32>
    %57 = tpu.matmul %0, %56, %cst_46 {dimension_numbers = #tpu.dot_dimension_numbers<[1], [0], [0], [1], [0, 0, 1, 1], [], []>} : vector<128x256xbf16>, vector<256x128xbf16>, vector<128x128xf32> -> vector<128x128xf32>
    %cst_47 = arith.constant 1.000000e-10 : f32
    %58 = vector.broadcast %cst_47 : f32 to vector<128x128xf32>
    %59 = arith.maximumf %57, %58 : vector<128x128xf32>
    %60 = math.log %59 : vector<128x128xf32>
    %cst_48 = arith.constant 0.434294492 : f32
    %61 = vector.broadcast %cst_48 : f32 to vector<128x128xf32>
    %62 = arith.mulf %60, %61 : vector<128x128xf32>
    %cst_49 = arith.constant 1.000000e+01 : f32
    %63 = vector.broadcast %cst_49 : f32 to vector<128x128xf32>
    %64 = arith.mulf %63, %62 : vector<128x128xf32>
    %65 = vector.broadcast %6 : f32 to vector<128x128xf32>
    %66 = arith.maximumf %64, %65 : vector<128x128xf32>
    %cst_50 = arith.constant dense<0.000000e+00> : vector<40x128xf32>
    %67 = tpu.matmul %1, %66, %cst_50 {dimension_numbers = #tpu.dot_dimension_numbers<[1], [0], [0], [1], [0, 0, 1, 1], [], []>} : vector<40x128xf32>, vector<128x128xf32>, vector<40x128xf32> -> vector<40x128xf32>
    %c0_51 = arith.constant 0 : index
    %c3_52 = arith.constant 3 : index
    %c0_53 = arith.constant 0 : index
    %c0_54 = arith.constant 0 : index
    %68 = vector.load %arg6[%c0_51, %c3_52, %c0_53, %c0_54] : memref<1x4x40x128xf32, #tpu.memory_space<vmem>>, vector<1x1x40x128xf32>
    %69 = vector.shape_cast %68 : vector<1x1x40x128xf32> to vector<40x128xf32>
    %70 = vector.shape_cast %67 : vector<40x128xf32> to vector<1x1x40x128xf32>
    tpu.vector_store %arg6[%c0_51, %c3_52, %c0_53, %c0_54], %70 {strides = array<i32>} : memref<1x4x40x128xf32, #tpu.memory_space<vmem>>, vector<1x1x40x128xf32>,
    return
  }
  func.func @transform_0(%arg0: i32, %arg1: i32) -> (i32, i32, i32) {
    %c0_i32 = arith.constant 0 : i32
    %c0_i32_0 = arith.constant 0 : i32
    %c0_i32_1 = arith.constant 0 : i32
    return %arg0, %c0_i32, %c0_i32_0 : i32, i32, i32
  }
  func.func @transform_1(%arg0: i32, %arg1: i32) -> (i32, i32, i32, i32) {
    %c0_i32 = arith.constant 0 : i32
    %c0_i32_0 = arith.constant 0 : i32
    %c0_i32_1 = arith.constant 0 : i32
    return %arg0, %c0_i32, %c0_i32_0, %arg1 : i32, i32, i32, i32
  }
  func.func @transform_2(%arg0: i32, %arg1: i32) -> (i32, i32) {
    %c0_i32 = arith.constant 0 : i32
    %c0_i32_0 = arith.constant 0 : i32
    %c0_i32_1 = arith.constant 0 : i32
    return %c0_i32, %c0_i32_0 : i32, i32
  }
  func.func @transform_3(%arg0: i32, %arg1: i32) -> (i32, i32) {
    %c0_i32 = arith.constant 0 : i32
    %c0_i32_0 = arith.constant 0 : i32
    %c0_i32_1 = arith.constant 0 : i32
    return %c0_i32, %c0_i32_0 : i32, i32
  }
  func.func @transform_4(%arg0: i32, %arg1: i32) -> (i32, i32, i32, i32) {
    %c0_i32 = arith.constant 0 : i32
    %c0_i32_0 = arith.constant 0 : i32
    %c0_i32_1 = arith.constant 0 : i32
    return %arg0, %c0_i32, %c0_i32_0, %arg1 : i32, i32, i32, i32
  }
}

</mosaic_0001>

<llo_original>
// kernel: specto_mfcc.2
$region0: #{specto_mfcc.2}
  #allocation0 [shape = 'u32[]', space=smem, size = 0x4, offset = 0x4, fixed_abs, tag = 'smem constant byte address 0x4 - core index']
  #allocation1 [shape = 'u32[144,128]{1,0:T(1,128)}', space=vmem, size = 0x12000, scoped, tag = 'internal scratch']
  %s0 = inlined_call_operand.vmem [shape: bf16[2,4,256,128], index: 0, kind: input, shape index: {}]
  %s1 = inlined_call_operand.vmem [shape: bf16[128,256], index: 1, kind: input, shape index: {}]
  %s2 = inlined_call_operand.vmem [shape: f32[2,8,128], index: 2, kind: output, shape index: {}]
  %s3 = sld [smem:[#allocation0]]
  $region45: #{specto_mfcc.2} parent=0
    _
  %s5 = ssub.s32 1, %s3
  %s6 = scalar_select 0, %s5, %s3
  loop: start=0, step=1, limit=4
  $region2: #{specto_mfcc.2} parent=0 // loop_pre_header
    _
  $region3: #{specto_mfcc.2} parent=0 // loop_header
    %s8 = sphi 0, %s12
    %p9 = scmp.ge.s32.totalorder %s8, 4
    %s15 = sphi 0, %s27
    %s16 = sphi 0, %s23
    %s17 = sphi 0, %s15
    %s18 = sphi 0, %s16
    %s19 = sphi 0, %s17
    %s20 = sphi 0, %s18
    %s32 = sphi 0, %s34
    %s35 = sphi 0, %s32
    %s36 = sphi 0, %s35
    %s52 = sphi 0, %s36
    %s56 = sphi 0, %s56
    %s58 = sphi 0, %s56
    %s59 = sphi 0, %s58
    %s73 = sphi 0, %s59
    %s79 = sphi 0, %s81
    %s82 = sphi 0, %s79
    %s83 = sphi 0, %s82
    %s99 = sphi 0, %s83
  $region4: #{specto_mfcc.2} parent=0 // loop_header_branch
    %11 = sbr.rel (%p9) target = $region8
  $region5: #{specto_mfcc.2} parent=0 // loop_body
    %s13 = ssub.s32 %s8, 1
    %s14 = ssub.s32 %s8, 2
    %s21 = sadd.s32 1, %s16
    %p22 = scmp.ge.s32.totalorder %s21, 1
    %s23 = scalar_select %p22, 0, %s21
    %s24 = sadd.s32 1, %s15
    %s25 = scalar_select %p22, %s24, %s15
    %p26 = scmp.ge.s32.totalorder %s25, 2
    %s27 = scalar_select %p26, 0, %s25
    %s28 = ssub.s32 %s15, %s27
    %s29 = ssub.s32 %s16, %s23
    %s30 = sor.u32 %s28, %s29
    %p31 = scmp.eq.s32.totalorder %s30, 0
    %s33 = sadd.s32 %s32, 1
    %s34 = scalar_select %p31, %s32, %s33
    %p37 = pneg %p31
    %p38 = scmp.eq.s32.totalorder %s8, 1
    %p39 = por %p37, %p38
    %p40 = scmp.ne.s32.totalorder %s32, %s35
    %p41 = scmp.eq.s32.totalorder %s8, 0
    %p42 = por %p40, %p41
    %p43 = scmp.ne.s32.totalorder %s32, %s35
    %p44 = scmp.eq.s32.totalorder %s13, 1
    %p45 = por %p43, %p44
    %p46 = scmp.ne.s32.totalorder %s35, %s36
    %p47 = scmp.eq.s32.totalorder %s13, 0
    %p48 = por %p46, %p47
    %p49 = scmp.ne.s32.totalorder %s35, %s36
    %p50 = scmp.eq.s32.totalorder %s14, 1
    %p51 = por %p49, %p50
    %p53 = scmp.ne.s32.totalorder %s36, %s52
    %p54 = scmp.eq.s32.totalorder %s14, 0
    %p55 = por %p53, %p54
    %s57 = sadd.s32 %s56, 1
    %p60 = scmp.eq.s32.totalorder %s8, 1
    %p61 = scmp.ne.s32.totalorder %s56, %s58
    %p62 = scmp.eq.s32.totalorder %s8, 0
    %p63 = por %p61, %p62
    %p64 = scmp.ne.s32.totalorder %s56, %s58
    %p65 = scmp.eq.s32.totalorder %s13, 1
    %p66 = por %p64, %p65
    %p67 = scmp.ne.s32.totalorder %s58, %s59
    %p68 = scmp.eq.s32.totalorder %s13, 0
    %p69 = por %p67, %p68
    %p70 = scmp.ne.s32.totalorder %s58, %s59
    %p71 = scmp.eq.s32.totalorder %s14, 1
    %p72 = por %p70, %p71
    %p74 = scmp.ne.s32.totalorder %s59, %s73
    %p75 = scmp.eq.s32.totalorder %s14, 0
    %p76 = por %p74, %p75
    %s77 = ssub.s32 %s15, %s27
    %p78 = scmp.eq.s32.totalorder %s77, 0
    %s80 = sadd.s32 %s79, 1
    %s81 = scalar_select %p78, %s79, %s80
    %p84 = pneg %p78
    %p85 = scmp.eq.s32.totalorder %s8, 1
    %p86 = por %p84, %p85
    %p87 = scmp.ne.s32.totalorder %s79, %s82
    %p88 = scmp.eq.s32.totalorder %s8, 0
    %p89 = por %p87, %p88
    %p90 = scmp.ne.s32.totalorder %s79, %s82
    %p91 = scmp.eq.s32.totalorder %s13, 1
    %p92 = por %p90, %p91
    %p93 = scmp.ne.s32.totalorder %s82, %s83
    %p94 = scmp.eq.s32.totalorder %s13, 0
    %p95 = por %p93, %p94
    %p96 = scmp.ne.s32.totalorder %s82, %s83
    %p97 = scmp.eq.s32.totalorder %s14, 1
    %p98 = por %p96, %p97
    %p100 = scmp.ne.s32.totalorder %s83, %s99
    %p101 = scmp.eq.s32.totalorder %s14, 0
    %p102 = por %p100, %p101
    %p103 = scmp.le.s32.totalorder 1, %s8
    %p104 = scmp.lt.s32.totalorder %s8, 3
    %p105 = pnand %p103, %p104
    %p106 = pneg %p105
    // Predicated region
    $region9: #{specto_mfcc.2} parent=5 // pred_check
      _
    $region10: #{specto_mfcc.2} parent=5 // pred_check_branch
      %108 = sbr.rel (%p105) target = $region12
    $region11: #{specto_mfcc.2} parent=5 // pred_region
      %s109 = ssub.s32 %s8, 1
      // Predicated region
      $region13: #{specto_mfcc.2} parent=11 // pred_check
        %p110 = pneg %p69
      $region14: #{specto_mfcc.2} parent=11 // pred_check_branch
        %112 = sbr.rel (%p110) target = $region16
      $region15: #{specto_mfcc.2} parent=11 // pred_region
        _
      $region16: #{specto_mfcc.2} parent=11 // pred_fallthru
        _
    $region12: #{specto_mfcc.2} parent=5 // pred_fallthru
      _
    %p113 = scmp.lt.s32.totalorder %s8, 2
    // Predicated region
    $region17: #{specto_mfcc.2} parent=5 // pred_check
      %p114 = pneg %p113
    $region18: #{specto_mfcc.2} parent=5 // pred_check_branch
      %116 = sbr.rel (%p114) target = $region20
    $region19: #{specto_mfcc.2} parent=5 // pred_region
      // Predicated region
      $region21: #{specto_mfcc.2} parent=19 // pred_check
        %p117 = pneg %p42
      $region22: #{specto_mfcc.2} parent=19 // pred_check_branch
        %119 = sbr.rel (%p117) target = $region24
      $region23: #{specto_mfcc.2} parent=19 // pred_region
        %p120 = scmp.lt.s32.totalorder %s15, 1
        %s121 = scalar_select %p120, %s15, 1
        %p122 = scmp.lt.s32.totalorder %s16, 0
        %s123 = scalar_select %p122, %s16, 0
        %s124 = smul.addr %s121, 128
        %s125 = sadd.s32 %s123, %s124
        %s126 = smul.addr %s125, 4
        %s127 = scalar_lea.vmem %s0, %s126
      $region24: #{specto_mfcc.2} parent=19 // pred_fallthru
        _
    $region20: #{specto_mfcc.2} parent=5 // pred_fallthru
      _
    %p128 = scmp.le.s32.totalorder 1, %s8
    %p129 = scmp.lt.s32.totalorder %s8, 3
    %p130 = pnand %p128, %p129
    %p131 = pneg %p130
    // Predicated region
    $region25: #{specto_mfcc.2} parent=5 // pred_check
      _
    $region26: #{specto_mfcc.2} parent=5 // pred_check_branch
      %133 = sbr.rel (%p130) target = $region28
    $region27: #{specto_mfcc.2} parent=5 // pred_region
      %s134 = ssub.s32 %s8, 1
      %p135 = scmp.lt.s32.totalorder %s17, 1
      %s136 = scalar_select %p135, %s17, 1
      %p137 = scmp.lt.s32.totalorder %s18, 0
      %s138 = scalar_select %p137, %s18, 0
      %s139 = smul.addr %s136, 128
      %s140 = sadd.s32 %s138, %s139
      %s141 = smul.addr %s140, 4
      %s142 = scalar_lea.vmem %s0, %s141
      %p143 = pneg %p48
      %p144 = pneg %p45
      %p145 = pneg %p69
      %p146 = pneg %p66
      %p147 = pneg %p95
      %p148 = pneg %p92
      %p149 = scmp.lt.s32.totalorder %s17, 1
      %s150 = scalar_select %p149, %s17, 1
      %s151 = smul.addr %s150, 8
      %s152 = scalar_lea.vmem %s2, %s151
      %p153 = scmp.lt.s32.totalorder %s17, 1
      %s154 = scalar_select %p153, %s17, 1
      %p155 = scmp.lt.s32.totalorder %s18, 0
      %s156 = scalar_select %p155, %s18, 0
      %s157 = smul.addr %s154, 128
      %s158 = sadd.s32 %s156, %s157
      %s159 = smul.addr %s158, 4
      %s160 = scalar_lea.vmem %s0, %s159
      %p161 = scmp.lt.s32.totalorder %s17, 1
      %s162 = scalar_select %p161, %s17, 1
      %s163 = smul.addr %s162, 8
      %s164 = scalar_lea.vmem %s2, %s163
      %p166 = scmp.eq.s32.totalorder %s18, 0
      // Predicated region
      $region29: #{specto_mfcc.2} parent=27 // pred_check
        %p167 = pneg %p166
      $region30: #{specto_mfcc.2} parent=27 // pred_check_branch
        %169 = sbr.rel (%p167) target = $region32
      $region31: #{specto_mfcc.2} parent=27 // pred_region
        %170 = vst [vmem:[%s164] sm:$0xff] -inf
      $region32: #{specto_mfcc.2} parent=27 // pred_fallthru
        _
      %v171 = vld [vmem:[%s1] sm:$0xff]
      %v172 = vld [vmem:[%s1 + $0x8] sm:$0xff]
      %v173 = vld [vmem:[%s1 + $0x10] sm:$0xff]
      %v174 = vld [vmem:[%s1 + $0x18] sm:$0xff]
      %v175 = vld [vmem:[%s1 + $0x20] sm:$0xff]
      %v176 = vld [vmem:[%s1 + $0x28] sm:$0xff]
      %v177 = vld [vmem:[%s1 + $0x30] sm:$0xff]
      %v178 = vld [vmem:[%s1 + $0x38] sm:$0xff]
      %v179 = vld [vmem:[%s1 + $0x40] sm:$0xff]
      %v180 = vld [vmem:[%s1 + $0x48] sm:$0xff]
      %v181 = vld [vmem:[%s1 + $0x50] sm:$0xff]
      %v182 = vld [vmem:[%s1 + $0x58] sm:$0xff]
      %v183 = vld [vmem:[%s1 + $0x60] sm:$0xff]
      %v184 = vld [vmem:[%s1 + $0x68] sm:$0xff]
      %v185 = vld [vmem:[%s1 + $0x70] sm:$0xff]
      %v186 = vld [vmem:[%s1 + $0x78] sm:$0xff]
      %v187 = vlaneseq
      %v188 = vand.u32 %v187, 127
      %s189 = smul.u32 %s18, 128
      %v190 = vstv %s189
      %v191 = vadd.s32 %v190, %v188
      %vm192 = vcmp.lt.s32.totalorder %v191, 16
      %v193 = vld [vmem:[%s164] sm:$0xff]
      %v194 = vld [vmem:[%s160] sm:$0xf]
      %v195 = vld [vmem:[%s160 + $0x4] sm:$0xf]
      %v196 = vld [vmem:[%s160 + $0x8] sm:$0xf]
      %v197 = vld [vmem:[%s160 + $0xc] sm:$0xf]
      %v198 = vld [vmem:[%s160 + $0x10] sm:$0xf]
      %v199 = vld [vmem:[%s160 + $0x14] sm:$0xf]
      %v200 = vld [vmem:[%s160 + $0x18] sm:$0xf]
      %v201 = vld [vmem:[%s160 + $0x1c] sm:$0xf]
      %v202 = vld [vmem:[%s160 + $0x20] sm:$0xf]
      %v203 = vld [vmem:[%s160 + $0x24] sm:$0xf]
      %v204 = vld [vmem:[%s160 + $0x28] sm:$0xf]
      %v205 = vld [vmem:[%s160 + $0x2c] sm:$0xf]
      %v206 = vld [vmem:[%s160 + $0x30] sm:$0xf]
      %v207 = vld [vmem:[%s160 + $0x34] sm:$0xf]
      %v208 = vld [vmem:[%s160 + $0x38] sm:$0xf]
      %v209 = vld [vmem:[%s160 + $0x3c] sm:$0xf]
      %v210 = vld [vmem:[%s160 + $0x40] sm:$0xf]
      %v211 = vld [vmem:[%s160 + $0x44] sm:$0xf]
      %v212 = vld [vmem:[%s160 + $0x48] sm:$0xf]
      %v213 = vld [vmem:[%s160 + $0x4c] sm:$0xf]
      %v214 = vld [vmem:[%s160 + $0x50] sm:$0xf]
      %v215 = vld [vmem:[%s160 + $0x54] sm:$0xf]
      %v216 = vld [vmem:[%s160 + $0x58] sm:$0xf]
      %v217 = vld [vmem:[%s160 + $0x5c] sm:$0xf]
      %v218 = vld [vmem:[%s160 + $0x60] sm:$0xf]
      %v219 = vld [vmem:[%s160 + $0x64] sm:$0xf]
      %v220 = vld [vmem:[%s160 + $0x68] sm:$0xf]
      %v221 = vld [vmem:[%s160 + $0x6c] sm:$0xf]
      %v222 = vld [vmem:[%s160 + $0x70] sm:$0xf]
      %v223 = vld [vmem:[%s160 + $0x74] sm:$0xf]
      %v224 = vld [vmem:[%s160 + $0x78] sm:$0xf]
      %v225 = vld [vmem:[%s160 + $0x7c] sm:$0xf]
      %v242 = vunpack.c.l.b16 %v171
      %v243 = vunpack.c.h.b16 %v171
      %v244 = vunpack.c.l.b16 %v172
      %v245 = vunpack.c.h.b16 %v172
      %v246 = vunpack.c.l.b16 %v173
      %v247 = vunpack.c.h.b16 %v173
      %v248 = vunpack.c.l.b16 %v174
      %v249 = vunpack.c.h.b16 %v174
      %v250 = vunpack.c.l.b16 %v175
      %v251 = vunpack.c.h.b16 %v175
      %v252 = vunpack.c.l.b16 %v176
      %v253 = vunpack.c.h.b16 %v176
      %v254 = vunpack.c.l.b16 %v177
      %v255 = vunpack.c.h.b16 %v177
      %v256 = vunpack.c.l.b16 %v178
      %v257 = vunpack.c.h.b16 %v178
      %v258 = vunpack.c.l.b16 %v179
      %v259 = vunpack.c.h.b16 %v179
      %v260 = vunpack.c.l.b16 %v180
      %v261 = vunpack.c.h.b16 %v180
      %v262 = vunpack.c.l.b16 %v181
      %v263 = vunpack.c.h.b16 %v181
      %v264 = vunpack.c.l.b16 %v182
      %v265 = vunpack.c.h.b16 %v182
      %v266 = vunpack.c.l.b16 %v183
      %v267 = vunpack.c.h.b16 %v183
      %v268 = vunpack.c.l.b16 %v184
      %v269 = vunpack.c.h.b16 %v184
      %v270 = vunpack.c.l.b16 %v185
      %v271 = vunpack.c.h.b16 %v185
      %v272 = vunpack.c.l.b16 %v186
      %v273 = vunpack.c.h.b16 %v186
      %v274 = vpack.c.b16 %v244, %v242
      %v275 = vpack.c.b16 %v245, %v243
      %v276 = vpack.c.b16 %v248, %v246
      %v277 = vpack.c.b16 %v249, %v247
      %v278 = vpack.c.b16 %v252, %v250
      %v279 = vpack.c.b16 %v253, %v251
      %v280 = vpack.c.b16 %v256, %v254
      %v281 = vpack.c.b16 %v257, %v255
      %v282 = vpack.c.b16 %v260, %v258
      %v283 = vpack.c.b16 %v261, %v259
      %v284 = vpack.c.b16 %v264, %v262
      %v285 = vpack.c.b16 %v265, %v263
      %v286 = vpack.c.b16 %v268, %v266
      %v287 = vpack.c.b16 %v269, %v267
      %v288 = vpack.c.b16 %v272, %v270
      %v289 = vpack.c.b16 %v273, %v271
      %v338 = vunpack.c.l.b16 %v194
      %v339 = vunpack.c.l.b16 %v195
      %v340 = vunpack.c.l.b16 %v196
      %v341 = vunpack.c.l.b16 %v197
      %v342 = vunpack.c.l.b16 %v198
      %v343 = vunpack.c.l.b16 %v199
      %v344 = vunpack.c.l.b16 %v200
      %v345 = vunpack.c.l.b16 %v201
      %v346 = vunpack.c.l.b16 %v202
      %v347 = vunpack.c.l.b16 %v203
      %v348 = vunpack.c.l.b16 %v204
      %v349 = vunpack.c.l.b16 %v205
      %v350 = vunpack.c.l.b16 %v206
      %v351 = vunpack.c.l.b16 %v207
      %v352 = vunpack.c.l.b16 %v208
      %v353 = vunpack.c.l.b16 %v209
      %v354 = vunpack.c.l.b16 %v210
      %v355 = vunpack.c.l.b16 %v211
      %v356 = vunpack.c.l.b16 %v212
      %v357 = vunpack.c.l.b16 %v213
      %v358 = vunpack.c.l.b16 %v214
      %v359 = vunpack.c.l.b16 %v215
      %v360 = vunpack.c.l.b16 %v216
      %v361 = vunpack.c.l.b16 %v217
      %v362 = vunpack.c.l.b16 %v218
      %v363 = vunpack.c.l.b16 %v219
      %v364 = vunpack.c.l.b16 %v220
      %v365 = vunpack.c.l.b16 %v221
      %v366 = vunpack.c.l.b16 %v222
      %v367 = vunpack.c.l.b16 %v223
      %v368 = vunpack.c.l.b16 %v224
      %v369 = vunpack.c.l.b16 %v225
      %v370 = vpack.c.b16 %v339, %v338
      %v371 = vpack.c.b16 %v341, %v340
      %v372 = vpack.c.b16 %v343, %v342
      %v373 = vpack.c.b16 %v345, %v344
      %v374 = vpack.c.b16 %v347, %v346
      %v375 = vpack.c.b16 %v349, %v348
      %v376 = vpack.c.b16 %v351, %v350
      %v377 = vpack.c.b16 %v353, %v352
      %v378 = vpack.c.b16 %v355, %v354
      %v379 = vpack.c.b16 %v357, %v356
      %v380 = vpack.c.b16 %v359, %v358
      %v381 = vpack.c.b16 %v361, %v360
      %v382 = vpack.c.b16 %v363, %v362
      %v383 = vpack.c.b16 %v365, %v364
      %v384 = vpack.c.b16 %v367, %v366
      %v385 = vpack.c.b16 %v369, %v368
      %402 = vmatprep.subr.bf16.mxu0 0
      %403 = vmatpush1.bf16.msra.mxu0 %v377
      %404 = vmatprep.subr.bf16.mxu0 0
      %405 = vmatpush1.bf16.msra.mxu0 %v376
      %406 = vmatprep.subr.bf16.mxu0 0
      %407 = vmatpush1.bf16.msra.mxu0 %v375
      %408 = vmatprep.subr.bf16.mxu0 0
      %409 = vmatpush1.bf16.msra.mxu0 %v374
      %410 = vmatprep.subr.bf16.mxu0 0
      %411 = vmatpush1.bf16.msra.mxu0 %v373
      %412 = vmatprep.subr.bf16.mxu0 0
      %413 = vmatpush1.bf16.msra.mxu0 %v372
      %414 = vmatprep.subr.bf16.mxu0 0
      %415 = vmatpush1.bf16.msra.mxu0 %v371
      %416 = vmatprep.subr.bf16.mxu0 0
      %417 = vmatpush1.bf16.msra.mxu0 %v370
      %418 = vmatprep.subr.bf16.mxu0 0
      %419 = vmatpush2.bf16.msra.mxu0 %v385
      %420 = vmatprep.subr.bf16.mxu0 0
      %421 = vmatpush2.bf16.msra.mxu0 %v384
      %422 = vmatprep.subr.bf16.mxu0 0
      %423 = vmatpush2.bf16.msra.mxu0 %v383
      %424 = vmatprep.subr.bf16.mxu0 0
      %425 = vmatpush2.bf16.msra.mxu0 %v382
      %426 = vmatprep.subr.bf16.mxu0 0
      %427 = vmatpush2.bf16.msra.mxu0 %v381
      %428 = vmatprep.subr.bf16.mxu0 0
      %429 = vmatpush2.bf16.msra.mxu0 %v380
      %430 = vmatprep.subr.bf16.mxu0 0
      %431 = vmatpush2.bf16.msra.mxu0 %v379
      %432 = vmatprep.subr.bf16.mxu0 0
      %433 = vmatpush2.bf16.msra.mxu0 %v378
      %434 = vmatprep.mubr.bf16.mxu0 %v275
      %435 = vmatmul.mubr.bf16.gmra.mxu0 %v274
      %v436 = vpop.f32.mrf.mxu0
      %v437 = vadd.f32 0.0, %v436
      %v438 = vpop.f32.mrf.mxu0
      %v439 = vpop.f32.mrf.mxu0
      %v440 = vadd.f32 0.0, %v439
      %v441 = vpop.f32.mrf.mxu0
      %442 = vmatprep.mubr.bf16.mxu0 %v277
      %443 = vmatmul.mubr.bf16.gmra.mxu0 %v276
      %v444 = vpop.f32.mrf.mxu0
      %v445 = vadd.f32 0.0, %v444
      %v446 = vpop.f32.mrf.mxu0
      %v447 = vpop.f32.mrf.mxu0
      %v448 = vadd.f32 0.0, %v447
      %v449 = vpop.f32.mrf.mxu0
      %450 = vmatprep.mubr.bf16.mxu0 %v279
      %451 = vmatmul.mubr.bf16.gmra.mxu0 %v278
      %v452 = vpop.f32.mrf.mxu0
      %v453 = vadd.f32 0.0, %v452
      %v454 = vpop.f32.mrf.mxu0
      %v455 = vpop.f32.mrf.mxu0
      %v456 = vadd.f32 0.0, %v455
      %v457 = vpop.f32.mrf.mxu0
      %458 = vmatprep.mubr.bf16.mxu0 %v281
      %459 = vmatmul.mubr.bf16.gmra.mxu0 %v280
      %v460 = vpop.f32.mrf.mxu0
      %v461 = vadd.f32 0.0, %v460
      %v462 = vpop.f32.mrf.mxu0
      %v463 = vpop.f32.mrf.mxu0
      %v464 = vadd.f32 0.0, %v463
      %v465 = vpop.f32.mrf.mxu0
      %466 = vmatprep.mubr.bf16.mxu0 %v283
      %467 = vmatmul.mubr.bf16.gmra.mxu0 %v282
      %v468 = vpop.f32.mrf.mxu0
      %v469 = vadd.f32 0.0, %v468
      %v470 = vpop.f32.mrf.mxu0
      %v471 = vpop.f32.mrf.mxu0
      %v472 = vadd.f32 0.0, %v471
      %v473 = vpop.f32.mrf.mxu0
      %474 = vmatprep.mubr.bf16.mxu0 %v285
      %475 = vmatmul.mubr.bf16.gmra.mxu0 %v284
      %v476 = vpop.f32.mrf.mxu0
      %v477 = vadd.f32 0.0, %v476
      %v478 = vpop.f32.mrf.mxu0
      %v479 = vpop.f32.mrf.mxu0
      %v480 = vadd.f32 0.0, %v479
      %v481 = vpop.f32.mrf.mxu0
      %482 = vmatprep.mubr.bf16.mxu0 %v287
      %483 = vmatmul.mubr.bf16.gmra.mxu0 %v286
      %v484 = vpop.f32.mrf.mxu0
      %v485 = vadd.f32 0.0, %v484
      %v486 = vpop.f32.mrf.mxu0
      %v487 = vpop.f32.mrf.mxu0
      %v488 = vadd.f32 0.0, %v487
      %v489 = vpop.f32.mrf.mxu0
      %490 = vmatprep.mubr.bf16.mxu0 %v289
      %491 = vmatmul.mubr.bf16.gmra.mxu0 %v288
      %v492 = vpop.f32.mrf.mxu0
      %v493 = vadd.f32 0.0, %v492
      %v494 = vpop.f32.mrf.mxu0
      %v495 = vpop.f32.mrf.mxu0
      %v496 = vadd.f32 0.0, %v495
      %v497 = vpop.f32.mrf.mxu0
      %498 = vdwg.mxu0
      %v499 = vsel %vm192, %v437, -inf
      %v500 = vsel %vm192, %v440, -inf
      %v501 = vsel %vm192, %v445, -inf
      %v502 = vsel %vm192, %v448, -inf
      %v503 = vsel %vm192, %v453, -inf
      %v504 = vsel %vm192, %v456, -inf
      %v505 = vsel %vm192, %v461, -inf
      %v506 = vsel %vm192, %v464, -inf
      %v507 = vsel %vm192, %v469, -inf
      %v508 = vsel %vm192, %v472, -inf
      %v509 = vsel %vm192, %v477, -inf
      %v510 = vsel %vm192, %v480, -inf
      %v511 = vsel %vm192, %v485, -inf
      %v512 = vsel %vm192, %v488, -inf
      %v513 = vsel %vm192, %v493, -inf
      %v514 = vsel %vm192, %v496, -inf
      %v515 = vmax.f32 %v499, %v503
      %v516 = vmax.f32 %v500, %v504
      %v517 = vmax.f32 %v501, %v505
      %v518 = vmax.f32 %v502, %v506
      %v519 = vmax.f32 %v515, %v507
      %v520 = vmax.f32 %v516, %v508
      %v521 = vmax.f32 %v517, %v509
      %v522 = vmax.f32 %v518, %v510
      %v523 = vmax.f32 %v519, %v511
      %v524 = vmax.f32 %v520, %v512
      %v525 = vmax.f32 %v521, %v513
      %v526 = vmax.f32 %v522, %v514
      %v527 = vmax.f32 %v523, %v524
      %v528 = vmax.f32 %v525, %v526
      %v529 = vmax.f32 %v527, %v528
      %530 = vmax.xlane.f32.xlu0 %v529
      %v531 = vpop.xlane.xlu0 %530
      %v532 = vrot.slane %v531, 4
      %v533 = vmax.f32 %v531, %v532
      %v534 = vrot.slane %v533, 2
      %v535 = vmax.f32 %v533, %v534
      %v536 = vrot.slane %v535, 1
      %v537 = vmax.f32 %v535, %v536
      %s538 = vtos %v537
      %v539 = vstv %s538
      %v540 = vmax.f32 %v193, %v539
      %s541 = scalar_lea.vmem %s160, 128
      %v542 = vld [vmem:[%s541] sm:$0xf]
      %v543 = vld [vmem:[%s541 + $0x4] sm:$0xf]
      %v544 = vld [vmem:[%s541 + $0x8] sm:$0xf]
      %v545 = vld [vmem:[%s541 + $0xc] sm:$0xf]
      %v546 = vld [vmem:[%s541 + $0x10] sm:$0xf]
      %v547 = vld [vmem:[%s541 + $0x14] sm:$0xf]
      %v548 = vld [vmem:[%s541 + $0x18] sm:$0xf]
      %v549 = vld [vmem:[%s541 + $0x1c] sm:$0xf]
      %v550 = vld [vmem:[%s541 + $0x20] sm:$0xf]
      %v551 = vld [vmem:[%s541 + $0x24] sm:$0xf]
      %v552 = vld [vmem:[%s541 + $0x28] sm:$0xf]
      %v553 = vld [vmem:[%s541 + $0x2c] sm:$0xf]
      %v554 = vld [vmem:[%s541 + $0x30] sm:$0xf]
      %v555 = vld [vmem:[%s541 + $0x34] sm:$0xf]
      %v556 = vld [vmem:[%s541 + $0x38] sm:$0xf]
      %v557 = vld [vmem:[%s541 + $0x3c] sm:$0xf]
      %v558 = vld [vmem:[%s541 + $0x40] sm:$0xf]
      %v559 = vld [vmem:[%s541 + $0x44] sm:$0xf]
      %v560 = vld [vmem:[%s541 + $0x48] sm:$0xf]
      %v561 = vld [vmem:[%s541 + $0x4c] sm:$0xf]
      %v562 = vld [vmem:[%s541 + $0x50] sm:$0xf]
      %v563 = vld [vmem:[%s541 + $0x54] sm:$0xf]
      %v564 = vld [vmem:[%s541 + $0x58] sm:$0xf]
      %v565 = vld [vmem:[%s541 + $0x5c] sm:$0xf]
      %v566 = vld [vmem:[%s541 + $0x60] sm:$0xf]
      %v567 = vld [vmem:[%s541 + $0x64] sm:$0xf]
      %v568 = vld [vmem:[%s541 + $0x68] sm:$0xf]
      %v569 = vld [vmem:[%s541 + $0x6c] sm:$0xf]
      %v570 = vld [vmem:[%s541 + $0x70] sm:$0xf]
      %v571 = vld [vmem:[%s541 + $0x74] sm:$0xf]
      %v572 = vld [vmem:[%s541 + $0x78] sm:$0xf]
      %v573 = vld [vmem:[%s541 + $0x7c] sm:$0xf]
      %v606 = vunpack.c.l.b16 %v542
      %v607 = vunpack.c.l.b16 %v543
      %v608 = vunpack.c.l.b16 %v544
      %v609 = vunpack.c.l.b16 %v545
      %v610 = vunpack.c.l.b16 %v546
      %v611 = vunpack.c.l.b16 %v547
      %v612 = vunpack.c.l.b16 %v548
      %v613 = vunpack.c.l.b16 %v549
      %v614 = vunpack.c.l.b16 %v550
      %v615 = vunpack.c.l.b16 %v551
      %v616 = vunpack.c.l.b16 %v552
      %v617 = vunpack.c.l.b16 %v553
      %v618 = vunpack.c.l.b16 %v554
      %v619 = vunpack.c.l.b16 %v555
      %v620 = vunpack.c.l.b16 %v556
      %v621 = vunpack.c.l.b16 %v557
      %v622 = vunpack.c.l.b16 %v558
      %v623 = vunpack.c.l.b16 %v559
      %v624 = vunpack.c.l.b16 %v560
      %v625 = vunpack.c.l.b16 %v561
      %v626 = vunpack.c.l.b16 %v562
      %v627 = vunpack.c.l.b16 %v563
      %v628 = vunpack.c.l.b16 %v564
      %v629 = vunpack.c.l.b16 %v565
      %v630 = vunpack.c.l.b16 %v566
      %v631 = vunpack.c.l.b16 %v567
      %v632 = vunpack.c.l.b16 %v568
      %v633 = vunpack.c.l.b16 %v569
      %v634 = vunpack.c.l.b16 %v570
      %v635 = vunpack.c.l.b16 %v571
      %v636 = vunpack.c.l.b16 %v572
      %v637 = vunpack.c.l.b16 %v573
      %v638 = vpack.c.b16 %v607, %v606
      %v639 = vpack.c.b16 %v609, %v608
      %v640 = vpack.c.b16 %v611, %v610
      %v641 = vpack.c.b16 %v613, %v612
      %v642 = vpack.c.b16 %v615, %v614
      %v643 = vpack.c.b16 %v617, %v616
      %v644 = vpack.c.b16 %v619, %v618
      %v645 = vpack.c.b16 %v621, %v620
      %v646 = vpack.c.b16 %v623, %v622
      %v647 = vpack.c.b16 %v625, %v624
      %v648 = vpack.c.b16 %v627, %v626
      %v649 = vpack.c.b16 %v629, %v628
      %v650 = vpack.c.b16 %v631, %v630
      %v651 = vpack.c.b16 %v633, %v632
      %v652 = vpack.c.b16 %v635, %v634
      %v653 = vpack.c.b16 %v637, %v636
      %670 = vmatprep.subr.bf16.mxu0 0
      %671 = vmatpush1.bf16.msra.mxu0 %v645
      %672 = vmatprep.subr.bf16.mxu0 0
      %673 = vmatpush1.bf16.msra.mxu0 %v644
      %674 = vmatprep.subr.bf16.mxu0 0
      %675 = vmatpush1.bf16.msra.mxu0 %v643
      %676 = vmatprep.subr.bf16.mxu0 0
      %677 = vmatpush1.bf16.msra.mxu0 %v642
      %678 = vmatprep.subr.bf16.mxu0 0
      %679 = vmatpush1.bf16.msra.mxu0 %v641
      %680 = vmatprep.subr.bf16.mxu0 0
      %681 = vmatpush1.bf16.msra.mxu0 %v640
      %682 = vmatprep.subr.bf16.mxu0 0
      %683 = vmatpush1.bf16.msra.mxu0 %v639
      %684 = vmatprep.subr.bf16.mxu0 0
      %685 = vmatpush1.bf16.msra.mxu0 %v638
      %686 = vmatprep.subr.bf16.mxu0 0
      %687 = vmatpush2.bf16.msra.mxu0 %v653
      %688 = vmatprep.subr.bf16.mxu0 0
      %689 = vmatpush2.bf16.msra.mxu0 %v652
      %690 = vmatprep.subr.bf16.mxu0 0
      %691 = vmatpush2.bf16.msra.mxu0 %v651
      %692 = vmatprep.subr.bf16.mxu0 0
      %693 = vmatpush2.bf16.msra.mxu0 %v650
      %694 = vmatprep.subr.bf16.mxu0 0
      %695 = vmatpush2.bf16.msra.mxu0 %v649
      %696 = vmatprep.subr.bf16.mxu0 0
      %697 = vmatpush2.bf16.msra.mxu0 %v648
      %698 = vmatprep.subr.bf16.mxu0 0
      %699 = vmatpush2.bf16.msra.mxu0 %v647
      %700 = vmatprep.subr.bf16.mxu0 0
      %701 = vmatpush2.bf16.msra.mxu0 %v646
      %702 = vmatprep.mubr.bf16.mxu0 %v275
      %703 = vmatmul.mubr.bf16.gmra.mxu0 %v274
      %v704 = vpop.f32.mrf.mxu0
      %v705 = vadd.f32 0.0, %v704
      %v706 = vpop.f32.mrf.mxu0
      %v707 = vpop.f32.mrf.mxu0
      %v708 = vadd.f32 0.0, %v707
      %v709 = vpop.f32.mrf.mxu0
      %710 = vmatprep.mubr.bf16.mxu0 %v277
      %711 = vmatmul.mubr.bf16.gmra.mxu0 %v276
      %v712 = vpop.f32.mrf.mxu0
      %v713 = vadd.f32 0.0, %v712
      %v714 = vpop.f32.mrf.mxu0
      %v715 = vpop.f32.mrf.mxu0
      %v716 = vadd.f32 0.0, %v715
      %v717 = vpop.f32.mrf.mxu0
      %718 = vmatprep.mubr.bf16.mxu0 %v279
      %719 = vmatmul.mubr.bf16.gmra.mxu0 %v278
      %v720 = vpop.f32.mrf.mxu0
      %v721 = vadd.f32 0.0, %v720
      %v722 = vpop.f32.mrf.mxu0
      %v723 = vpop.f32.mrf.mxu0
      %v724 = vadd.f32 0.0, %v723
      %v725 = vpop.f32.mrf.mxu0
      %726 = vmatprep.mubr.bf16.mxu0 %v281
      %727 = vmatmul.mubr.bf16.gmra.mxu0 %v280
      %v728 = vpop.f32.mrf.mxu0
      %v729 = vadd.f32 0.0, %v728
      %v730 = vpop.f32.mrf.mxu0
      %v731 = vpop.f32.mrf.mxu0
      %v732 = vadd.f32 0.0, %v731
      %v733 = vpop.f32.mrf.mxu0
      %734 = vmatprep.mubr.bf16.mxu0 %v283
      %735 = vmatmul.mubr.bf16.gmra.mxu0 %v282
      %v736 = vpop.f32.mrf.mxu0
      %v737 = vadd.f32 0.0, %v736
      %v738 = vpop.f32.mrf.mxu0
      %v739 = vpop.f32.mrf.mxu0
      %v740 = vadd.f32 0.0, %v739
      %v741 = vpop.f32.mrf.mxu0
      %742 = vmatprep.mubr.bf16.mxu0 %v285
      %743 = vmatmul.mubr.bf16.gmra.mxu0 %v284
      %v744 = vpop.f32.mrf.mxu0
      %v745 = vadd.f32 0.0, %v744
      %v746 = vpop.f32.mrf.mxu0
      %v747 = vpop.f32.mrf.mxu0
      %v748 = vadd.f32 0.0, %v747
      %v749 = vpop.f32.mrf.mxu0
      %750 = vmatprep.mubr.bf16.mxu0 %v287
      %751 = vmatmul.mubr.bf16.gmra.mxu0 %v286
      %v752 = vpop.f32.mrf.mxu0
      %v753 = vadd.f32 0.0, %v752
      %v754 = vpop.f32.mrf.mxu0
      %v755 = vpop.f32.mrf.mxu0
      %v756 = vadd.f32 0.0, %v755
      %v757 = vpop.f32.mrf.mxu0
      %758 = vmatprep.mubr.bf16.mxu0 %v289
      %759 = vmatmul.mubr.bf16.gmra.mxu0 %v288
      %v760 = vpop.f32.mrf.mxu0
      %v761 = vadd.f32 0.0, %v760
      %v762 = vpop.f32.mrf.mxu0
      %v763 = vpop.f32.mrf.mxu0
      %v764 = vadd.f32 0.0, %v763
      %v765 = vpop.f32.mrf.mxu0
      %766 = vdwg.mxu0
      %v767 = vsel %vm192, %v705, -inf
      %v768 = vsel %vm192, %v708, -inf
      %v769 = vsel %vm192, %v713, -inf
      %v770 = vsel %vm192, %v716, -inf
      %v771 = vsel %vm192, %v721, -inf
      %v772 = vsel %vm192, %v724, -inf
      %v773 = vsel %vm192, %v729, -inf
      %v774 = vsel %vm192, %v732, -inf
      %v775 = vsel %vm192, %v737, -inf
      %v776 = vsel %vm192, %v740, -inf
      %v777 = vsel %vm192, %v745, -inf
      %v778 = vsel %vm192, %v748, -inf
      %v779 = vsel %vm192, %v753, -inf
      %v780 = vsel %vm192, %v756, -inf
      %v781 = vsel %vm192, %v761, -inf
      %v782 = vsel %vm192, %v764, -inf
      %v783 = vmax.f32 %v767, %v771
      %v784 = vmax.f32 %v768, %v772
      %v785 = vmax.f32 %v769, %v773
      %v786 = vmax.f32 %v770, %v774
      %v787 = vmax.f32 %v783, %v775
      %v788 = vmax.f32 %v784, %v776
      %v789 = vmax.f32 %v785, %v777
      %v790 = vmax.f32 %v786, %v778
      %v791 = vmax.f32 %v787, %v779
      %v792 = vmax.f32 %v788, %v780
      %v793 = vmax.f32 %v789, %v781
      %v794 = vmax.f32 %v790, %v782
      %v795 = vmax.f32 %v791, %v792
      %v796 = vmax.f32 %v793, %v794
      %v797 = vmax.f32 %v795, %v796
      %798 = vmax.xlane.f32.xlu0 %v797
      %v799 = vpop.xlane.xlu0 %798
      %v800 = vrot.slane %v799, 4
      %v801 = vmax.f32 %v799, %v800
      %v802 = vrot.slane %v801, 2
      %v803 = vmax.f32 %v801, %v802
      %v804 = vrot.slane %v803, 1
      %v805 = vmax.f32 %v803, %v804
      %s806 = vtos %v805
      %v807 = vstv %s806
      %v808 = vmax.f32 %v540, %v807
      %s809 = scalar_lea.vmem %s160, 256
      %v810 = vld [vmem:[%s809] sm:$0xf]
      %v811 = vld [vmem:[%s809 + $0x4] sm:$0xf]
      %v812 = vld [vmem:[%s809 + $0x8] sm:$0xf]
      %v813 = vld [vmem:[%s809 + $0xc] sm:$0xf]
      %v814 = vld [vmem:[%s809 + $0x10] sm:$0xf]
      %v815 = vld [vmem:[%s809 + $0x14] sm:$0xf]
      %v816 = vld [vmem:[%s809 + $0x18] sm:$0xf]
      %v817 = vld [vmem:[%s809 + $0x1c] sm:$0xf]
      %v818 = vld [vmem:[%s809 + $0x20] sm:$0xf]
      %v819 = vld [vmem:[%s809 + $0x24] sm:$0xf]
      %v820 = vld [vmem:[%s809 + $0x28] sm:$0xf]
      %v821 = vld [vmem:[%s809 + $0x2c] sm:$0xf]
      %v822 = vld [vmem:[%s809 + $0x30] sm:$0xf]
      %v823 = vld [vmem:[%s809 + $0x34] sm:$0xf]
      %v824 = vld [vmem:[%s809 + $0x38] sm:$0xf]
      %v825 = vld [vmem:[%s809 + $0x3c] sm:$0xf]
      %v826 = vld [vmem:[%s809 + $0x40] sm:$0xf]
      %v827 = vld [vmem:[%s809 + $0x44] sm:$0xf]
      %v828 = vld [vmem:[%s809 + $0x48] sm:$0xf]
      %v829 = vld [vmem:[%s809 + $0x4c] sm:$0xf]
      %v830 = vld [vmem:[%s809 + $0x50] sm:$0xf]
      %v831 = vld [vmem:[%s809 + $0x54] sm:$0xf]
      %v832 = vld [vmem:[%s809 + $0x58] sm:$0xf]
      %v833 = vld [vmem:[%s809 + $0x5c] sm:$0xf]
      %v834 = vld [vmem:[%s809 + $0x60] sm:$0xf]
      %v835 = vld [vmem:[%s809 + $0x64] sm:$0xf]
      %v836 = vld [vmem:[%s809 + $0x68] sm:$0xf]
      %v837 = vld [vmem:[%s809 + $0x6c] sm:$0xf]
      %v838 = vld [vmem:[%s809 + $0x70] sm:$0xf]
      %v839 = vld [vmem:[%s809 + $0x74] sm:$0xf]
      %v840 = vld [vmem:[%s809 + $0x78] sm:$0xf]
      %v841 = vld [vmem:[%s809 + $0x7c] sm:$0xf]
      %v874 = vunpack.c.l.b16 %v810
      %v875 = vunpack.c.l.b16 %v811
      %v876 = vunpack.c.l.b16 %v812
      %v877 = vunpack.c.l.b16 %v813
      %v878 = vunpack.c.l.b16 %v814
      %v879 = vunpack.c.l.b16 %v815
      %v880 = vunpack.c.l.b16 %v816
      %v881 = vunpack.c.l.b16 %v817
      %v882 = vunpack.c.l.b16 %v818
      %v883 = vunpack.c.l.b16 %v819
      %v884 = vunpack.c.l.b16 %v820
      %v885 = vunpack.c.l.b16 %v821
      %v886 = vunpack.c.l.b16 %v822
      %v887 = vunpack.c.l.b16 %v823
      %v888 = vunpack.c.l.b16 %v824
      %v889 = vunpack.c.l.b16 %v825
      %v890 = vunpack.c.l.b16 %v826
      %v891 = vunpack.c.l.b16 %v827
      %v892 = vunpack.c.l.b16 %v828
      %v893 = vunpack.c.l.b16 %v829
      %v894 = vunpack.c.l.b16 %v830
      %v895 = vunpack.c.l.b16 %v831
      %v896 = vunpack.c.l.b16 %v832
      %v897 = vunpack.c.l.b16 %v833
      %v898 = vunpack.c.l.b16 %v834
      %v899 = vunpack.c.l.b16 %v835
      %v900 = vunpack.c.l.b16 %v836
      %v901 = vunpack.c.l.b16 %v837
      %v902 = vunpack.c.l.b16 %v838
      %v903 = vunpack.c.l.b16 %v839
      %v904 = vunpack.c.l.b16 %v840
      %v905 = vunpack.c.l.b16 %v841
      %v906 = vpack.c.b16 %v875, %v874
      %v907 = vpack.c.b16 %v877, %v876
      %v908 = vpack.c.b16 %v879, %v878
      %v909 = vpack.c.b16 %v881, %v880
      %v910 = vpack.c.b16 %v883, %v882
      %v911 = vpack.c.b16 %v885, %v884
      %v912 = vpack.c.b16 %v887, %v886
      %v913 = vpack.c.b16 %v889, %v888
      %v914 = vpack.c.b16 %v891, %v890
      %v915 = vpack.c.b16 %v893, %v892
      %v916 = vpack.c.b16 %v895, %v894
      %v917 = vpack.c.b16 %v897, %v896
      %v918 = vpack.c.b16 %v899, %v898
      %v919 = vpack.c.b16 %v901, %v900
      %v920 = vpack.c.b16 %v903, %v902
      %v921 = vpack.c.b16 %v905, %v904
      %938 = vmatprep.subr.bf16.mxu0 0
      %939 = vmatpush1.bf16.msra.mxu0 %v913
      %940 = vmatprep.subr.bf16.mxu0 0
      %941 = vmatpush1.bf16.msra.mxu0 %v912
      %942 = vmatprep.subr.bf16.mxu0 0
      %943 = vmatpush1.bf16.msra.mxu0 %v911
      %944 = vmatprep.subr.bf16.mxu0 0
      %945 = vmatpush1.bf16.msra.mxu0 %v910
      %946 = vmatprep.subr.bf16.mxu0 0
      %947 = vmatpush1.bf16.msra.mxu0 %v909
      %948 = vmatprep.subr.bf16.mxu0 0
      %949 = vmatpush1.bf16.msra.mxu0 %v908
      %950 = vmatprep.subr.bf16.mxu0 0
      %951 = vmatpush1.bf16.msra.mxu0 %v907
      %952 = vmatprep.subr.bf16.mxu0 0
      %953 = vmatpush1.bf16.msra.mxu0 %v906
      %954 = vmatprep.subr.bf16.mxu0 0
      %955 = vmatpush2.bf16.msra.mxu0 %v921
      %956 = vmatprep.subr.bf16.mxu0 0
      %957 = vmatpush2.bf16.msra.mxu0 %v920
      %958 = vmatprep.subr.bf16.mxu0 0
      %959 = vmatpush2.bf16.msra.mxu0 %v919
      %960 = vmatprep.subr.bf16.mxu0 0
      %961 = vmatpush2.bf16.msra.mxu0 %v918
      %962 = vmatprep.subr.bf16.mxu0 0
      %963 = vmatpush2.bf16.msra.mxu0 %v917
      %964 = vmatprep.subr.bf16.mxu0 0
      %965 = vmatpush2.bf16.msra.mxu0 %v916
      %966 = vmatprep.subr.bf16.mxu0 0
      %967 = vmatpush2.bf16.msra.mxu0 %v915
      %968 = vmatprep.subr.bf16.mxu0 0
      %969 = vmatpush2.bf16.msra.mxu0 %v914
      %970 = vmatprep.mubr.bf16.mxu0 %v275
      %971 = vmatmul.mubr.bf16.gmra.mxu0 %v274
      %v972 = vpop.f32.mrf.mxu0
      %v973 = vadd.f32 0.0, %v972
      %v974 = vpop.f32.mrf.mxu0
      %v975 = vpop.f32.mrf.mxu0
      %v976 = vadd.f32 0.0, %v975
      %v977 = vpop.f32.mrf.mxu0
      %978 = vmatprep.mubr.bf16.mxu0 %v277
      %979 = vmatmul.mubr.bf16.gmra.mxu0 %v276
      %v980 = vpop.f32.mrf.mxu0
      %v981 = vadd.f32 0.0, %v980
      %v982 = vpop.f32.mrf.mxu0
      %v983 = vpop.f32.mrf.mxu0
      %v984 = vadd.f32 0.0, %v983
      %v985 = vpop.f32.mrf.mxu0
      %986 = vmatprep.mubr.bf16.mxu0 %v279
      %987 = vmatmul.mubr.bf16.gmra.mxu0 %v278
      %v988 = vpop.f32.mrf.mxu0
      %v989 = vadd.f32 0.0, %v988
      %v990 = vpop.f32.mrf.mxu0
      %v991 = vpop.f32.mrf.mxu0
      %v992 = vadd.f32 0.0, %v991
      %v993 = vpop.f32.mrf.mxu0
      %994 = vmatprep.mubr.bf16.mxu0 %v281
      %995 = vmatmul.mubr.bf16.gmra.mxu0 %v280
      %v996 = vpop.f32.mrf.mxu0
      %v997 = vadd.f32 0.0, %v996
      %v998 = vpop.f32.mrf.mxu0
      %v999 = vpop.f32.mrf.mxu0
      %v1000 = vadd.f32 0.0, %v999
      %v1001 = vpop.f32.mrf.mxu0
      %1002 = vmatprep.mubr.bf16.mxu0 %v283
      %1003 = vmatmul.mubr.bf16.gmra.mxu0 %v282
      %v1004 = vpop.f32.mrf.mxu0
      %v1005 = vadd.f32 0.0, %v1004
      %v1006 = vpop.f32.mrf.mxu0
      %v1007 = vpop.f32.mrf.mxu0
      %v1008 = vadd.f32 0.0, %v1007
      %v1009 = vpop.f32.mrf.mxu0
      %1010 = vmatprep.mubr.bf16.mxu0 %v285
      %1011 = vmatmul.mubr.bf16.gmra.mxu0 %v284
      %v1012 = vpop.f32.mrf.mxu0
      %v1013 = vadd.f32 0.0, %v1012
      %v1014 = vpop.f32.mrf.mxu0
      %v1015 = vpop.f32.mrf.mxu0
      %v1016 = vadd.f32 0.0, %v1015
      %v1017 = vpop.f32.mrf.mxu0
      %1018 = vmatprep.mubr.bf16.mxu0 %v287
      %1019 = vmatmul.mubr.bf16.gmra.mxu0 %v286
      %v1020 = vpop.f32.mrf.mxu0
      %v1021 = vadd.f32 0.0, %v1020
      %v1022 = vpop.f32.mrf.mxu0
      %v1023 = vpop.f32.mrf.mxu0
      %v1024 = vadd.f32 0.0, %v1023
      %v1025 = vpop.f32.mrf.mxu0
      %1026 = vmatprep.mubr.bf16.mxu0 %v289
      %1027 = vmatmul.mubr.bf16.gmra.mxu0 %v288
      %v1028 = vpop.f32.mrf.mxu0
      %v1029 = vadd.f32 0.0, %v1028
      %v1030 = vpop.f32.mrf.mxu0
      %v1031 = vpop.f32.mrf.mxu0
      %v1032 = vadd.f32 0.0, %v1031
      %v1033 = vpop.f32.mrf.mxu0
      %1034 = vdwg.mxu0
      %v1035 = vsel %vm192, %v973, -inf
      %v1036 = vsel %vm192, %v976, -inf
      %v1037 = vsel %vm192, %v981, -inf
      %v1038 = vsel %vm192, %v984, -inf
      %v1039 = vsel %vm192, %v989, -inf
      %v1040 = vsel %vm192, %v992, -inf
      %v1041 = vsel %vm192, %v997, -inf
      %v1042 = vsel %vm192, %v1000, -inf
      %v1043 = vsel %vm192, %v1005, -inf
      %v1044 = vsel %vm192, %v1008, -inf
      %v1045 = vsel %vm192, %v1013, -inf
      %v1046 = vsel %vm192, %v1016, -inf
      %v1047 = vsel %vm192, %v1021, -inf
      %v1048 = vsel %vm192, %v1024, -inf
      %v1049 = vsel %vm192, %v1029, -inf
      %v1050 = vsel %vm192, %v1032, -inf
      %v1051 = vmax.f32 %v1035, %v1039
      %v1052 = vmax.f32 %v1036, %v1040
      %v1053 = vmax.f32 %v1037, %v1041
      %v1054 = vmax.f32 %v1038, %v1042
      %v1055 = vmax.f32 %v1051, %v1043
      %v1056 = vmax.f32 %v1052, %v1044
      %v1057 = vmax.f32 %v1053, %v1045
      %v1058 = vmax.f32 %v1054, %v1046
      %v1059 = vmax.f32 %v1055, %v1047
      %v1060 = vmax.f32 %v1056, %v1048
      %v1061 = vmax.f32 %v1057, %v1049
      %v1062 = vmax.f32 %v1058, %v1050
      %v1063 = vmax.f32 %v1059, %v1060
      %v1064 = vmax.f32 %v1061, %v1062
      %v1065 = vmax.f32 %v1063, %v1064
      %1066 = vmax.xlane.f32.xlu0 %v1065
      %v1067 = vpop.xlane.xlu0 %1066
      %v1068 = vrot.slane %v1067, 4
      %v1069 = vmax.f32 %v1067, %v1068
      %v1070 = vrot.slane %v1069, 2
      %v1071 = vmax.f32 %v1069, %v1070
      %v1072 = vrot.slane %v1071, 1
      %v1073 = vmax.f32 %v1071, %v1072
      %s1074 = vtos %v1073
      %v1075 = vstv %s1074
      %v1076 = vmax.f32 %v808, %v1075
      %s1077 = scalar_lea.vmem %s160, 384
      %v1078 = vld [vmem:[%s1077] sm:$0xf]
      %v1079 = vld [vmem:[%s1077 + $0x4] sm:$0xf]
      %v1080 = vld [vmem:[%s1077 + $0x8] sm:$0xf]
      %v1081 = vld [vmem:[%s1077 + $0xc] sm:$0xf]
      %v1082 = vld [vmem:[%s1077 + $0x10] sm:$0xf]
      %v1083 = vld [vmem:[%s1077 + $0x14] sm:$0xf]
      %v1084 = vld [vmem:[%s1077 + $0x18] sm:$0xf]
      %v1085 = vld [vmem:[%s1077 + $0x1c] sm:$0xf]
      %v1086 = vld [vmem:[%s1077 + $0x20] sm:$0xf]
      %v1087 = vld [vmem:[%s1077 + $0x24] sm:$0xf]
      %v1088 = vld [vmem:[%s1077 + $0x28] sm:$0xf]
      %v1089 = vld [vmem:[%s1077 + $0x2c] sm:$0xf]
      %v1090 = vld [vmem:[%s1077 + $0x30] sm:$0xf]
      %v1091 = vld [vmem:[%s1077 + $0x34] sm:$0xf]
      %v1092 = vld [vmem:[%s1077 + $0x38] sm:$0xf]
      %v1093 = vld [vmem:[%s1077 + $0x3c] sm:$0xf]
      %v1094 = vld [vmem:[%s1077 + $0x40] sm:$0xf]
      %v1095 = vld [vmem:[%s1077 + $0x44] sm:$0xf]
      %v1096 = vld [vmem:[%s1077 + $0x48] sm:$0xf]
      %v1097 = vld [vmem:[%s1077 + $0x4c] sm:$0xf]
      %v1098 = vld [vmem:[%s1077 + $0x50] sm:$0xf]
      %v1099 = vld [vmem:[%s1077 + $0x54] sm:$0xf]
      %v1100 = vld [vmem:[%s1077 + $0x58] sm:$0xf]
      %v1101 = vld [vmem:[%s1077 + $0x5c] sm:$0xf]
      %v1102 = vld [vmem:[%s1077 + $0x60] sm:$0xf]
      %v1103 = vld [vmem:[%s1077 + $0x64] sm:$0xf]
      %v1104 = vld [vmem:[%s1077 + $0x68] sm:$0xf]
      %v1105 = vld [vmem:[%s1077 + $0x6c] sm:$0xf]
      %v1106 = vld [vmem:[%s1077 + $0x70] sm:$0xf]
      %v1107 = vld [vmem:[%s1077 + $0x74] sm:$0xf]
      %v1108 = vld [vmem:[%s1077 + $0x78] sm:$0xf]
      %v1109 = vld [vmem:[%s1077 + $0x7c] sm:$0xf]
      %v1142 = vunpack.c.l.b16 %v1078
      %v1143 = vunpack.c.l.b16 %v1079
      %v1144 = vunpack.c.l.b16 %v1080
      %v1145 = vunpack.c.l.b16 %v1081
      %v1146 = vunpack.c.l.b16 %v1082
      %v1147 = vunpack.c.l.b16 %v1083
      %v1148 = vunpack.c.l.b16 %v1084
      %v1149 = vunpack.c.l.b16 %v1085
      %v1150 = vunpack.c.l.b16 %v1086
      %v1151 = vunpack.c.l.b16 %v1087
      %v1152 = vunpack.c.l.b16 %v1088
      %v1153 = vunpack.c.l.b16 %v1089
      %v1154 = vunpack.c.l.b16 %v1090
      %v1155 = vunpack.c.l.b16 %v1091
      %v1156 = vunpack.c.l.b16 %v1092
      %v1157 = vunpack.c.l.b16 %v1093
      %v1158 = vunpack.c.l.b16 %v1094
      %v1159 = vunpack.c.l.b16 %v1095
      %v1160 = vunpack.c.l.b16 %v1096
      %v1161 = vunpack.c.l.b16 %v1097
      %v1162 = vunpack.c.l.b16 %v1098
      %v1163 = vunpack.c.l.b16 %v1099
      %v1164 = vunpack.c.l.b16 %v1100
      %v1165 = vunpack.c.l.b16 %v1101
      %v1166 = vunpack.c.l.b16 %v1102
      %v1167 = vunpack.c.l.b16 %v1103
      %v1168 = vunpack.c.l.b16 %v1104
      %v1169 = vunpack.c.l.b16 %v1105
      %v1170 = vunpack.c.l.b16 %v1106
      %v1171 = vunpack.c.l.b16 %v1107
      %v1172 = vunpack.c.l.b16 %v1108
      %v1173 = vunpack.c.l.b16 %v1109
      %v1174 = vpack.c.b16 %v1143, %v1142
      %v1175 = vpack.c.b16 %v1145, %v1144
      %v1176 = vpack.c.b16 %v1147, %v1146
      %v1177 = vpack.c.b16 %v1149, %v1148
      %v1178 = vpack.c.b16 %v1151, %v1150
      %v1179 = vpack.c.b16 %v1153, %v1152
      %v1180 = vpack.c.b16 %v1155, %v1154
      %v1181 = vpack.c.b16 %v1157, %v1156
      %v1182 = vpack.c.b16 %v1159, %v1158
      %v1183 = vpack.c.b16 %v1161, %v1160
      %v1184 = vpack.c.b16 %v1163, %v1162
      %v1185 = vpack.c.b16 %v1165, %v1164
      %v1186 = vpack.c.b16 %v1167, %v1166
      %v1187 = vpack.c.b16 %v1169, %v1168
      %v1188 = vpack.c.b16 %v1171, %v1170
      %v1189 = vpack.c.b16 %v1173, %v1172
      %1206 = vmatprep.subr.bf16.mxu0 0
      %1207 = vmatpush1.bf16.msra.mxu0 %v1181
      %1208 = vmatprep.subr.bf16.mxu0 0
      %1209 = vmatpush1.bf16.msra.mxu0 %v1180
      %1210 = vmatprep.subr.bf16.mxu0 0
      %1211 = vmatpush1.bf16.msra.mxu0 %v1179
      %1212 = vmatprep.subr.bf16.mxu0 0
      %1213 = vmatpush1.bf16.msra.mxu0 %v1178
      %1214 = vmatprep.subr.bf16.mxu0 0
      %1215 = vmatpush1.bf16.msra.mxu0 %v1177
      %1216 = vmatprep.subr.bf16.mxu0 0
      %1217 = vmatpush1.bf16.msra.mxu0 %v1176
      %1218 = vmatprep.subr.bf16.mxu0 0
      %1219 = vmatpush1.bf16.msra.mxu0 %v1175
      %1220 = vmatprep.subr.bf16.mxu0 0
      %1221 = vmatpush1.bf16.msra.mxu0 %v1174
      %1222 = vmatprep.subr.bf16.mxu0 0
      %1223 = vmatpush2.bf16.msra.mxu0 %v1189
      %1224 = vmatprep.subr.bf16.mxu0 0
      %1225 = vmatpush2.bf16.msra.mxu0 %v1188
      %1226 = vmatprep.subr.bf16.mxu0 0
      %1227 = vmatpush2.bf16.msra.mxu0 %v1187
      %1228 = vmatprep.subr.bf16.mxu0 0
      %1229 = vmatpush2.bf16.msra.mxu0 %v1186
      %1230 = vmatprep.subr.bf16.mxu0 0
      %1231 = vmatpush2.bf16.msra.mxu0 %v1185
      %1232 = vmatprep.subr.bf16.mxu0 0
      %1233 = vmatpush2.bf16.msra.mxu0 %v1184
      %1234 = vmatprep.subr.bf16.mxu0 0
      %1235 = vmatpush2.bf16.msra.mxu0 %v1183
      %1236 = vmatprep.subr.bf16.mxu0 0
      %1237 = vmatpush2.bf16.msra.mxu0 %v1182
      %1238 = vmatprep.mubr.bf16.mxu0 %v275
      %1239 = vmatmul.mubr.bf16.gmra.mxu0 %v274
      %v1240 = vpop.f32.mrf.mxu0
      %v1241 = vadd.f32 0.0, %v1240
      %v1242 = vpop.f32.mrf.mxu0
      %v1243 = vpop.f32.mrf.mxu0
      %v1244 = vadd.f32 0.0, %v1243
      %v1245 = vpop.f32.mrf.mxu0
      %1246 = vmatprep.mubr.bf16.mxu0 %v277
      %1247 = vmatmul.mubr.bf16.gmra.mxu0 %v276
      %v1248 = vpop.f32.mrf.mxu0
      %v1249 = vadd.f32 0.0, %v1248
      %v1250 = vpop.f32.mrf.mxu0
      %v1251 = vpop.f32.mrf.mxu0
      %v1252 = vadd.f32 0.0, %v1251
      %v1253 = vpop.f32.mrf.mxu0
      %1254 = vmatprep.mubr.bf16.mxu0 %v279
      %1255 = vmatmul.mubr.bf16.gmra.mxu0 %v278
      %v1256 = vpop.f32.mrf.mxu0
      %v1257 = vadd.f32 0.0, %v1256
      %v1258 = vpop.f32.mrf.mxu0
      %v1259 = vpop.f32.mrf.mxu0
      %v1260 = vadd.f32 0.0, %v1259
      %v1261 = vpop.f32.mrf.mxu0
      %1262 = vmatprep.mubr.bf16.mxu0 %v281
      %1263 = vmatmul.mubr.bf16.gmra.mxu0 %v280
      %v1264 = vpop.f32.mrf.mxu0
      %v1265 = vadd.f32 0.0, %v1264
      %v1266 = vpop.f32.mrf.mxu0
      %v1267 = vpop.f32.mrf.mxu0
      %v1268 = vadd.f32 0.0, %v1267
      %v1269 = vpop.f32.mrf.mxu0
      %1270 = vmatprep.mubr.bf16.mxu0 %v283
      %1271 = vmatmul.mubr.bf16.gmra.mxu0 %v282
      %v1272 = vpop.f32.mrf.mxu0
      %v1273 = vadd.f32 0.0, %v1272
      %v1274 = vpop.f32.mrf.mxu0
      %v1275 = vpop.f32.mrf.mxu0
      %v1276 = vadd.f32 0.0, %v1275
      %v1277 = vpop.f32.mrf.mxu0
      %1278 = vmatprep.mubr.bf16.mxu0 %v285
      %1279 = vmatmul.mubr.bf16.gmra.mxu0 %v284
      %v1280 = vpop.f32.mrf.mxu0
      %v1281 = vadd.f32 0.0, %v1280
      %v1282 = vpop.f32.mrf.mxu0
      %v1283 = vpop.f32.mrf.mxu0
      %v1284 = vadd.f32 0.0, %v1283
      %v1285 = vpop.f32.mrf.mxu0
      %1286 = vmatprep.mubr.bf16.mxu0 %v287
      %1287 = vmatmul.mubr.bf16.gmra.mxu0 %v286
      %v1288 = vpop.f32.mrf.mxu0
      %v1289 = vadd.f32 0.0, %v1288
      %v1290 = vpop.f32.mrf.mxu0
      %v1291 = vpop.f32.mrf.mxu0
      %v1292 = vadd.f32 0.0, %v1291
      %v1293 = vpop.f32.mrf.mxu0
      %1294 = vmatprep.mubr.bf16.mxu0 %v289
      %1295 = vmatmul.mubr.bf16.gmra.mxu0 %v288
      %v1296 = vpop.f32.mrf.mxu0
      %v1297 = vadd.f32 0.0, %v1296
      %v1298 = vpop.f32.mrf.mxu0
      %v1299 = vpop.f32.mrf.mxu0
      %v1300 = vadd.f32 0.0, %v1299
      %v1301 = vpop.f32.mrf.mxu0
      %1302 = vdwg.mxu0
      %v1303 = vsel %vm192, %v1241, -inf
      %v1304 = vsel %vm192, %v1244, -inf
      %v1305 = vsel %vm192, %v1249, -inf
      %v1306 = vsel %vm192, %v1252, -inf
      %v1307 = vsel %vm192, %v1257, -inf
      %v1308 = vsel %vm192, %v1260, -inf
      %v1309 = vsel %vm192, %v1265, -inf
      %v1310 = vsel %vm192, %v1268, -inf
      %v1311 = vsel %vm192, %v1273, -inf
      %v1312 = vsel %vm192, %v1276, -inf
      %v1313 = vsel %vm192, %v1281, -inf
      %v1314 = vsel %vm192, %v1284, -inf
      %v1315 = vsel %vm192, %v1289, -inf
      %v1316 = vsel %vm192, %v1292, -inf
      %v1317 = vsel %vm192, %v1297, -inf
      %v1318 = vsel %vm192, %v1300, -inf
      %v1319 = vmax.f32 %v1303, %v1307
      %v1320 = vmax.f32 %v1304, %v1308
      %v1321 = vmax.f32 %v1305, %v1309
      %v1322 = vmax.f32 %v1306, %v1310
      %v1323 = vmax.f32 %v1319, %v1311
      %v1324 = vmax.f32 %v1320, %v1312
      %v1325 = vmax.f32 %v1321, %v1313
      %v1326 = vmax.f32 %v1322, %v1314
      %v1327 = vmax.f32 %v1323, %v1315
      %v1328 = vmax.f32 %v1324, %v1316
      %v1329 = vmax.f32 %v1325, %v1317
      %v1330 = vmax.f32 %v1326, %v1318
      %v1331 = vmax.f32 %v1327, %v1328
      %v1332 = vmax.f32 %v1329, %v1330
      %v1333 = vmax.f32 %v1331, %v1332
      %1334 = vmax.xlane.f32.xlu0 %v1333
      %v1335 = vpop.xlane.xlu0 %1334
      %v1336 = vrot.slane %v1335, 4
      %v1337 = vmax.f32 %v1335, %v1336
      %v1338 = vrot.slane %v1337, 2
      %v1339 = vmax.f32 %v1337, %v1338
      %v1340 = vrot.slane %v1339, 1
      %v1341 = vmax.f32 %v1339, %v1340
      %s1342 = vtos %v1341
      %v1343 = vstv %s1342
      %v1344 = vmax.f32 %v1076, %v1343
      %1345 = vst [vmem:[%s164] sm:$0xff] %v1344
      %p1346 = scmp.lt.s32.totalorder %s17, 1
      %s1347 = scalar_select %p1346, %s17, 1
      %s1348 = smul.addr %s1347, 8
      %s1349 = scalar_lea.vmem %s2, %s1348
      // Predicated region
      $region33: #{specto_mfcc.2} parent=27 // pred_check
        %p1350 = pneg %p92
      $region34: #{specto_mfcc.2} parent=27 // pred_check_branch
        %1352 = sbr.rel (%p1350) target = $region36
      $region35: #{specto_mfcc.2} parent=27 // pred_region
        _
      $region36: #{specto_mfcc.2} parent=27 // pred_fallthru
        _
    $region28: #{specto_mfcc.2} parent=5 // pred_fallthru
      _
    %p1353 = scmp.le.s32.totalorder 2, %s8
    // Predicated region
    $region37: #{specto_mfcc.2} parent=5 // pred_check
      %p1354 = pneg %p1353
    $region38: #{specto_mfcc.2} parent=5 // pred_check_branch
      %1356 = sbr.rel (%p1354) target = $region40
    $region39: #{specto_mfcc.2} parent=5 // pred_region
      %s1357 = ssub.s32 %s8, 2
      // Predicated region
      $region41: #{specto_mfcc.2} parent=39 // pred_check
        %p1358 = pneg %p98
      $region42: #{specto_mfcc.2} parent=39 // pred_check_branch
        %1360 = sbr.rel (%p1358) target = $region44
      $region43: #{specto_mfcc.2} parent=39 // pred_region
        %p1361 = scmp.lt.s32.totalorder %s19, 1
        %s1362 = scalar_select %p1361, %s19, 1
        %s1363 = smul.addr %s1362, 8
        %s1364 = scalar_lea.vmem %s2, %s1363
      $region44: #{specto_mfcc.2} parent=39 // pred_fallthru
        _
    $region40: #{specto_mfcc.2} parent=5 // pred_fallthru
      _
  $region6: #{specto_mfcc.2} parent=0 // loop_footer
    %s12 = sadd.s32 1, %s8
  $region7: #{specto_mfcc.2} parent=0 // loop_footer_branch
    %7 = sbr.rel target = $region3
  $region8: #{specto_mfcc.2} parent=0 // loop_exit
    _

// kernel: specto_mfcc.3
$region0: #{specto_mfcc.3}
  #allocation0 [shape = 'u32[]', space=smem, size = 0x4, offset = 0x4, fixed_abs, tag = 'smem constant byte address 0x4 - core index']
  #allocation1 [shape = 'u32[144,128]{1,0:T(1,128)}', space=vmem, size = 0x12000, scoped, tag = 'internal scratch']
  %s0 = inlined_call_operand.vmem [shape: f32[2,8,128], index: 0, kind: input, shape index: {}]
  %s1 = inlined_call_operand.vmem [shape: bf16[2,4,256,128], index: 1, kind: input, shape index: {}]
  %s2 = inlined_call_operand.vmem [shape: bf16[128,256], index: 2, kind: input, shape index: {}]
  %s3 = inlined_call_operand.vmem [shape: f32[40,128], index: 3, kind: input, shape index: {}]
  %s4 = inlined_call_operand.vmem [shape: f32[2,4,40,128], index: 4, kind: output, shape index: {}]
  %s5 = sld [smem:[#allocation0]]
  $region49: #{specto_mfcc.3} parent=0
    _
  %s7 = ssub.s32 1, %s5
  %s8 = scalar_select 0, %s7, %s5
  loop: start=0, step=1, limit=4
  $region2: #{specto_mfcc.3} parent=0 // loop_pre_header
    _
  $region3: #{specto_mfcc.3} parent=0 // loop_header
    %s10 = sphi 0, %s14
    %p11 = scmp.ge.s32.totalorder %s10, 4
    %s17 = sphi 0, %s29
    %s18 = sphi 0, %s25
    %s19 = sphi 0, %s17
    %s20 = sphi 0, %s18
    %s21 = sphi 0, %s19
    %s22 = sphi 0, %s20
    %s32 = sphi 0, %s34
    %s35 = sphi 0, %s32
    %s36 = sphi 0, %s35
    %s52 = sphi 0, %s36
    %s60 = sphi 0, %s62
    %s63 = sphi 0, %s60
    %s64 = sphi 0, %s63
    %s80 = sphi 0, %s64
    %s84 = sphi 0, %s84
    %s86 = sphi 0, %s84
    %s87 = sphi 0, %s86
    %s101 = sphi 0, %s87
    %s105 = sphi 0, %s105
    %s107 = sphi 0, %s105
    %s108 = sphi 0, %s107
    %s122 = sphi 0, %s108
    %s130 = sphi 0, %s132
    %s133 = sphi 0, %s130
    %s134 = sphi 0, %s133
    %s150 = sphi 0, %s134
  $region4: #{specto_mfcc.3} parent=0 // loop_header_branch
    %13 = sbr.rel (%p11) target = $region8
  $region5: #{specto_mfcc.3} parent=0 // loop_body
    %s15 = ssub.s32 %s10, 1
    %s16 = ssub.s32 %s10, 2
    %s23 = sadd.s32 1, %s18
    %p24 = scmp.ge.s32.totalorder %s23, 1
    %s25 = scalar_select %p24, 0, %s23
    %s26 = sadd.s32 1, %s17
    %s27 = scalar_select %p24, %s26, %s17
    %p28 = scmp.ge.s32.totalorder %s27, 2
    %s29 = scalar_select %p28, 0, %s27
    %s30 = ssub.s32 %s17, %s29
    %p31 = scmp.eq.s32.totalorder %s30, 0
    %s33 = sadd.s32 %s32, 1
    %s34 = scalar_select %p31, %s32, %s33
    %p37 = pneg %p31
    %p38 = scmp.eq.s32.totalorder %s10, 1
    %p39 = por %p37, %p38
    %p40 = scmp.ne.s32.totalorder %s32, %s35
    %p41 = scmp.eq.s32.totalorder %s10, 0
    %p42 = por %p40, %p41
    %p43 = scmp.ne.s32.totalorder %s32, %s35
    %p44 = scmp.eq.s32.totalorder %s15, 1
    %p45 = por %p43, %p44
    %p46 = scmp.ne.s32.totalorder %s35, %s36
    %p47 = scmp.eq.s32.totalorder %s15, 0
    %p48 = por %p46, %p47
    %p49 = scmp.ne.s32.totalorder %s35, %s36
    %p50 = scmp.eq.s32.totalorder %s16, 1
    %p51 = por %p49, %p50
    %p53 = scmp.ne.s32.totalorder %s36, %s52
    %p54 = scmp.eq.s32.totalorder %s16, 0
    %p55 = por %p53, %p54
    %s56 = ssub.s32 %s17, %s29
    %s57 = ssub.s32 %s18, %s25
    %s58 = sor.u32 %s56, %s57
    %p59 = scmp.eq.s32.totalorder %s58, 0
    %s61 = sadd.s32 %s60, 1
    %s62 = scalar_select %p59, %s60, %s61
    %p65 = pneg %p59
    %p66 = scmp.eq.s32.totalorder %s10, 1
    %p67 = por %p65, %p66
    %p68 = scmp.ne.s32.totalorder %s60, %s63
    %p69 = scmp.eq.s32.totalorder %s10, 0
    %p70 = por %p68, %p69
    %p71 = scmp.ne.s32.totalorder %s60, %s63
    %p72 = scmp.eq.s32.totalorder %s15, 1
    %p73 = por %p71, %p72
    %p74 = scmp.ne.s32.totalorder %s63, %s64
    %p75 = scmp.eq.s32.totalorder %s15, 0
    %p76 = por %p74, %p75
    %p77 = scmp.ne.s32.totalorder %s63, %s64
    %p78 = scmp.eq.s32.totalorder %s16, 1
    %p79 = por %p77, %p78
    %p81 = scmp.ne.s32.totalorder %s64, %s80
    %p82 = scmp.eq.s32.totalorder %s16, 0
    %p83 = por %p81, %p82
    %s85 = sadd.s32 %s84, 1
    %p88 = scmp.eq.s32.totalorder %s10, 1
    %p89 = scmp.ne.s32.totalorder %s84, %s86
    %p90 = scmp.eq.s32.totalorder %s10, 0
    %p91 = por %p89, %p90
    %p92 = scmp.ne.s32.totalorder %s84, %s86
    %p93 = scmp.eq.s32.totalorder %s15, 1
    %p94 = por %p92, %p93
    %p95 = scmp.ne.s32.totalorder %s86, %s87
    %p96 = scmp.eq.s32.totalorder %s15, 0
    %p97 = por %p95, %p96
    %p98 = scmp.ne.s32.totalorder %s86, %s87
    %p99 = scmp.eq.s32.totalorder %s16, 1
    %p100 = por %p98, %p99
    %p102 = scmp.ne.s32.totalorder %s87, %s101
    %p103 = scmp.eq.s32.totalorder %s16, 0
    %p104 = por %p102, %p103
    %s106 = sadd.s32 %s105, 1
    %p109 = scmp.eq.s32.totalorder %s10, 1
    %p110 = scmp.ne.s32.totalorder %s105, %s107
    %p111 = scmp.eq.s32.totalorder %s10, 0
    %p112 = por %p110, %p111
    %p113 = scmp.ne.s32.totalorder %s105, %s107
    %p114 = scmp.eq.s32.totalorder %s15, 1
    %p115 = por %p113, %p114
    %p116 = scmp.ne.s32.totalorder %s107, %s108
    %p117 = scmp.eq.s32.totalorder %s15, 0
    %p118 = por %p116, %p117
    %p119 = scmp.ne.s32.totalorder %s107, %s108
    %p120 = scmp.eq.s32.totalorder %s16, 1
    %p121 = por %p119, %p120
    %p123 = scmp.ne.s32.totalorder %s108, %s122
    %p124 = scmp.eq.s32.totalorder %s16, 0
    %p125 = por %p123, %p124
    %s126 = ssub.s32 %s17, %s29
    %s127 = ssub.s32 %s18, %s25
    %s128 = sor.u32 %s126, %s127
    %p129 = scmp.eq.s32.totalorder %s128, 0
    %s131 = sadd.s32 %s130, 1
    %s132 = scalar_select %p129, %s130, %s131
    %p135 = pneg %p129
    %p136 = scmp.eq.s32.totalorder %s10, 1
    %p137 = por %p135, %p136
    %p138 = scmp.ne.s32.totalorder %s130, %s133
    %p139 = scmp.eq.s32.totalorder %s10, 0
    %p140 = por %p138, %p139
    %p141 = scmp.ne.s32.totalorder %s130, %s133
    %p142 = scmp.eq.s32.totalorder %s15, 1
    %p143 = por %p141, %p142
    %p144 = scmp.ne.s32.totalorder %s133, %s134
    %p145 = scmp.eq.s32.totalorder %s15, 0
    %p146 = por %p144, %p145
    %p147 = scmp.ne.s32.totalorder %s133, %s134
    %p148 = scmp.eq.s32.totalorder %s16, 1
    %p149 = por %p147, %p148
    %p151 = scmp.ne.s32.totalorder %s134, %s150
    %p152 = scmp.eq.s32.totalorder %s16, 0
    %p153 = por %p151, %p152
    %p154 = scmp.le.s32.totalorder 1, %s10
    %p155 = scmp.lt.s32.totalorder %s10, 3
    %p156 = pnand %p154, %p155
    %p157 = pneg %p156
    // Predicated region
    $region9: #{specto_mfcc.3} parent=5 // pred_check
      _
    $region10: #{specto_mfcc.3} parent=5 // pred_check_branch
      %159 = sbr.rel (%p156) target = $region12
    $region11: #{specto_mfcc.3} parent=5 // pred_region
      %s160 = ssub.s32 %s10, 1
      // Predicated region
      $region13: #{specto_mfcc.3} parent=11 // pred_check
        %p161 = pneg %p97
      $region14: #{specto_mfcc.3} parent=11 // pred_check_branch
        %163 = sbr.rel (%p161) target = $region16
      $region15: #{specto_mfcc.3} parent=11 // pred_region
        _
      $region16: #{specto_mfcc.3} parent=11 // pred_fallthru
        _
      // Predicated region
      $region17: #{specto_mfcc.3} parent=11 // pred_check
        %p164 = pneg %p118
      $region18: #{specto_mfcc.3} parent=11 // pred_check_branch
        %166 = sbr.rel (%p164) target = $region20
      $region19: #{specto_mfcc.3} parent=11 // pred_region
        _
      $region20: #{specto_mfcc.3} parent=11 // pred_fallthru
        _
    $region12: #{specto_mfcc.3} parent=5 // pred_fallthru
      _
    %p167 = scmp.lt.s32.totalorder %s10, 2
    // Predicated region
    $region21: #{specto_mfcc.3} parent=5 // pred_check
      %p168 = pneg %p167
    $region22: #{specto_mfcc.3} parent=5 // pred_check_branch
      %170 = sbr.rel (%p168) target = $region24
    $region23: #{specto_mfcc.3} parent=5 // pred_region
      // Predicated region
      $region25: #{specto_mfcc.3} parent=23 // pred_check
        %p171 = pneg %p42
      $region26: #{specto_mfcc.3} parent=23 // pred_check_branch
        %173 = sbr.rel (%p171) target = $region28
      $region27: #{specto_mfcc.3} parent=23 // pred_region
        %p174 = scmp.lt.s32.totalorder %s17, 1
        %s175 = scalar_select %p174, %s17, 1
        %s176 = smul.addr %s175, 8
        %s177 = scalar_lea.vmem %s0, %s176
      $region28: #{specto_mfcc.3} parent=23 // pred_fallthru
        _
      // Predicated region
      $region29: #{specto_mfcc.3} parent=23 // pred_check
        %p178 = pneg %p70
      $region30: #{specto_mfcc.3} parent=23 // pred_check_branch
        %180 = sbr.rel (%p178) target = $region32
      $region31: #{specto_mfcc.3} parent=23 // pred_region
        %p181 = scmp.lt.s32.totalorder %s17, 1
        %s182 = scalar_select %p181, %s17, 1
        %p183 = scmp.lt.s32.totalorder %s18, 0
        %s184 = scalar_select %p183, %s18, 0
        %s185 = smul.addr %s182, 128
        %s186 = sadd.s32 %s184, %s185
        %s187 = smul.addr %s186, 4
        %s188 = scalar_lea.vmem %s1, %s187
      $region32: #{specto_mfcc.3} parent=23 // pred_fallthru
        _
    $region24: #{specto_mfcc.3} parent=5 // pred_fallthru
      _
    %p189 = scmp.le.s32.totalorder 1, %s10
    %p190 = scmp.lt.s32.totalorder %s10, 3
    %p191 = pnand %p189, %p190
    %p192 = pneg %p191
    // Predicated region
    $region33: #{specto_mfcc.3} parent=5 // pred_check
      _
    $region34: #{specto_mfcc.3} parent=5 // pred_check_branch
      %194 = sbr.rel (%p191) target = $region36
    $region35: #{specto_mfcc.3} parent=5 // pred_region
      %s195 = ssub.s32 %s10, 1
      %p196 = scmp.lt.s32.totalorder %s19, 1
      %s197 = scalar_select %p196, %s19, 1
      %s198 = smul.addr %s197, 8
      %s199 = scalar_lea.vmem %s0, %s198
      %p200 = pneg %p48
      %p201 = pneg %p45
      %p202 = scmp.lt.s32.totalorder %s19, 1
      %s203 = scalar_select %p202, %s19, 1
      %p204 = scmp.lt.s32.totalorder %s20, 0
      %s205 = scalar_select %p204, %s20, 0
      %s206 = smul.addr %s203, 128
      %s207 = sadd.s32 %s205, %s206
      %s208 = smul.addr %s207, 4
      %s209 = scalar_lea.vmem %s1, %s208
      %p210 = pneg %p76
      %p211 = pneg %p73
      %p212 = pneg %p97
      %p213 = pneg %p94
      %p214 = pneg %p118
      %p215 = pneg %p115
      %p216 = pneg %p146
      %p217 = pneg %p143
      %p218 = scmp.lt.s32.totalorder %s19, 1
      %s219 = scalar_select %p218, %s19, 1
      %p220 = scmp.lt.s32.totalorder %s20, 0
      %s221 = scalar_select %p220, %s20, 0
      %s222 = smul.addr %s219, 20
      %s223 = sadd.s32 %s221, %s222
      %s224 = smul.addr %s223, 8
      %s225 = scalar_lea.vmem %s4, %s224
      %p226 = scmp.lt.s32.totalorder %s19, 1
      %s227 = scalar_select %p226, %s19, 1
      %s228 = smul.addr %s227, 8
      %s229 = scalar_lea.vmem %s0, %s228
      %p230 = scmp.lt.s32.totalorder %s19, 1
      %s231 = scalar_select %p230, %s19, 1
      %p232 = scmp.lt.s32.totalorder %s20, 0
      %s233 = scalar_select %p232, %s20, 0
      %s234 = smul.addr %s231, 128
      %s235 = sadd.s32 %s233, %s234
      %s236 = smul.addr %s235, 4
      %s237 = scalar_lea.vmem %s1, %s236
      %p238 = scmp.lt.s32.totalorder %s19, 1
      %s239 = scalar_select %p238, %s19, 1
      %p240 = scmp.lt.s32.totalorder %s20, 0
      %s241 = scalar_select %p240, %s20, 0
      %s242 = smul.addr %s239, 20
      %s243 = sadd.s32 %s241, %s242
      %s244 = smul.addr %s243, 8
      %s245 = scalar_lea.vmem %s4, %s244
      %v247 = vld [vmem:[%s2] sm:$0xff]
      %v248 = vld [vmem:[%s2 + $0x8] sm:$0xff]
      %v249 = vld [vmem:[%s2 + $0x10] sm:$0xff]
      %v250 = vld [vmem:[%s2 + $0x18] sm:$0xff]
      %v251 = vld [vmem:[%s2 + $0x20] sm:$0xff]
      %v252 = vld [vmem:[%s2 + $0x28] sm:$0xff]
      %v253 = vld [vmem:[%s2 + $0x30] sm:$0xff]
      %v254 = vld [vmem:[%s2 + $0x38] sm:$0xff]
      %v255 = vld [vmem:[%s2 + $0x40] sm:$0xff]
      %v256 = vld [vmem:[%s2 + $0x48] sm:$0xff]
      %v257 = vld [vmem:[%s2 + $0x50] sm:$0xff]
      %v258 = vld [vmem:[%s2 + $0x58] sm:$0xff]
      %v259 = vld [vmem:[%s2 + $0x60] sm:$0xff]
      %v260 = vld [vmem:[%s2 + $0x68] sm:$0xff]
      %v261 = vld [vmem:[%s2 + $0x70] sm:$0xff]
      %v262 = vld [vmem:[%s2 + $0x78] sm:$0xff]
      %v263 = vld [vmem:[%s3] sm:$0xff]
      %v264 = vld [vmem:[%s3 + $0x8] sm:$0xff]
      %v265 = vld [vmem:[%s3 + $0x10] sm:$0xff]
      %v266 = vld [vmem:[%s3 + $0x18] sm:$0xff]
      %v267 = vld [vmem:[%s3 + $0x20] sm:$0xff]
      %v268 = vld [vmem:[%s229] sm:$0xff]
      %269 = vmax.xlane.f32.xlu0 %v268
      %v270 = vpop.xlane.xlu0 %269
      %v271 = vrot.slane %v270, 4
      %v272 = vmax.f32 %v270, %v271
      %v273 = vrot.slane %v272, 2
      %v274 = vmax.f32 %v272, %v273
      %v275 = vrot.slane %v274, 1
      %v276 = vmax.f32 %v274, %v275
      %s277 = vtos %v276
      %v278 = vld [vmem:[%s237] sm:$0xf]
      %v279 = vld [vmem:[%s237 + $0x4] sm:$0xf]
      %v280 = vld [vmem:[%s237 + $0x8] sm:$0xf]
      %v281 = vld [vmem:[%s237 + $0xc] sm:$0xf]
      %v282 = vld [vmem:[%s237 + $0x10] sm:$0xf]
      %v283 = vld [vmem:[%s237 + $0x14] sm:$0xf]
      %v284 = vld [vmem:[%s237 + $0x18] sm:$0xf]
      %v285 = vld [vmem:[%s237 + $0x1c] sm:$0xf]
      %v286 = vld [vmem:[%s237 + $0x20] sm:$0xf]
      %v287 = vld [vmem:[%s237 + $0x24] sm:$0xf]
      %v288 = vld [vmem:[%s237 + $0x28] sm:$0xf]
      %v289 = vld [vmem:[%s237 + $0x2c] sm:$0xf]
      %v290 = vld [vmem:[%s237 + $0x30] sm:$0xf]
      %v291 = vld [vmem:[%s237 + $0x34] sm:$0xf]
      %v292 = vld [vmem:[%s237 + $0x38] sm:$0xf]
      %v293 = vld [vmem:[%s237 + $0x3c] sm:$0xf]
      %v294 = vld [vmem:[%s237 + $0x40] sm:$0xf]
      %v295 = vld [vmem:[%s237 + $0x44] sm:$0xf]
      %v296 = vld [vmem:[%s237 + $0x48] sm:$0xf]
      %v297 = vld [vmem:[%s237 + $0x4c] sm:$0xf]
      %v298 = vld [vmem:[%s237 + $0x50] sm:$0xf]
      %v299 = vld [vmem:[%s237 + $0x54] sm:$0xf]
      %v300 = vld [vmem:[%s237 + $0x58] sm:$0xf]
      %v301 = vld [vmem:[%s237 + $0x5c] sm:$0xf]
      %v302 = vld [vmem:[%s237 + $0x60] sm:$0xf]
      %v303 = vld [vmem:[%s237 + $0x64] sm:$0xf]
      %v304 = vld [vmem:[%s237 + $0x68] sm:$0xf]
      %v305 = vld [vmem:[%s237 + $0x6c] sm:$0xf]
      %v306 = vld [vmem:[%s237 + $0x70] sm:$0xf]
      %v307 = vld [vmem:[%s237 + $0x74] sm:$0xf]
      %v308 = vld [vmem:[%s237 + $0x78] sm:$0xf]
      %v309 = vld [vmem:[%s237 + $0x7c] sm:$0xf]
      %v326 = vunpack.c.l.b16 %v247
      %v327 = vunpack.c.h.b16 %v247
      %v328 = vunpack.c.l.b16 %v248
      %v329 = vunpack.c.h.b16 %v248
      %v330 = vunpack.c.l.b16 %v249
      %v331 = vunpack.c.h.b16 %v249
      %v332 = vunpack.c.l.b16 %v250
      %v333 = vunpack.c.h.b16 %v250
      %v334 = vunpack.c.l.b16 %v251
      %v335 = vunpack.c.h.b16 %v251
      %v336 = vunpack.c.l.b16 %v252
      %v337 = vunpack.c.h.b16 %v252
      %v338 = vunpack.c.l.b16 %v253
      %v339 = vunpack.c.h.b16 %v253
      %v340 = vunpack.c.l.b16 %v254
      %v341 = vunpack.c.h.b16 %v254
      %v342 = vunpack.c.l.b16 %v255
      %v343 = vunpack.c.h.b16 %v255
      %v344 = vunpack.c.l.b16 %v256
      %v345 = vunpack.c.h.b16 %v256
      %v346 = vunpack.c.l.b16 %v257
      %v347 = vunpack.c.h.b16 %v257
      %v348 = vunpack.c.l.b16 %v258
      %v349 = vunpack.c.h.b16 %v258
      %v350 = vunpack.c.l.b16 %v259
      %v351 = vunpack.c.h.b16 %v259
      %v352 = vunpack.c.l.b16 %v260
      %v353 = vunpack.c.h.b16 %v260
      %v354 = vunpack.c.l.b16 %v261
      %v355 = vunpack.c.h.b16 %v261
      %v356 = vunpack.c.l.b16 %v262
      %v357 = vunpack.c.h.b16 %v262
      %v358 = vpack.c.b16 %v328, %v326
      %v359 = vpack.c.b16 %v329, %v327
      %v360 = vpack.c.b16 %v332, %v330
      %v361 = vpack.c.b16 %v333, %v331
      %v362 = vpack.c.b16 %v336, %v334
      %v363 = vpack.c.b16 %v337, %v335
      %v364 = vpack.c.b16 %v340, %v338
      %v365 = vpack.c.b16 %v341, %v339
      %v366 = vpack.c.b16 %v344, %v342
      %v367 = vpack.c.b16 %v345, %v343
      %v368 = vpack.c.b16 %v348, %v346
      %v369 = vpack.c.b16 %v349, %v347
      %v370 = vpack.c.b16 %v352, %v350
      %v371 = vpack.c.b16 %v353, %v351
      %v372 = vpack.c.b16 %v356, %v354
      %v373 = vpack.c.b16 %v357, %v355
      %v422 = vunpack.c.l.b16 %v278
      %v423 = vunpack.c.l.b16 %v279
      %v424 = vunpack.c.l.b16 %v280
      %v425 = vunpack.c.l.b16 %v281
      %v426 = vunpack.c.l.b16 %v282
      %v427 = vunpack.c.l.b16 %v283
      %v428 = vunpack.c.l.b16 %v284
      %v429 = vunpack.c.l.b16 %v285
      %v430 = vunpack.c.l.b16 %v286
      %v431 = vunpack.c.l.b16 %v287
      %v432 = vunpack.c.l.b16 %v288
      %v433 = vunpack.c.l.b16 %v289
      %v434 = vunpack.c.l.b16 %v290
      %v435 = vunpack.c.l.b16 %v291
      %v436 = vunpack.c.l.b16 %v292
      %v437 = vunpack.c.l.b16 %v293
      %v438 = vunpack.c.l.b16 %v294
      %v439 = vunpack.c.l.b16 %v295
      %v440 = vunpack.c.l.b16 %v296
      %v441 = vunpack.c.l.b16 %v297
      %v442 = vunpack.c.l.b16 %v298
      %v443 = vunpack.c.l.b16 %v299
      %v444 = vunpack.c.l.b16 %v300
      %v445 = vunpack.c.l.b16 %v301
      %v446 = vunpack.c.l.b16 %v302
      %v447 = vunpack.c.l.b16 %v303
      %v448 = vunpack.c.l.b16 %v304
      %v449 = vunpack.c.l.b16 %v305
      %v450 = vunpack.c.l.b16 %v306
      %v451 = vunpack.c.l.b16 %v307
      %v452 = vunpack.c.l.b16 %v308
      %v453 = vunpack.c.l.b16 %v309
      %v454 = vpack.c.b16 %v423, %v422
      %v455 = vpack.c.b16 %v425, %v424
      %v456 = vpack.c.b16 %v427, %v426
      %v457 = vpack.c.b16 %v429, %v428
      %v458 = vpack.c.b16 %v431, %v430
      %v459 = vpack.c.b16 %v433, %v432
      %v460 = vpack.c.b16 %v435, %v434
      %v461 = vpack.c.b16 %v437, %v436
      %v462 = vpack.c.b16 %v439, %v438
      %v463 = vpack.c.b16 %v441, %v440
      %v464 = vpack.c.b16 %v443, %v442
      %v465 = vpack.c.b16 %v445, %v444
      %v466 = vpack.c.b16 %v447, %v446
      %v467 = vpack.c.b16 %v449, %v448
      %v468 = vpack.c.b16 %v451, %v450
      %v469 = vpack.c.b16 %v453, %v452
      %486 = vmatprep.subr.bf16.mxu0 0
      %487 = vmatpush1.bf16.msra.mxu0 %v461
      %488 = vmatprep.subr.bf16.mxu0 0
      %489 = vmatpush1.bf16.msra.mxu0 %v460
      %490 = vmatprep.subr.bf16.mxu0 0
      %491 = vmatpush1.bf16.msra.mxu0 %v459
      %492 = vmatprep.subr.bf16.mxu0 0
      %493 = vmatpush1.bf16.msra.mxu0 %v458
      %494 = vmatprep.subr.bf16.mxu0 0
      %495 = vmatpush1.bf16.msra.mxu0 %v457
      %496 = vmatprep.subr.bf16.mxu0 0
      %497 = vmatpush1.bf16.msra.mxu0 %v456
      %498 = vmatprep.subr.bf16.mxu0 0
      %499 = vmatpush1.bf16.msra.mxu0 %v455
      %500 = vmatprep.subr.bf16.mxu0 0
      %501 = vmatpush1.bf16.msra.mxu0 %v454
      %502 = vmatprep.subr.bf16.mxu0 0
      %503 = vmatpush2.bf16.msra.mxu0 %v469
      %504 = vmatprep.subr.bf16.mxu0 0
      %505 = vmatpush2.bf16.msra.mxu0 %v468
      %506 = vmatprep.subr.bf16.mxu0 0
      %507 = vmatpush2.bf16.msra.mxu0 %v467
      %508 = vmatprep.subr.bf16.mxu0 0
      %509 = vmatpush2.bf16.msra.mxu0 %v466
      %510 = vmatprep.subr.bf16.mxu0 0
      %511 = vmatpush2.bf16.msra.mxu0 %v465
      %512 = vmatprep.subr.bf16.mxu0 0
      %513 = vmatpush2.bf16.msra.mxu0 %v464
      %514 = vmatprep.subr.bf16.mxu0 0
      %515 = vmatpush2.bf16.msra.mxu0 %v463
      %516 = vmatprep.subr.bf16.mxu0 0
      %517 = vmatpush2.bf16.msra.mxu0 %v462
      %518 = vmatprep.mubr.bf16.mxu0 %v359
      %519 = vmatmul.mubr.bf16.gmra.mxu0 %v358
      %v520 = vpop.f32.mrf.mxu0
      %v521 = vadd.f32 0.0, %v520
      %v522 = vpop.f32.mrf.mxu0
      %v523 = vpop.f32.mrf.mxu0
      %v524 = vadd.f32 0.0, %v523
      %v525 = vpop.f32.mrf.mxu0
      %526 = vmatprep.mubr.bf16.mxu0 %v361
      %527 = vmatmul.mubr.bf16.gmra.mxu0 %v360
      %v528 = vpop.f32.mrf.mxu0
      %v529 = vadd.f32 0.0, %v528
      %v530 = vpop.f32.mrf.mxu0
      %v531 = vpop.f32.mrf.mxu0
      %v532 = vadd.f32 0.0, %v531
      %v533 = vpop.f32.mrf.mxu0
      %534 = vmatprep.mubr.bf16.mxu0 %v363
      %535 = vmatmul.mubr.bf16.gmra.mxu0 %v362
      %v536 = vpop.f32.mrf.mxu0
      %v537 = vadd.f32 0.0, %v536
      %v538 = vpop.f32.mrf.mxu0
      %v539 = vpop.f32.mrf.mxu0
      %v540 = vadd.f32 0.0, %v539
      %v541 = vpop.f32.mrf.mxu0
      %542 = vmatprep.mubr.bf16.mxu0 %v365
      %543 = vmatmul.mubr.bf16.gmra.mxu0 %v364
      %v544 = vpop.f32.mrf.mxu0
      %v545 = vadd.f32 0.0, %v544
      %v546 = vpop.f32.mrf.mxu0
      %v547 = vpop.f32.mrf.mxu0
      %v548 = vadd.f32 0.0, %v547
      %v549 = vpop.f32.mrf.mxu0
      %550 = vmatprep.mubr.bf16.mxu0 %v367
      %551 = vmatmul.mubr.bf16.gmra.mxu0 %v366
      %v552 = vpop.f32.mrf.mxu0
      %v553 = vadd.f32 0.0, %v552
      %v554 = vpop.f32.mrf.mxu0
      %v555 = vpop.f32.mrf.mxu0
      %v556 = vadd.f32 0.0, %v555
      %v557 = vpop.f32.mrf.mxu0
      %558 = vmatprep.mubr.bf16.mxu0 %v369
      %559 = vmatmul.mubr.bf16.gmra.mxu0 %v368
      %v560 = vpop.f32.mrf.mxu0
      %v561 = vadd.f32 0.0, %v560
      %v562 = vpop.f32.mrf.mxu0
      %v563 = vpop.f32.mrf.mxu0
      %v564 = vadd.f32 0.0, %v563
      %v565 = vpop.f32.mrf.mxu0
      %566 = vmatprep.mubr.bf16.mxu0 %v371
      %567 = vmatmul.mubr.bf16.gmra.mxu0 %v370
      %v568 = vpop.f32.mrf.mxu0
      %v569 = vadd.f32 0.0, %v568
      %v570 = vpop.f32.mrf.mxu0
      %v571 = vpop.f32.mrf.mxu0
      %v572 = vadd.f32 0.0, %v571
      %v573 = vpop.f32.mrf.mxu0
      %574 = vmatprep.mubr.bf16.mxu0 %v373
      %575 = vmatmul.mubr.bf16.gmra.mxu0 %v372
      %v576 = vpop.f32.mrf.mxu0
      %v577 = vadd.f32 0.0, %v576
      %v578 = vpop.f32.mrf.mxu0
      %v579 = vpop.f32.mrf.mxu0
      %v580 = vadd.f32 0.0, %v579
      %v581 = vpop.f32.mrf.mxu0
      %582 = vdwg.mxu0
      %v583 = vmax.f32 %v521, 1e-10
      %v584 = vmax.f32 %v524, 1e-10
      %v585 = vmax.f32 %v529, 1e-10
      %v586 = vmax.f32 %v532, 1e-10
      %v587 = vmax.f32 %v537, 1e-10
      %v588 = vmax.f32 %v540, 1e-10
      %v589 = vmax.f32 %v545, 1e-10
      %v590 = vmax.f32 %v548, 1e-10
      %v591 = vmax.f32 %v553, 1e-10
      %v592 = vmax.f32 %v556, 1e-10
      %v593 = vmax.f32 %v561, 1e-10
      %v594 = vmax.f32 %v564, 1e-10
      %v595 = vmax.f32 %v569, 1e-10
      %v596 = vmax.f32 %v572, 1e-10
      %v597 = vmax.f32 %v577, 1e-10
      %v598 = vmax.f32 %v580, 1e-10
      %v599 = vlog2.pop %v583
      %v600 = vmul.f32 %v599, 0.6931472
      %v601 = vlog2.pop %v584
      %v602 = vmul.f32 %v601, 0.6931472
      %v603 = vlog2.pop %v585
      %v604 = vmul.f32 %v603, 0.6931472
      %v605 = vlog2.pop %v586
      %v606 = vmul.f32 %v605, 0.6931472
      %v607 = vlog2.pop %v587
      %v608 = vmul.f32 %v607, 0.6931472
      %v609 = vlog2.pop %v588
      %v610 = vmul.f32 %v609, 0.6931472
      %v611 = vlog2.pop %v589
      %v612 = vmul.f32 %v611, 0.6931472
      %v613 = vlog2.pop %v590
      %v614 = vmul.f32 %v613, 0.6931472
      %v615 = vlog2.pop %v591
      %v616 = vmul.f32 %v615, 0.6931472
      %v617 = vlog2.pop %v592
      %v618 = vmul.f32 %v617, 0.6931472
      %v619 = vlog2.pop %v593
      %v620 = vmul.f32 %v619, 0.6931472
      %v621 = vlog2.pop %v594
      %v622 = vmul.f32 %v621, 0.6931472
      %v623 = vlog2.pop %v595
      %v624 = vmul.f32 %v623, 0.6931472
      %v625 = vlog2.pop %v596
      %v626 = vmul.f32 %v625, 0.6931472
      %v627 = vlog2.pop %v597
      %v628 = vmul.f32 %v627, 0.6931472
      %v629 = vlog2.pop %v598
      %v630 = vmul.f32 %v629, 0.6931472
      %v631 = vmul.f32 %v600, 0.4342945
      %v632 = vmul.f32 %v602, 0.4342945
      %v633 = vmul.f32 %v604, 0.4342945
      %v634 = vmul.f32 %v606, 0.4342945
      %v635 = vmul.f32 %v608, 0.4342945
      %v636 = vmul.f32 %v610, 0.4342945
      %v637 = vmul.f32 %v612, 0.4342945
      %v638 = vmul.f32 %v614, 0.4342945
      %v639 = vmul.f32 %v616, 0.4342945
      %v640 = vmul.f32 %v618, 0.4342945
      %v641 = vmul.f32 %v620, 0.4342945
      %v642 = vmul.f32 %v622, 0.4342945
      %v643 = vmul.f32 %v624, 0.4342945
      %v644 = vmul.f32 %v626, 0.4342945
      %v645 = vmul.f32 %v628, 0.4342945
      %v646 = vmul.f32 %v630, 0.4342945
      %v647 = vmul.f32 %v631, 10.0
      %v648 = vmul.f32 %v632, 10.0
      %v649 = vmul.f32 %v633, 10.0
      %v650 = vmul.f32 %v634, 10.0
      %v651 = vmul.f32 %v635, 10.0
      %v652 = vmul.f32 %v636, 10.0
      %v653 = vmul.f32 %v637, 10.0
      %v654 = vmul.f32 %v638, 10.0
      %v655 = vmul.f32 %v639, 10.0
      %v656 = vmul.f32 %v640, 10.0
      %v657 = vmul.f32 %v641, 10.0
      %v658 = vmul.f32 %v642, 10.0
      %v659 = vmul.f32 %v643, 10.0
      %v660 = vmul.f32 %v644, 10.0
      %v661 = vmul.f32 %v645, 10.0
      %v662 = vmul.f32 %v646, 10.0
      %v663 = vstv %s277
      %v664 = vmax.f32 %v647, %v663
      %v665 = vmax.f32 %v648, %v663
      %v666 = vmax.f32 %v649, %v663
      %v667 = vmax.f32 %v650, %v663
      %v668 = vmax.f32 %v651, %v663
      %v669 = vmax.f32 %v652, %v663
      %v670 = vmax.f32 %v653, %v663
      %v671 = vmax.f32 %v654, %v663
      %v672 = vmax.f32 %v655, %v663
      %v673 = vmax.f32 %v656, %v663
      %v674 = vmax.f32 %v657, %v663
      %v675 = vmax.f32 %v658, %v663
      %v676 = vmax.f32 %v659, %v663
      %v677 = vmax.f32 %v660, %v663
      %v678 = vmax.f32 %v661, %v663
      %v679 = vmax.f32 %v662, %v663
      %680 = vmatprep.subr.mxu0 0.0
      %681 = vmatpush1.msra.mxu0 %v679
      %682 = vmatprep.subr.mxu0 0.0
      %683 = vmatpush1.msra.mxu0 %v678
      %684 = vmatprep.subr.mxu0 0.0
      %685 = vmatpush1.msra.mxu0 %v677
      %686 = vmatprep.subr.mxu0 0.0
      %687 = vmatpush1.msra.mxu0 %v676
      %688 = vmatprep.subr.mxu0 0.0
      %689 = vmatpush1.msra.mxu0 %v675
      %690 = vmatprep.subr.mxu0 0.0
      %691 = vmatpush1.msra.mxu0 %v674
      %692 = vmatprep.subr.mxu0 0.0
      %693 = vmatpush1.msra.mxu0 %v673
      %694 = vmatprep.subr.mxu0 0.0
      %695 = vmatpush1.msra.mxu0 %v672
      %696 = vmatprep.subr.mxu0 0.0
      %697 = vmatpush1.msra.mxu0 %v671
      %698 = vmatprep.subr.mxu0 0.0
      %699 = vmatpush1.msra.mxu0 %v670
      %700 = vmatprep.subr.mxu0 0.0
      %701 = vmatpush1.msra.mxu0 %v669
      %702 = vmatprep.subr.mxu0 0.0
      %703 = vmatpush1.msra.mxu0 %v668
      %704 = vmatprep.subr.mxu0 0.0
      %705 = vmatpush1.msra.mxu0 %v667
      %706 = vmatprep.subr.mxu0 0.0
      %707 = vmatpush1.msra.mxu0 %v666
      %708 = vmatprep.subr.mxu0 0.0
      %709 = vmatpush1.msra.mxu0 %v665
      %710 = vmatprep.subr.mxu0 0.0
      %711 = vmatpush1.msra.mxu0 %v664
      %712 = vmatprep.subr.mxu0 0.0
      %713 = vmatpush2.msra.mxu0 0.0
      %714 = vmatprep.subr.mxu0 0.0
      %715 = vmatpush2.msra.mxu0 0.0
      %716 = vmatprep.subr.mxu0 0.0
      %717 = vmatpush2.msra.mxu0 0.0
      %718 = vmatprep.subr.mxu0 0.0
      %719 = vmatpush2.msra.mxu0 0.0
      %720 = vmatprep.subr.mxu0 0.0
      %721 = vmatpush2.msra.mxu0 0.0
      %722 = vmatprep.subr.mxu0 0.0
      %723 = vmatpush2.msra.mxu0 0.0
      %724 = vmatprep.subr.mxu0 0.0
      %725 = vmatpush2.msra.mxu0 0.0
      %726 = vmatprep.subr.mxu0 0.0
      %727 = vmatpush2.msra.mxu0 0.0
      %728 = vmatprep.subr.mxu0 0.0
      %729 = vmatpush2.msra.mxu0 0.0
      %730 = vmatprep.subr.mxu0 0.0
      %731 = vmatpush2.msra.mxu0 0.0
      %732 = vmatprep.subr.mxu0 0.0
      %733 = vmatpush2.msra.mxu0 0.0
      %734 = vmatprep.subr.mxu0 0.0
      %735 = vmatpush2.msra.mxu0 0.0
      %736 = vmatprep.subr.mxu0 0.0
      %737 = vmatpush2.msra.mxu0 0.0
      %738 = vmatprep.subr.mxu0 0.0
      %739 = vmatpush2.msra.mxu0 0.0
      %740 = vmatprep.subr.mxu0 0.0
      %741 = vmatpush2.msra.mxu0 0.0
      %742 = vmatprep.subr.mxu0 0.0
      %743 = vmatpush2.msra.mxu0 0.0
      %744 = vmatprep.mubr.f32.mxu0 0.0
      %745 = vmatmul.mubr.f32.gmra.mxu0 %v263
      %v746 = vpop.f32.mrf.mxu0
      %v747 = vadd.f32 0.0, %v746
      %v748 = vpop.f32.mrf.mxu0
      %749 = vmatprep.mubr.f32.mxu0 0.0
      %750 = vmatmul.mubr.f32.gmra.mxu0 %v264
      %v751 = vpop.f32.mrf.mxu0
      %v752 = vadd.f32 0.0, %v751
      %v753 = vpop.f32.mrf.mxu0
      %754 = vmatprep.mubr.f32.mxu0 0.0
      %755 = vmatmul.mubr.f32.gmra.mxu0 %v265
      %v756 = vpop.f32.mrf.mxu0
      %v757 = vadd.f32 0.0, %v756
      %v758 = vpop.f32.mrf.mxu0
      %759 = vmatprep.mubr.f32.mxu0 0.0
      %760 = vmatmul.mubr.f32.gmra.mxu0 %v266
      %v761 = vpop.f32.mrf.mxu0
      %v762 = vadd.f32 0.0, %v761
      %v763 = vpop.f32.mrf.mxu0
      %764 = vmatprep.mubr.f32.mxu0 0.0
      %765 = vmatmul.mubr.f32.gmra.mxu0 %v267
      %v766 = vpop.f32.mrf.mxu0
      %v767 = vadd.f32 0.0, %v766
      %v768 = vpop.f32.mrf.mxu0
      %769 = vdwg.mxu0
      %770 = vst [vmem:[%s245] sm:$0xff] %v747
      %771 = vst [vmem:[%s245 + $0x8] sm:$0xff] %v752
      %772 = vst [vmem:[%s245 + $0x10] sm:$0xff] %v757
      %773 = vst [vmem:[%s245 + $0x18] sm:$0xff] %v762
      %774 = vst [vmem:[%s245 + $0x20] sm:$0xff] %v767
      %s775 = scalar_lea.vmem %s237, 128
      %v776 = vld [vmem:[%s775] sm:$0xf]
      %v777 = vld [vmem:[%s775 + $0x4] sm:$0xf]
      %v778 = vld [vmem:[%s775 + $0x8] sm:$0xf]
      %v779 = vld [vmem:[%s775 + $0xc] sm:$0xf]
      %v780 = vld [vmem:[%s775 + $0x10] sm:$0xf]
      %v781 = vld [vmem:[%s775 + $0x14] sm:$0xf]
      %v782 = vld [vmem:[%s775 + $0x18] sm:$0xf]
      %v783 = vld [vmem:[%s775 + $0x1c] sm:$0xf]
      %v784 = vld [vmem:[%s775 + $0x20] sm:$0xf]
      %v785 = vld [vmem:[%s775 + $0x24] sm:$0xf]
      %v786 = vld [vmem:[%s775 + $0x28] sm:$0xf]
      %v787 = vld [vmem:[%s775 + $0x2c] sm:$0xf]
      %v788 = vld [vmem:[%s775 + $0x30] sm:$0xf]
      %v789 = vld [vmem:[%s775 + $0x34] sm:$0xf]
      %v790 = vld [vmem:[%s775 + $0x38] sm:$0xf]
      %v791 = vld [vmem:[%s775 + $0x3c] sm:$0xf]
      %v792 = vld [vmem:[%s775 + $0x40] sm:$0xf]
      %v793 = vld [vmem:[%s775 + $0x44] sm:$0xf]
      %v794 = vld [vmem:[%s775 + $0x48] sm:$0xf]
      %v795 = vld [vmem:[%s775 + $0x4c] sm:$0xf]
      %v796 = vld [vmem:[%s775 + $0x50] sm:$0xf]
      %v797 = vld [vmem:[%s775 + $0x54] sm:$0xf]
      %v798 = vld [vmem:[%s775 + $0x58] sm:$0xf]
      %v799 = vld [vmem:[%s775 + $0x5c] sm:$0xf]
      %v800 = vld [vmem:[%s775 + $0x60] sm:$0xf]
      %v801 = vld [vmem:[%s775 + $0x64] sm:$0xf]
      %v802 = vld [vmem:[%s775 + $0x68] sm:$0xf]
      %v803 = vld [vmem:[%s775 + $0x6c] sm:$0xf]
      %v804 = vld [vmem:[%s775 + $0x70] sm:$0xf]
      %v805 = vld [vmem:[%s775 + $0x74] sm:$0xf]
      %v806 = vld [vmem:[%s775 + $0x78] sm:$0xf]
      %v807 = vld [vmem:[%s775 + $0x7c] sm:$0xf]
      %v840 = vunpack.c.l.b16 %v776
      %v841 = vunpack.c.l.b16 %v777
      %v842 = vunpack.c.l.b16 %v778
      %v843 = vunpack.c.l.b16 %v779
      %v844 = vunpack.c.l.b16 %v780
      %v845 = vunpack.c.l.b16 %v781
      %v846 = vunpack.c.l.b16 %v782
      %v847 = vunpack.c.l.b16 %v783
      %v848 = vunpack.c.l.b16 %v784
      %v849 = vunpack.c.l.b16 %v785
      %v850 = vunpack.c.l.b16 %v786
      %v851 = vunpack.c.l.b16 %v787
      %v852 = vunpack.c.l.b16 %v788
      %v853 = vunpack.c.l.b16 %v789
      %v854 = vunpack.c.l.b16 %v790
      %v855 = vunpack.c.l.b16 %v791
      %v856 = vunpack.c.l.b16 %v792
      %v857 = vunpack.c.l.b16 %v793
      %v858 = vunpack.c.l.b16 %v794
      %v859 = vunpack.c.l.b16 %v795
      %v860 = vunpack.c.l.b16 %v796
      %v861 = vunpack.c.l.b16 %v797
      %v862 = vunpack.c.l.b16 %v798
      %v863 = vunpack.c.l.b16 %v799
      %v864 = vunpack.c.l.b16 %v800
      %v865 = vunpack.c.l.b16 %v801
      %v866 = vunpack.c.l.b16 %v802
      %v867 = vunpack.c.l.b16 %v803
      %v868 = vunpack.c.l.b16 %v804
      %v869 = vunpack.c.l.b16 %v805
      %v870 = vunpack.c.l.b16 %v806
      %v871 = vunpack.c.l.b16 %v807
      %v872 = vpack.c.b16 %v841, %v840
      %v873 = vpack.c.b16 %v843, %v842
      %v874 = vpack.c.b16 %v845, %v844
      %v875 = vpack.c.b16 %v847, %v846
      %v876 = vpack.c.b16 %v849, %v848
      %v877 = vpack.c.b16 %v851, %v850
      %v878 = vpack.c.b16 %v853, %v852
      %v879 = vpack.c.b16 %v855, %v854
      %v880 = vpack.c.b16 %v857, %v856
      %v881 = vpack.c.b16 %v859, %v858
      %v882 = vpack.c.b16 %v861, %v860
      %v883 = vpack.c.b16 %v863, %v862
      %v884 = vpack.c.b16 %v865, %v864
      %v885 = vpack.c.b16 %v867, %v866
      %v886 = vpack.c.b16 %v869, %v868
      %v887 = vpack.c.b16 %v871, %v870
      %904 = vmatprep.subr.bf16.mxu0 0
      %905 = vmatpush1.bf16.msra.mxu0 %v879
      %906 = vmatprep.subr.bf16.mxu0 0
      %907 = vmatpush1.bf16.msra.mxu0 %v878
      %908 = vmatprep.subr.bf16.mxu0 0
      %909 = vmatpush1.bf16.msra.mxu0 %v877
      %910 = vmatprep.subr.bf16.mxu0 0
      %911 = vmatpush1.bf16.msra.mxu0 %v876
      %912 = vmatprep.subr.bf16.mxu0 0
      %913 = vmatpush1.bf16.msra.mxu0 %v875
      %914 = vmatprep.subr.bf16.mxu0 0
      %915 = vmatpush1.bf16.msra.mxu0 %v874
      %916 = vmatprep.subr.bf16.mxu0 0
      %917 = vmatpush1.bf16.msra.mxu0 %v873
      %918 = vmatprep.subr.bf16.mxu0 0
      %919 = vmatpush1.bf16.msra.mxu0 %v872
      %920 = vmatprep.subr.bf16.mxu0 0
      %921 = vmatpush2.bf16.msra.mxu0 %v887
      %922 = vmatprep.subr.bf16.mxu0 0
      %923 = vmatpush2.bf16.msra.mxu0 %v886
      %924 = vmatprep.subr.bf16.mxu0 0
      %925 = vmatpush2.bf16.msra.mxu0 %v885
      %926 = vmatprep.subr.bf16.mxu0 0
      %927 = vmatpush2.bf16.msra.mxu0 %v884
      %928 = vmatprep.subr.bf16.mxu0 0
      %929 = vmatpush2.bf16.msra.mxu0 %v883
      %930 = vmatprep.subr.bf16.mxu0 0
      %931 = vmatpush2.bf16.msra.mxu0 %v882
      %932 = vmatprep.subr.bf16.mxu0 0
      %933 = vmatpush2.bf16.msra.mxu0 %v881
      %934 = vmatprep.subr.bf16.mxu0 0
      %935 = vmatpush2.bf16.msra.mxu0 %v880
      %936 = vmatprep.mubr.bf16.mxu0 %v359
      %937 = vmatmul.mubr.bf16.gmra.mxu0 %v358
      %v938 = vpop.f32.mrf.mxu0
      %v939 = vadd.f32 0.0, %v938
      %v940 = vpop.f32.mrf.mxu0
      %v941 = vpop.f32.mrf.mxu0
      %v942 = vadd.f32 0.0, %v941
      %v943 = vpop.f32.mrf.mxu0
      %944 = vmatprep.mubr.bf16.mxu0 %v361
      %945 = vmatmul.mubr.bf16.gmra.mxu0 %v360
      %v946 = vpop.f32.mrf.mxu0
      %v947 = vadd.f32 0.0, %v946
      %v948 = vpop.f32.mrf.mxu0
      %v949 = vpop.f32.mrf.mxu0
      %v950 = vadd.f32 0.0, %v949
      %v951 = vpop.f32.mrf.mxu0
      %952 = vmatprep.mubr.bf16.mxu0 %v363
      %953 = vmatmul.mubr.bf16.gmra.mxu0 %v362
      %v954 = vpop.f32.mrf.mxu0
      %v955 = vadd.f32 0.0, %v954
      %v956 = vpop.f32.mrf.mxu0
      %v957 = vpop.f32.mrf.mxu0
      %v958 = vadd.f32 0.0, %v957
      %v959 = vpop.f32.mrf.mxu0
      %960 = vmatprep.mubr.bf16.mxu0 %v365
      %961 = vmatmul.mubr.bf16.gmra.mxu0 %v364
      %v962 = vpop.f32.mrf.mxu0
      %v963 = vadd.f32 0.0, %v962
      %v964 = vpop.f32.mrf.mxu0
      %v965 = vpop.f32.mrf.mxu0
      %v966 = vadd.f32 0.0, %v965
      %v967 = vpop.f32.mrf.mxu0
      %968 = vmatprep.mubr.bf16.mxu0 %v367
      %969 = vmatmul.mubr.bf16.gmra.mxu0 %v366
      %v970 = vpop.f32.mrf.mxu0
      %v971 = vadd.f32 0.0, %v970
      %v972 = vpop.f32.mrf.mxu0
      %v973 = vpop.f32.mrf.mxu0
      %v974 = vadd.f32 0.0, %v973
      %v975 = vpop.f32.mrf.mxu0
      %976 = vmatprep.mubr.bf16.mxu0 %v369
      %977 = vmatmul.mubr.bf16.gmra.mxu0 %v368
      %v978 = vpop.f32.mrf.mxu0
      %v979 = vadd.f32 0.0, %v978
      %v980 = vpop.f32.mrf.mxu0
      %v981 = vpop.f32.mrf.mxu0
      %v982 = vadd.f32 0.0, %v981
      %v983 = vpop.f32.mrf.mxu0
      %984 = vmatprep.mubr.bf16.mxu0 %v371
      %985 = vmatmul.mubr.bf16.gmra.mxu0 %v370
      %v986 = vpop.f32.mrf.mxu0
      %v987 = vadd.f32 0.0, %v986
      %v988 = vpop.f32.mrf.mxu0
      %v989 = vpop.f32.mrf.mxu0
      %v990 = vadd.f32 0.0, %v989
      %v991 = vpop.f32.mrf.mxu0
      %992 = vmatprep.mubr.bf16.mxu0 %v373
      %993 = vmatmul.mubr.bf16.gmra.mxu0 %v372
      %v994 = vpop.f32.mrf.mxu0
      %v995 = vadd.f32 0.0, %v994
      %v996 = vpop.f32.mrf.mxu0
      %v997 = vpop.f32.mrf.mxu0
      %v998 = vadd.f32 0.0, %v997
      %v999 = vpop.f32.mrf.mxu0
      %1000 = vdwg.mxu0
      %v1001 = vmax.f32 %v939, 1e-10
      %v1002 = vmax.f32 %v942, 1e-10
      %v1003 = vmax.f32 %v947, 1e-10
      %v1004 = vmax.f32 %v950, 1e-10
      %v1005 = vmax.f32 %v955, 1e-10
      %v1006 = vmax.f32 %v958, 1e-10
      %v1007 = vmax.f32 %v963, 1e-10
      %v1008 = vmax.f32 %v966, 1e-10
      %v1009 = vmax.f32 %v971, 1e-10
      %v1010 = vmax.f32 %v974, 1e-10
      %v1011 = vmax.f32 %v979, 1e-10
      %v1012 = vmax.f32 %v982, 1e-10
      %v1013 = vmax.f32 %v987, 1e-10
      %v1014 = vmax.f32 %v990, 1e-10
      %v1015 = vmax.f32 %v995, 1e-10
      %v1016 = vmax.f32 %v998, 1e-10
      %v1017 = vlog2.pop %v1001
      %v1018 = vmul.f32 %v1017, 0.6931472
      %v1019 = vlog2.pop %v1002
      %v1020 = vmul.f32 %v1019, 0.6931472
      %v1021 = vlog2.pop %v1003
      %v1022 = vmul.f32 %v1021, 0.6931472
      %v1023 = vlog2.pop %v1004
      %v1024 = vmul.f32 %v1023, 0.6931472
      %v1025 = vlog2.pop %v1005
      %v1026 = vmul.f32 %v1025, 0.6931472
      %v1027 = vlog2.pop %v1006
      %v1028 = vmul.f32 %v1027, 0.6931472
      %v1029 = vlog2.pop %v1007
      %v1030 = vmul.f32 %v1029, 0.6931472
      %v1031 = vlog2.pop %v1008
      %v1032 = vmul.f32 %v1031, 0.6931472
      %v1033 = vlog2.pop %v1009
      %v1034 = vmul.f32 %v1033, 0.6931472
      %v1035 = vlog2.pop %v1010
      %v1036 = vmul.f32 %v1035, 0.6931472
      %v1037 = vlog2.pop %v1011
      %v1038 = vmul.f32 %v1037, 0.6931472
      %v1039 = vlog2.pop %v1012
      %v1040 = vmul.f32 %v1039, 0.6931472
      %v1041 = vlog2.pop %v1013
      %v1042 = vmul.f32 %v1041, 0.6931472
      %v1043 = vlog2.pop %v1014
      %v1044 = vmul.f32 %v1043, 0.6931472
      %v1045 = vlog2.pop %v1015
      %v1046 = vmul.f32 %v1045, 0.6931472
      %v1047 = vlog2.pop %v1016
      %v1048 = vmul.f32 %v1047, 0.6931472
      %v1049 = vmul.f32 %v1018, 0.4342945
      %v1050 = vmul.f32 %v1020, 0.4342945
      %v1051 = vmul.f32 %v1022, 0.4342945
      %v1052 = vmul.f32 %v1024, 0.4342945
      %v1053 = vmul.f32 %v1026, 0.4342945
      %v1054 = vmul.f32 %v1028, 0.4342945
      %v1055 = vmul.f32 %v1030, 0.4342945
      %v1056 = vmul.f32 %v1032, 0.4342945
      %v1057 = vmul.f32 %v1034, 0.4342945
      %v1058 = vmul.f32 %v1036, 0.4342945
      %v1059 = vmul.f32 %v1038, 0.4342945
      %v1060 = vmul.f32 %v1040, 0.4342945
      %v1061 = vmul.f32 %v1042, 0.4342945
      %v1062 = vmul.f32 %v1044, 0.4342945
      %v1063 = vmul.f32 %v1046, 0.4342945
      %v1064 = vmul.f32 %v1048, 0.4342945
      %v1065 = vmul.f32 %v1049, 10.0
      %v1066 = vmul.f32 %v1050, 10.0
      %v1067 = vmul.f32 %v1051, 10.0
      %v1068 = vmul.f32 %v1052, 10.0
      %v1069 = vmul.f32 %v1053, 10.0
      %v1070 = vmul.f32 %v1054, 10.0
      %v1071 = vmul.f32 %v1055, 10.0
      %v1072 = vmul.f32 %v1056, 10.0
      %v1073 = vmul.f32 %v1057, 10.0
      %v1074 = vmul.f32 %v1058, 10.0
      %v1075 = vmul.f32 %v1059, 10.0
      %v1076 = vmul.f32 %v1060, 10.0
      %v1077 = vmul.f32 %v1061, 10.0
      %v1078 = vmul.f32 %v1062, 10.0
      %v1079 = vmul.f32 %v1063, 10.0
      %v1080 = vmul.f32 %v1064, 10.0
      %v1081 = vmax.f32 %v1065, %v663
      %v1082 = vmax.f32 %v1066, %v663
      %v1083 = vmax.f32 %v1067, %v663
      %v1084 = vmax.f32 %v1068, %v663
      %v1085 = vmax.f32 %v1069, %v663
      %v1086 = vmax.f32 %v1070, %v663
      %v1087 = vmax.f32 %v1071, %v663
      %v1088 = vmax.f32 %v1072, %v663
      %v1089 = vmax.f32 %v1073, %v663
      %v1090 = vmax.f32 %v1074, %v663
      %v1091 = vmax.f32 %v1075, %v663
      %v1092 = vmax.f32 %v1076, %v663
      %v1093 = vmax.f32 %v1077, %v663
      %v1094 = vmax.f32 %v1078, %v663
      %v1095 = vmax.f32 %v1079, %v663
      %v1096 = vmax.f32 %v1080, %v663
      %1097 = vmatprep.subr.mxu0 0.0
      %1098 = vmatpush1.msra.mxu0 %v1096
      %1099 = vmatprep.subr.mxu0 0.0
      %1100 = vmatpush1.msra.mxu0 %v1095
      %1101 = vmatprep.subr.mxu0 0.0
      %1102 = vmatpush1.msra.mxu0 %v1094
      %1103 = vmatprep.subr.mxu0 0.0
      %1104 = vmatpush1.msra.mxu0 %v1093
      %1105 = vmatprep.subr.mxu0 0.0
      %1106 = vmatpush1.msra.mxu0 %v1092
      %1107 = vmatprep.subr.mxu0 0.0
      %1108 = vmatpush1.msra.mxu0 %v1091
      %1109 = vmatprep.subr.mxu0 0.0
      %1110 = vmatpush1.msra.mxu0 %v1090
      %1111 = vmatprep.subr.mxu0 0.0
      %1112 = vmatpush1.msra.mxu0 %v1089
      %1113 = vmatprep.subr.mxu0 0.0
      %1114 = vmatpush1.msra.mxu0 %v1088
      %1115 = vmatprep.subr.mxu0 0.0
      %1116 = vmatpush1.msra.mxu0 %v1087
      %1117 = vmatprep.subr.mxu0 0.0
      %1118 = vmatpush1.msra.mxu0 %v1086
      %1119 = vmatprep.subr.mxu0 0.0
      %1120 = vmatpush1.msra.mxu0 %v1085
      %1121 = vmatprep.subr.mxu0 0.0
      %1122 = vmatpush1.msra.mxu0 %v1084
      %1123 = vmatprep.subr.mxu0 0.0
      %1124 = vmatpush1.msra.mxu0 %v1083
      %1125 = vmatprep.subr.mxu0 0.0
      %1126 = vmatpush1.msra.mxu0 %v1082
      %1127 = vmatprep.subr.mxu0 0.0
      %1128 = vmatpush1.msra.mxu0 %v1081
      %1129 = vmatprep.subr.mxu0 0.0
      %1130 = vmatpush2.msra.mxu0 0.0
      %1131 = vmatprep.subr.mxu0 0.0
      %1132 = vmatpush2.msra.mxu0 0.0
      %1133 = vmatprep.subr.mxu0 0.0
      %1134 = vmatpush2.msra.mxu0 0.0
      %1135 = vmatprep.subr.mxu0 0.0
      %1136 = vmatpush2.msra.mxu0 0.0
      %1137 = vmatprep.subr.mxu0 0.0
      %1138 = vmatpush2.msra.mxu0 0.0
      %1139 = vmatprep.subr.mxu0 0.0
      %1140 = vmatpush2.msra.mxu0 0.0
      %1141 = vmatprep.subr.mxu0 0.0
      %1142 = vmatpush2.msra.mxu0 0.0
      %1143 = vmatprep.subr.mxu0 0.0
      %1144 = vmatpush2.msra.mxu0 0.0
      %1145 = vmatprep.subr.mxu0 0.0
      %1146 = vmatpush2.msra.mxu0 0.0
      %1147 = vmatprep.subr.mxu0 0.0
      %1148 = vmatpush2.msra.mxu0 0.0
      %1149 = vmatprep.subr.mxu0 0.0
      %1150 = vmatpush2.msra.mxu0 0.0
      %1151 = vmatprep.subr.mxu0 0.0
      %1152 = vmatpush2.msra.mxu0 0.0
      %1153 = vmatprep.subr.mxu0 0.0
      %1154 = vmatpush2.msra.mxu0 0.0
      %1155 = vmatprep.subr.mxu0 0.0
      %1156 = vmatpush2.msra.mxu0 0.0
      %1157 = vmatprep.subr.mxu0 0.0
      %1158 = vmatpush2.msra.mxu0 0.0
      %1159 = vmatprep.subr.mxu0 0.0
      %1160 = vmatpush2.msra.mxu0 0.0
      %1161 = vmatprep.mubr.f32.mxu0 0.0
      %1162 = vmatmul.mubr.f32.gmra.mxu0 %v263
      %v1163 = vpop.f32.mrf.mxu0
      %v1164 = vadd.f32 0.0, %v1163
      %v1165 = vpop.f32.mrf.mxu0
      %1166 = vmatprep.mubr.f32.mxu0 0.0
      %1167 = vmatmul.mubr.f32.gmra.mxu0 %v264
      %v1168 = vpop.f32.mrf.mxu0
      %v1169 = vadd.f32 0.0, %v1168
      %v1170 = vpop.f32.mrf.mxu0
      %1171 = vmatprep.mubr.f32.mxu0 0.0
      %1172 = vmatmul.mubr.f32.gmra.mxu0 %v265
      %v1173 = vpop.f32.mrf.mxu0
      %v1174 = vadd.f32 0.0, %v1173
      %v1175 = vpop.f32.mrf.mxu0
      %1176 = vmatprep.mubr.f32.mxu0 0.0
      %1177 = vmatmul.mubr.f32.gmra.mxu0 %v266
      %v1178 = vpop.f32.mrf.mxu0
      %v1179 = vadd.f32 0.0, %v1178
      %v1180 = vpop.f32.mrf.mxu0
      %1181 = vmatprep.mubr.f32.mxu0 0.0
      %1182 = vmatmul.mubr.f32.gmra.mxu0 %v267
      %v1183 = vpop.f32.mrf.mxu0
      %v1184 = vadd.f32 0.0, %v1183
      %v1185 = vpop.f32.mrf.mxu0
      %1186 = vdwg.mxu0
      %s1187 = scalar_lea.vmem %s245, 40
      %1188 = vst [vmem:[%s1187] sm:$0xff] %v1164
      %1189 = vst [vmem:[%s1187 + $0x8] sm:$0xff] %v1169
      %1190 = vst [vmem:[%s1187 + $0x10] sm:$0xff] %v1174
      %1191 = vst [vmem:[%s1187 + $0x18] sm:$0xff] %v1179
      %1192 = vst [vmem:[%s1187 + $0x20] sm:$0xff] %v1184
      %s1193 = scalar_lea.vmem %s237, 256
      %v1194 = vld [vmem:[%s1193] sm:$0xf]
      %v1195 = vld [vmem:[%s1193 + $0x4] sm:$0xf]
      %v1196 = vld [vmem:[%s1193 + $0x8] sm:$0xf]
      %v1197 = vld [vmem:[%s1193 + $0xc] sm:$0xf]
      %v1198 = vld [vmem:[%s1193 + $0x10] sm:$0xf]
      %v1199 = vld [vmem:[%s1193 + $0x14] sm:$0xf]
      %v1200 = vld [vmem:[%s1193 + $0x18] sm:$0xf]
      %v1201 = vld [vmem:[%s1193 + $0x1c] sm:$0xf]
      %v1202 = vld [vmem:[%s1193 + $0x20] sm:$0xf]
      %v1203 = vld [vmem:[%s1193 + $0x24] sm:$0xf]
      %v1204 = vld [vmem:[%s1193 + $0x28] sm:$0xf]
      %v1205 = vld [vmem:[%s1193 + $0x2c] sm:$0xf]
      %v1206 = vld [vmem:[%s1193 + $0x30] sm:$0xf]
      %v1207 = vld [vmem:[%s1193 + $0x34] sm:$0xf]
      %v1208 = vld [vmem:[%s1193 + $0x38] sm:$0xf]
      %v1209 = vld [vmem:[%s1193 + $0x3c] sm:$0xf]
      %v1210 = vld [vmem:[%s1193 + $0x40] sm:$0xf]
      %v1211 = vld [vmem:[%s1193 + $0x44] sm:$0xf]
      %v1212 = vld [vmem:[%s1193 + $0x48] sm:$0xf]
      %v1213 = vld [vmem:[%s1193 + $0x4c] sm:$0xf]
      %v1214 = vld [vmem:[%s1193 + $0x50] sm:$0xf]
      %v1215 = vld [vmem:[%s1193 + $0x54] sm:$0xf]
      %v1216 = vld [vmem:[%s1193 + $0x58] sm:$0xf]
      %v1217 = vld [vmem:[%s1193 + $0x5c] sm:$0xf]
      %v1218 = vld [vmem:[%s1193 + $0x60] sm:$0xf]
      %v1219 = vld [vmem:[%s1193 + $0x64] sm:$0xf]
      %v1220 = vld [vmem:[%s1193 + $0x68] sm:$0xf]
      %v1221 = vld [vmem:[%s1193 + $0x6c] sm:$0xf]
      %v1222 = vld [vmem:[%s1193 + $0x70] sm:$0xf]
      %v1223 = vld [vmem:[%s1193 + $0x74] sm:$0xf]
      %v1224 = vld [vmem:[%s1193 + $0x78] sm:$0xf]
      %v1225 = vld [vmem:[%s1193 + $0x7c] sm:$0xf]
      %v1258 = vunpack.c.l.b16 %v1194
      %v1259 = vunpack.c.l.b16 %v1195
      %v1260 = vunpack.c.l.b16 %v1196
      %v1261 = vunpack.c.l.b16 %v1197
      %v1262 = vunpack.c.l.b16 %v1198
      %v1263 = vunpack.c.l.b16 %v1199
      %v1264 = vunpack.c.l.b16 %v1200
      %v1265 = vunpack.c.l.b16 %v1201
      %v1266 = vunpack.c.l.b16 %v1202
      %v1267 = vunpack.c.l.b16 %v1203
      %v1268 = vunpack.c.l.b16 %v1204
      %v1269 = vunpack.c.l.b16 %v1205
      %v1270 = vunpack.c.l.b16 %v1206
      %v1271 = vunpack.c.l.b16 %v1207
      %v1272 = vunpack.c.l.b16 %v1208
      %v1273 = vunpack.c.l.b16 %v1209
      %v1274 = vunpack.c.l.b16 %v1210
      %v1275 = vunpack.c.l.b16 %v1211
      %v1276 = vunpack.c.l.b16 %v1212
      %v1277 = vunpack.c.l.b16 %v1213
      %v1278 = vunpack.c.l.b16 %v1214
      %v1279 = vunpack.c.l.b16 %v1215
      %v1280 = vunpack.c.l.b16 %v1216
      %v1281 = vunpack.c.l.b16 %v1217
      %v1282 = vunpack.c.l.b16 %v1218
      %v1283 = vunpack.c.l.b16 %v1219
      %v1284 = vunpack.c.l.b16 %v1220
      %v1285 = vunpack.c.l.b16 %v1221
      %v1286 = vunpack.c.l.b16 %v1222
      %v1287 = vunpack.c.l.b16 %v1223
      %v1288 = vunpack.c.l.b16 %v1224
      %v1289 = vunpack.c.l.b16 %v1225
      %v1290 = vpack.c.b16 %v1259, %v1258
      %v1291 = vpack.c.b16 %v1261, %v1260
      %v1292 = vpack.c.b16 %v1263, %v1262
      %v1293 = vpack.c.b16 %v1265, %v1264
      %v1294 = vpack.c.b16 %v1267, %v1266
      %v1295 = vpack.c.b16 %v1269, %v1268
      %v1296 = vpack.c.b16 %v1271, %v1270
      %v1297 = vpack.c.b16 %v1273, %v1272
      %v1298 = vpack.c.b16 %v1275, %v1274
      %v1299 = vpack.c.b16 %v1277, %v1276
      %v1300 = vpack.c.b16 %v1279, %v1278
      %v1301 = vpack.c.b16 %v1281, %v1280
      %v1302 = vpack.c.b16 %v1283, %v1282
      %v1303 = vpack.c.b16 %v1285, %v1284
      %v1304 = vpack.c.b16 %v1287, %v1286
      %v1305 = vpack.c.b16 %v1289, %v1288
      %1322 = vmatprep.subr.bf16.mxu0 0
      %1323 = vmatpush1.bf16.msra.mxu0 %v1297
      %1324 = vmatprep.subr.bf16.mxu0 0
      %1325 = vmatpush1.bf16.msra.mxu0 %v1296
      %1326 = vmatprep.subr.bf16.mxu0 0
      %1327 = vmatpush1.bf16.msra.mxu0 %v1295
      %1328 = vmatprep.subr.bf16.mxu0 0
      %1329 = vmatpush1.bf16.msra.mxu0 %v1294
      %1330 = vmatprep.subr.bf16.mxu0 0
      %1331 = vmatpush1.bf16.msra.mxu0 %v1293
      %1332 = vmatprep.subr.bf16.mxu0 0
      %1333 = vmatpush1.bf16.msra.mxu0 %v1292
      %1334 = vmatprep.subr.bf16.mxu0 0
      %1335 = vmatpush1.bf16.msra.mxu0 %v1291
      %1336 = vmatprep.subr.bf16.mxu0 0
      %1337 = vmatpush1.bf16.msra.mxu0 %v1290
      %1338 = vmatprep.subr.bf16.mxu0 0
      %1339 = vmatpush2.bf16.msra.mxu0 %v1305
      %1340 = vmatprep.subr.bf16.mxu0 0
      %1341 = vmatpush2.bf16.msra.mxu0 %v1304
      %1342 = vmatprep.subr.bf16.mxu0 0
      %1343 = vmatpush2.bf16.msra.mxu0 %v1303
      %1344 = vmatprep.subr.bf16.mxu0 0
      %1345 = vmatpush2.bf16.msra.mxu0 %v1302
      %1346 = vmatprep.subr.bf16.mxu0 0
      %1347 = vmatpush2.bf16.msra.mxu0 %v1301
      %1348 = vmatprep.subr.bf16.mxu0 0
      %1349 = vmatpush2.bf16.msra.mxu0 %v1300
      %1350 = vmatprep.subr.bf16.mxu0 0
      %1351 = vmatpush2.bf16.msra.mxu0 %v1299
      %1352 = vmatprep.subr.bf16.mxu0 0
      %1353 = vmatpush2.bf16.msra.mxu0 %v1298
      %1354 = vmatprep.mubr.bf16.mxu0 %v359
      %1355 = vmatmul.mubr.bf16.gmra.mxu0 %v358
      %v1356 = vpop.f32.mrf.mxu0
      %v1357 = vadd.f32 0.0, %v1356
      %v1358 = vpop.f32.mrf.mxu0
      %v1359 = vpop.f32.mrf.mxu0
      %v1360 = vadd.f32 0.0, %v1359
      %v1361 = vpop.f32.mrf.mxu0
      %1362 = vmatprep.mubr.bf16.mxu0 %v361
      %1363 = vmatmul.mubr.bf16.gmra.mxu0 %v360
      %v1364 = vpop.f32.mrf.mxu0
      %v1365 = vadd.f32 0.0, %v1364
      %v1366 = vpop.f32.mrf.mxu0
      %v1367 = vpop.f32.mrf.mxu0
      %v1368 = vadd.f32 0.0, %v1367
      %v1369 = vpop.f32.mrf.mxu0
      %1370 = vmatprep.mubr.bf16.mxu0 %v363
      %1371 = vmatmul.mubr.bf16.gmra.mxu0 %v362
      %v1372 = vpop.f32.mrf.mxu0
      %v1373 = vadd.f32 0.0, %v1372
      %v1374 = vpop.f32.mrf.mxu0
      %v1375 = vpop.f32.mrf.mxu0
      %v1376 = vadd.f32 0.0, %v1375
      %v1377 = vpop.f32.mrf.mxu0
      %1378 = vmatprep.mubr.bf16.mxu0 %v365
      %1379 = vmatmul.mubr.bf16.gmra.mxu0 %v364
      %v1380 = vpop.f32.mrf.mxu0
      %v1381 = vadd.f32 0.0, %v1380
      %v1382 = vpop.f32.mrf.mxu0
      %v1383 = vpop.f32.mrf.mxu0
      %v1384 = vadd.f32 0.0, %v1383
      %v1385 = vpop.f32.mrf.mxu0
      %1386 = vmatprep.mubr.bf16.mxu0 %v367
      %1387 = vmatmul.mubr.bf16.gmra.mxu0 %v366
      %v1388 = vpop.f32.mrf.mxu0
      %v1389 = vadd.f32 0.0, %v1388
      %v1390 = vpop.f32.mrf.mxu0
      %v1391 = vpop.f32.mrf.mxu0
      %v1392 = vadd.f32 0.0, %v1391
      %v1393 = vpop.f32.mrf.mxu0
      %1394 = vmatprep.mubr.bf16.mxu0 %v369
      %1395 = vmatmul.mubr.bf16.gmra.mxu0 %v368
      %v1396 = vpop.f32.mrf.mxu0
      %v1397 = vadd.f32 0.0, %v1396
      %v1398 = vpop.f32.mrf.mxu0
      %v1399 = vpop.f32.mrf.mxu0
      %v1400 = vadd.f32 0.0, %v1399
      %v1401 = vpop.f32.mrf.mxu0
      %1402 = vmatprep.mubr.bf16.mxu0 %v371
      %1403 = vmatmul.mubr.bf16.gmra.mxu0 %v370
      %v1404 = vpop.f32.mrf.mxu0
      %v1405 = vadd.f32 0.0, %v1404
      %v1406 = vpop.f32.mrf.mxu0
      %v1407 = vpop.f32.mrf.mxu0
      %v1408 = vadd.f32 0.0, %v1407
      %v1409 = vpop.f32.mrf.mxu0
      %1410 = vmatprep.mubr.bf16.mxu0 %v373
      %1411 = vmatmul.mubr.bf16.gmra.mxu0 %v372
      %v1412 = vpop.f32.mrf.mxu0
      %v1413 = vadd.f32 0.0, %v1412
      %v1414 = vpop.f32.mrf.mxu0
      %v1415 = vpop.f32.mrf.mxu0
      %v1416 = vadd.f32 0.0, %v1415
      %v1417 = vpop.f32.mrf.mxu0
      %1418 = vdwg.mxu0
      %v1419 = vmax.f32 %v1357, 1e-10
      %v1420 = vmax.f32 %v1360, 1e-10
      %v1421 = vmax.f32 %v1365, 1e-10
      %v1422 = vmax.f32 %v1368, 1e-10
      %v1423 = vmax.f32 %v1373, 1e-10
      %v1424 = vmax.f32 %v1376, 1e-10
      %v1425 = vmax.f32 %v1381, 1e-10
      %v1426 = vmax.f32 %v1384, 1e-10
      %v1427 = vmax.f32 %v1389, 1e-10
      %v1428 = vmax.f32 %v1392, 1e-10
      %v1429 = vmax.f32 %v1397, 1e-10
      %v1430 = vmax.f32 %v1400, 1e-10
      %v1431 = vmax.f32 %v1405, 1e-10
      %v1432 = vmax.f32 %v1408, 1e-10
      %v1433 = vmax.f32 %v1413, 1e-10
      %v1434 = vmax.f32 %v1416, 1e-10
      %v1435 = vlog2.pop %v1419
      %v1436 = vmul.f32 %v1435, 0.6931472
      %v1437 = vlog2.pop %v1420
      %v1438 = vmul.f32 %v1437, 0.6931472
      %v1439 = vlog2.pop %v1421
      %v1440 = vmul.f32 %v1439, 0.6931472
      %v1441 = vlog2.pop %v1422
      %v1442 = vmul.f32 %v1441, 0.6931472
      %v1443 = vlog2.pop %v1423
      %v1444 = vmul.f32 %v1443, 0.6931472
      %v1445 = vlog2.pop %v1424
      %v1446 = vmul.f32 %v1445, 0.6931472
      %v1447 = vlog2.pop %v1425
      %v1448 = vmul.f32 %v1447, 0.6931472
      %v1449 = vlog2.pop %v1426
      %v1450 = vmul.f32 %v1449, 0.6931472
      %v1451 = vlog2.pop %v1427
      %v1452 = vmul.f32 %v1451, 0.6931472
      %v1453 = vlog2.pop %v1428
      %v1454 = vmul.f32 %v1453, 0.6931472
      %v1455 = vlog2.pop %v1429
      %v1456 = vmul.f32 %v1455, 0.6931472
      %v1457 = vlog2.pop %v1430
      %v1458 = vmul.f32 %v1457, 0.6931472
      %v1459 = vlog2.pop %v1431
      %v1460 = vmul.f32 %v1459, 0.6931472
      %v1461 = vlog2.pop %v1432
      %v1462 = vmul.f32 %v1461, 0.6931472
      %v1463 = vlog2.pop %v1433
      %v1464 = vmul.f32 %v1463, 0.6931472
      %v1465 = vlog2.pop %v1434
      %v1466 = vmul.f32 %v1465, 0.6931472
      %v1467 = vmul.f32 %v1436, 0.4342945
      %v1468 = vmul.f32 %v1438, 0.4342945
      %v1469 = vmul.f32 %v1440, 0.4342945
      %v1470 = vmul.f32 %v1442, 0.4342945
      %v1471 = vmul.f32 %v1444, 0.4342945
      %v1472 = vmul.f32 %v1446, 0.4342945
      %v1473 = vmul.f32 %v1448, 0.4342945
      %v1474 = vmul.f32 %v1450, 0.4342945
      %v1475 = vmul.f32 %v1452, 0.4342945
      %v1476 = vmul.f32 %v1454, 0.4342945
      %v1477 = vmul.f32 %v1456, 0.4342945
      %v1478 = vmul.f32 %v1458, 0.4342945
      %v1479 = vmul.f32 %v1460, 0.4342945
      %v1480 = vmul.f32 %v1462, 0.4342945
      %v1481 = vmul.f32 %v1464, 0.4342945
      %v1482 = vmul.f32 %v1466, 0.4342945
      %v1483 = vmul.f32 %v1467, 10.0
      %v1484 = vmul.f32 %v1468, 10.0
      %v1485 = vmul.f32 %v1469, 10.0
      %v1486 = vmul.f32 %v1470, 10.0
      %v1487 = vmul.f32 %v1471, 10.0
      %v1488 = vmul.f32 %v1472, 10.0
      %v1489 = vmul.f32 %v1473, 10.0
      %v1490 = vmul.f32 %v1474, 10.0
      %v1491 = vmul.f32 %v1475, 10.0
      %v1492 = vmul.f32 %v1476, 10.0
      %v1493 = vmul.f32 %v1477, 10.0
      %v1494 = vmul.f32 %v1478, 10.0
      %v1495 = vmul.f32 %v1479, 10.0
      %v1496 = vmul.f32 %v1480, 10.0
      %v1497 = vmul.f32 %v1481, 10.0
      %v1498 = vmul.f32 %v1482, 10.0
      %v1499 = vmax.f32 %v1483, %v663
      %v1500 = vmax.f32 %v1484, %v663
      %v1501 = vmax.f32 %v1485, %v663
      %v1502 = vmax.f32 %v1486, %v663
      %v1503 = vmax.f32 %v1487, %v663
      %v1504 = vmax.f32 %v1488, %v663
      %v1505 = vmax.f32 %v1489, %v663
      %v1506 = vmax.f32 %v1490, %v663
      %v1507 = vmax.f32 %v1491, %v663
      %v1508 = vmax.f32 %v1492, %v663
      %v1509 = vmax.f32 %v1493, %v663
      %v1510 = vmax.f32 %v1494, %v663
      %v1511 = vmax.f32 %v1495, %v663
      %v1512 = vmax.f32 %v1496, %v663
      %v1513 = vmax.f32 %v1497, %v663
      %v1514 = vmax.f32 %v1498, %v663
      %1515 = vmatprep.subr.mxu0 0.0
      %1516 = vmatpush1.msra.mxu0 %v1514
      %1517 = vmatprep.subr.mxu0 0.0
      %1518 = vmatpush1.msra.mxu0 %v1513
      %1519 = vmatprep.subr.mxu0 0.0
      %1520 = vmatpush1.msra.mxu0 %v1512
      %1521 = vmatprep.subr.mxu0 0.0
      %1522 = vmatpush1.msra.mxu0 %v1511
      %1523 = vmatprep.subr.mxu0 0.0
      %1524 = vmatpush1.msra.mxu0 %v1510
      %1525 = vmatprep.subr.mxu0 0.0
      %1526 = vmatpush1.msra.mxu0 %v1509
      %1527 = vmatprep.subr.mxu0 0.0
      %1528 = vmatpush1.msra.mxu0 %v1508
      %1529 = vmatprep.subr.mxu0 0.0
      %1530 = vmatpush1.msra.mxu0 %v1507
      %1531 = vmatprep.subr.mxu0 0.0
      %1532 = vmatpush1.msra.mxu0 %v1506
      %1533 = vmatprep.subr.mxu0 0.0
      %1534 = vmatpush1.msra.mxu0 %v1505
      %1535 = vmatprep.subr.mxu0 0.0
      %1536 = vmatpush1.msra.mxu0 %v1504
      %1537 = vmatprep.subr.mxu0 0.0
      %1538 = vmatpush1.msra.mxu0 %v1503
      %1539 = vmatprep.subr.mxu0 0.0
      %1540 = vmatpush1.msra.mxu0 %v1502
      %1541 = vmatprep.subr.mxu0 0.0
      %1542 = vmatpush1.msra.mxu0 %v1501
      %1543 = vmatprep.subr.mxu0 0.0
      %1544 = vmatpush1.msra.mxu0 %v1500
      %1545 = vmatprep.subr.mxu0 0.0
      %1546 = vmatpush1.msra.mxu0 %v1499
      %1547 = vmatprep.subr.mxu0 0.0
      %1548 = vmatpush2.msra.mxu0 0.0
      %1549 = vmatprep.subr.mxu0 0.0
      %1550 = vmatpush2.msra.mxu0 0.0
      %1551 = vmatprep.subr.mxu0 0.0
      %1552 = vmatpush2.msra.mxu0 0.0
      %1553 = vmatprep.subr.mxu0 0.0
      %1554 = vmatpush2.msra.mxu0 0.0
      %1555 = vmatprep.subr.mxu0 0.0
      %1556 = vmatpush2.msra.mxu0 0.0
      %1557 = vmatprep.subr.mxu0 0.0
      %1558 = vmatpush2.msra.mxu0 0.0
      %1559 = vmatprep.subr.mxu0 0.0
      %1560 = vmatpush2.msra.mxu0 0.0
      %1561 = vmatprep.subr.mxu0 0.0
      %1562 = vmatpush2.msra.mxu0 0.0
      %1563 = vmatprep.subr.mxu0 0.0
      %1564 = vmatpush2.msra.mxu0 0.0
      %1565 = vmatprep.subr.mxu0 0.0
      %1566 = vmatpush2.msra.mxu0 0.0
      %1567 = vmatprep.subr.mxu0 0.0
      %1568 = vmatpush2.msra.mxu0 0.0
      %1569 = vmatprep.subr.mxu0 0.0
      %1570 = vmatpush2.msra.mxu0 0.0
      %1571 = vmatprep.subr.mxu0 0.0
      %1572 = vmatpush2.msra.mxu0 0.0
      %1573 = vmatprep.subr.mxu0 0.0
      %1574 = vmatpush2.msra.mxu0 0.0
      %1575 = vmatprep.subr.mxu0 0.0
      %1576 = vmatpush2.msra.mxu0 0.0
      %1577 = vmatprep.subr.mxu0 0.0
      %1578 = vmatpush2.msra.mxu0 0.0
      %1579 = vmatprep.mubr.f32.mxu0 0.0
      %1580 = vmatmul.mubr.f32.gmra.mxu0 %v263
      %v1581 = vpop.f32.mrf.mxu0
      %v1582 = vadd.f32 0.0, %v1581
      %v1583 = vpop.f32.mrf.mxu0
      %1584 = vmatprep.mubr.f32.mxu0 0.0
      %1585 = vmatmul.mubr.f32.gmra.mxu0 %v264
      %v1586 = vpop.f32.mrf.mxu0
      %v1587 = vadd.f32 0.0, %v1586
      %v1588 = vpop.f32.mrf.mxu0
      %1589 = vmatprep.mubr.f32.mxu0 0.0
      %1590 = vmatmul.mubr.f32.gmra.mxu0 %v265
      %v1591 = vpop.f32.mrf.mxu0
      %v1592 = vadd.f32 0.0, %v1591
      %v1593 = vpop.f32.mrf.mxu0
      %1594 = vmatprep.mubr.f32.mxu0 0.0
      %1595 = vmatmul.mubr.f32.gmra.mxu0 %v266
      %v1596 = vpop.f32.mrf.mxu0
      %v1597 = vadd.f32 0.0, %v1596
      %v1598 = vpop.f32.mrf.mxu0
      %1599 = vmatprep.mubr.f32.mxu0 0.0
      %1600 = vmatmul.mubr.f32.gmra.mxu0 %v267
      %v1601 = vpop.f32.mrf.mxu0
      %v1602 = vadd.f32 0.0, %v1601
      %v1603 = vpop.f32.mrf.mxu0
      %1604 = vdwg.mxu0
      %s1605 = scalar_lea.vmem %s245, 80
      %1606 = vst [vmem:[%s1605] sm:$0xff] %v1582
      %1607 = vst [vmem:[%s1605 + $0x8] sm:$0xff] %v1587
      %1608 = vst [vmem:[%s1605 + $0x10] sm:$0xff] %v1592
      %1609 = vst [vmem:[%s1605 + $0x18] sm:$0xff] %v1597
      %1610 = vst [vmem:[%s1605 + $0x20] sm:$0xff] %v1602
      %s1611 = scalar_lea.vmem %s237, 384
      %v1612 = vld [vmem:[%s1611] sm:$0xf]
      %v1613 = vld [vmem:[%s1611 + $0x4] sm:$0xf]
      %v1614 = vld [vmem:[%s1611 + $0x8] sm:$0xf]
      %v1615 = vld [vmem:[%s1611 + $0xc] sm:$0xf]
      %v1616 = vld [vmem:[%s1611 + $0x10] sm:$0xf]
      %v1617 = vld [vmem:[%s1611 + $0x14] sm:$0xf]
      %v1618 = vld [vmem:[%s1611 + $0x18] sm:$0xf]
      %v1619 = vld [vmem:[%s1611 + $0x1c] sm:$0xf]
      %v1620 = vld [vmem:[%s1611 + $0x20] sm:$0xf]
      %v1621 = vld [vmem:[%s1611 + $0x24] sm:$0xf]
      %v1622 = vld [vmem:[%s1611 + $0x28] sm:$0xf]
      %v1623 = vld [vmem:[%s1611 + $0x2c] sm:$0xf]
      %v1624 = vld [vmem:[%s1611 + $0x30] sm:$0xf]
      %v1625 = vld [vmem:[%s1611 + $0x34] sm:$0xf]
      %v1626 = vld [vmem:[%s1611 + $0x38] sm:$0xf]
      %v1627 = vld [vmem:[%s1611 + $0x3c] sm:$0xf]
      %v1628 = vld [vmem:[%s1611 + $0x40] sm:$0xf]
      %v1629 = vld [vmem:[%s1611 + $0x44] sm:$0xf]
      %v1630 = vld [vmem:[%s1611 + $0x48] sm:$0xf]
      %v1631 = vld [vmem:[%s1611 + $0x4c] sm:$0xf]
      %v1632 = vld [vmem:[%s1611 + $0x50] sm:$0xf]
      %v1633 = vld [vmem:[%s1611 + $0x54] sm:$0xf]
      %v1634 = vld [vmem:[%s1611 + $0x58] sm:$0xf]
      %v1635 = vld [vmem:[%s1611 + $0x5c] sm:$0xf]
      %v1636 = vld [vmem:[%s1611 + $0x60] sm:$0xf]
      %v1637 = vld [vmem:[%s1611 + $0x64] sm:$0xf]
      %v1638 = vld [vmem:[%s1611 + $0x68] sm:$0xf]
      %v1639 = vld [vmem:[%s1611 + $0x6c] sm:$0xf]
      %v1640 = vld [vmem:[%s1611 + $0x70] sm:$0xf]
      %v1641 = vld [vmem:[%s1611 + $0x74] sm:$0xf]
      %v1642 = vld [vmem:[%s1611 + $0x78] sm:$0xf]
      %v1643 = vld [vmem:[%s1611 + $0x7c] sm:$0xf]
      %v1676 = vunpack.c.l.b16 %v1612
      %v1677 = vunpack.c.l.b16 %v1613
      %v1678 = vunpack.c.l.b16 %v1614
      %v1679 = vunpack.c.l.b16 %v1615
      %v1680 = vunpack.c.l.b16 %v1616
      %v1681 = vunpack.c.l.b16 %v1617
      %v1682 = vunpack.c.l.b16 %v1618
      %v1683 = vunpack.c.l.b16 %v1619
      %v1684 = vunpack.c.l.b16 %v1620
      %v1685 = vunpack.c.l.b16 %v1621
      %v1686 = vunpack.c.l.b16 %v1622
      %v1687 = vunpack.c.l.b16 %v1623
      %v1688 = vunpack.c.l.b16 %v1624
      %v1689 = vunpack.c.l.b16 %v1625
      %v1690 = vunpack.c.l.b16 %v1626
      %v1691 = vunpack.c.l.b16 %v1627
      %v1692 = vunpack.c.l.b16 %v1628
      %v1693 = vunpack.c.l.b16 %v1629
      %v1694 = vunpack.c.l.b16 %v1630
      %v1695 = vunpack.c.l.b16 %v1631
      %v1696 = vunpack.c.l.b16 %v1632
      %v1697 = vunpack.c.l.b16 %v1633
      %v1698 = vunpack.c.l.b16 %v1634
      %v1699 = vunpack.c.l.b16 %v1635
      %v1700 = vunpack.c.l.b16 %v1636
      %v1701 = vunpack.c.l.b16 %v1637
      %v1702 = vunpack.c.l.b16 %v1638
      %v1703 = vunpack.c.l.b16 %v1639
      %v1704 = vunpack.c.l.b16 %v1640
      %v1705 = vunpack.c.l.b16 %v1641
      %v1706 = vunpack.c.l.b16 %v1642
      %v1707 = vunpack.c.l.b16 %v1643
      %v1708 = vpack.c.b16 %v1677, %v1676
      %v1709 = vpack.c.b16 %v1679, %v1678
      %v1710 = vpack.c.b16 %v1681, %v1680
      %v1711 = vpack.c.b16 %v1683, %v1682
      %v1712 = vpack.c.b16 %v1685, %v1684
      %v1713 = vpack.c.b16 %v1687, %v1686
      %v1714 = vpack.c.b16 %v1689, %v1688
      %v1715 = vpack.c.b16 %v1691, %v1690
      %v1716 = vpack.c.b16 %v1693, %v1692
      %v1717 = vpack.c.b16 %v1695, %v1694
      %v1718 = vpack.c.b16 %v1697, %v1696
      %v1719 = vpack.c.b16 %v1699, %v1698
      %v1720 = vpack.c.b16 %v1701, %v1700
      %v1721 = vpack.c.b16 %v1703, %v1702
      %v1722 = vpack.c.b16 %v1705, %v1704
      %v1723 = vpack.c.b16 %v1707, %v1706
      %1740 = vmatprep.subr.bf16.mxu0 0
      %1741 = vmatpush1.bf16.msra.mxu0 %v1715
      %1742 = vmatprep.subr.bf16.mxu0 0
      %1743 = vmatpush1.bf16.msra.mxu0 %v1714
      %1744 = vmatprep.subr.bf16.mxu0 0
      %1745 = vmatpush1.bf16.msra.mxu0 %v1713
      %1746 = vmatprep.subr.bf16.mxu0 0
      %1747 = vmatpush1.bf16.msra.mxu0 %v1712
      %1748 = vmatprep.subr.bf16.mxu0 0
      %1749 = vmatpush1.bf16.msra.mxu0 %v1711
      %1750 = vmatprep.subr.bf16.mxu0 0
      %1751 = vmatpush1.bf16.msra.mxu0 %v1710
      %1752 = vmatprep.subr.bf16.mxu0 0
      %1753 = vmatpush1.bf16.msra.mxu0 %v1709
      %1754 = vmatprep.subr.bf16.mxu0 0
      %1755 = vmatpush1.bf16.msra.mxu0 %v1708
      %1756 = vmatprep.subr.bf16.mxu0 0
      %1757 = vmatpush2.bf16.msra.mxu0 %v1723
      %1758 = vmatprep.subr.bf16.mxu0 0
      %1759 = vmatpush2.bf16.msra.mxu0 %v1722
      %1760 = vmatprep.subr.bf16.mxu0 0
      %1761 = vmatpush2.bf16.msra.mxu0 %v1721
      %1762 = vmatprep.subr.bf16.mxu0 0
      %1763 = vmatpush2.bf16.msra.mxu0 %v1720
      %1764 = vmatprep.subr.bf16.mxu0 0
      %1765 = vmatpush2.bf16.msra.mxu0 %v1719
      %1766 = vmatprep.subr.bf16.mxu0 0
      %1767 = vmatpush2.bf16.msra.mxu0 %v1718
      %1768 = vmatprep.subr.bf16.mxu0 0
      %1769 = vmatpush2.bf16.msra.mxu0 %v1717
      %1770 = vmatprep.subr.bf16.mxu0 0
      %1771 = vmatpush2.bf16.msra.mxu0 %v1716
      %1772 = vmatprep.mubr.bf16.mxu0 %v359
      %1773 = vmatmul.mubr.bf16.gmra.mxu0 %v358
      %v1774 = vpop.f32.mrf.mxu0
      %v1775 = vadd.f32 0.0, %v1774
      %v1776 = vpop.f32.mrf.mxu0
      %v1777 = vpop.f32.mrf.mxu0
      %v1778 = vadd.f32 0.0, %v1777
      %v1779 = vpop.f32.mrf.mxu0
      %1780 = vmatprep.mubr.bf16.mxu0 %v361
      %1781 = vmatmul.mubr.bf16.gmra.mxu0 %v360
      %v1782 = vpop.f32.mrf.mxu0
      %v1783 = vadd.f32 0.0, %v1782
      %v1784 = vpop.f32.mrf.mxu0
      %v1785 = vpop.f32.mrf.mxu0
      %v1786 = vadd.f32 0.0, %v1785
      %v1787 = vpop.f32.mrf.mxu0
      %1788 = vmatprep.mubr.bf16.mxu0 %v363
      %1789 = vmatmul.mubr.bf16.gmra.mxu0 %v362
      %v1790 = vpop.f32.mrf.mxu0
      %v1791 = vadd.f32 0.0, %v1790
      %v1792 = vpop.f32.mrf.mxu0
      %v1793 = vpop.f32.mrf.mxu0
      %v1794 = vadd.f32 0.0, %v1793
      %v1795 = vpop.f32.mrf.mxu0
      %1796 = vmatprep.mubr.bf16.mxu0 %v365
      %1797 = vmatmul.mubr.bf16.gmra.mxu0 %v364
      %v1798 = vpop.f32.mrf.mxu0
      %v1799 = vadd.f32 0.0, %v1798
      %v1800 = vpop.f32.mrf.mxu0
      %v1801 = vpop.f32.mrf.mxu0
      %v1802 = vadd.f32 0.0, %v1801
      %v1803 = vpop.f32.mrf.mxu0
      %1804 = vmatprep.mubr.bf16.mxu0 %v367
      %1805 = vmatmul.mubr.bf16.gmra.mxu0 %v366
      %v1806 = vpop.f32.mrf.mxu0
      %v1807 = vadd.f32 0.0, %v1806
      %v1808 = vpop.f32.mrf.mxu0
      %v1809 = vpop.f32.mrf.mxu0
      %v1810 = vadd.f32 0.0, %v1809
      %v1811 = vpop.f32.mrf.mxu0
      %1812 = vmatprep.mubr.bf16.mxu0 %v369
      %1813 = vmatmul.mubr.bf16.gmra.mxu0 %v368
      %v1814 = vpop.f32.mrf.mxu0
      %v1815 = vadd.f32 0.0, %v1814
      %v1816 = vpop.f32.mrf.mxu0
      %v1817 = vpop.f32.mrf.mxu0
      %v1818 = vadd.f32 0.0, %v1817
      %v1819 = vpop.f32.mrf.mxu0
      %1820 = vmatprep.mubr.bf16.mxu0 %v371
      %1821 = vmatmul.mubr.bf16.gmra.mxu0 %v370
      %v1822 = vpop.f32.mrf.mxu0
      %v1823 = vadd.f32 0.0, %v1822
      %v1824 = vpop.f32.mrf.mxu0
      %v1825 = vpop.f32.mrf.mxu0
      %v1826 = vadd.f32 0.0, %v1825
      %v1827 = vpop.f32.mrf.mxu0
      %1828 = vmatprep.mubr.bf16.mxu0 %v373
      %1829 = vmatmul.mubr.bf16.gmra.mxu0 %v372
      %v1830 = vpop.f32.mrf.mxu0
      %v1831 = vadd.f32 0.0, %v1830
      %v1832 = vpop.f32.mrf.mxu0
      %v1833 = vpop.f32.mrf.mxu0
      %v1834 = vadd.f32 0.0, %v1833
      %v1835 = vpop.f32.mrf.mxu0
      %1836 = vdwg.mxu0
      %v1837 = vmax.f32 %v1775, 1e-10
      %v1838 = vmax.f32 %v1778, 1e-10
      %v1839 = vmax.f32 %v1783, 1e-10
      %v1840 = vmax.f32 %v1786, 1e-10
      %v1841 = vmax.f32 %v1791, 1e-10
      %v1842 = vmax.f32 %v1794, 1e-10
      %v1843 = vmax.f32 %v1799, 1e-10
      %v1844 = vmax.f32 %v1802, 1e-10
      %v1845 = vmax.f32 %v1807, 1e-10
      %v1846 = vmax.f32 %v1810, 1e-10
      %v1847 = vmax.f32 %v1815, 1e-10
      %v1848 = vmax.f32 %v1818, 1e-10
      %v1849 = vmax.f32 %v1823, 1e-10
      %v1850 = vmax.f32 %v1826, 1e-10
      %v1851 = vmax.f32 %v1831, 1e-10
      %v1852 = vmax.f32 %v1834, 1e-10
      %v1853 = vlog2.pop %v1837
      %v1854 = vmul.f32 %v1853, 0.6931472
      %v1855 = vlog2.pop %v1838
      %v1856 = vmul.f32 %v1855, 0.6931472
      %v1857 = vlog2.pop %v1839
      %v1858 = vmul.f32 %v1857, 0.6931472
      %v1859 = vlog2.pop %v1840
      %v1860 = vmul.f32 %v1859, 0.6931472
      %v1861 = vlog2.pop %v1841
      %v1862 = vmul.f32 %v1861, 0.6931472
      %v1863 = vlog2.pop %v1842
      %v1864 = vmul.f32 %v1863, 0.6931472
      %v1865 = vlog2.pop %v1843
      %v1866 = vmul.f32 %v1865, 0.6931472
      %v1867 = vlog2.pop %v1844
      %v1868 = vmul.f32 %v1867, 0.6931472
      %v1869 = vlog2.pop %v1845
      %v1870 = vmul.f32 %v1869, 0.6931472
      %v1871 = vlog2.pop %v1846
      %v1872 = vmul.f32 %v1871, 0.6931472
      %v1873 = vlog2.pop %v1847
      %v1874 = vmul.f32 %v1873, 0.6931472
      %v1875 = vlog2.pop %v1848
      %v1876 = vmul.f32 %v1875, 0.6931472
      %v1877 = vlog2.pop %v1849
      %v1878 = vmul.f32 %v1877, 0.6931472
      %v1879 = vlog2.pop %v1850
      %v1880 = vmul.f32 %v1879, 0.6931472
      %v1881 = vlog2.pop %v1851
      %v1882 = vmul.f32 %v1881, 0.6931472
      %v1883 = vlog2.pop %v1852
      %v1884 = vmul.f32 %v1883, 0.6931472
      %v1885 = vmul.f32 %v1854, 0.4342945
      %v1886 = vmul.f32 %v1856, 0.4342945
      %v1887 = vmul.f32 %v1858, 0.4342945
      %v1888 = vmul.f32 %v1860, 0.4342945
      %v1889 = vmul.f32 %v1862, 0.4342945
      %v1890 = vmul.f32 %v1864, 0.4342945
      %v1891 = vmul.f32 %v1866, 0.4342945
      %v1892 = vmul.f32 %v1868, 0.4342945
      %v1893 = vmul.f32 %v1870, 0.4342945
      %v1894 = vmul.f32 %v1872, 0.4342945
      %v1895 = vmul.f32 %v1874, 0.4342945
      %v1896 = vmul.f32 %v1876, 0.4342945
      %v1897 = vmul.f32 %v1878, 0.4342945
      %v1898 = vmul.f32 %v1880, 0.4342945
      %v1899 = vmul.f32 %v1882, 0.4342945
      %v1900 = vmul.f32 %v1884, 0.4342945
      %v1901 = vmul.f32 %v1885, 10.0
      %v1902 = vmul.f32 %v1886, 10.0
      %v1903 = vmul.f32 %v1887, 10.0
      %v1904 = vmul.f32 %v1888, 10.0
      %v1905 = vmul.f32 %v1889, 10.0
      %v1906 = vmul.f32 %v1890, 10.0
      %v1907 = vmul.f32 %v1891, 10.0
      %v1908 = vmul.f32 %v1892, 10.0
      %v1909 = vmul.f32 %v1893, 10.0
      %v1910 = vmul.f32 %v1894, 10.0
      %v1911 = vmul.f32 %v1895, 10.0
      %v1912 = vmul.f32 %v1896, 10.0
      %v1913 = vmul.f32 %v1897, 10.0
      %v1914 = vmul.f32 %v1898, 10.0
      %v1915 = vmul.f32 %v1899, 10.0
      %v1916 = vmul.f32 %v1900, 10.0
      %v1917 = vmax.f32 %v1901, %v663
      %v1918 = vmax.f32 %v1902, %v663
      %v1919 = vmax.f32 %v1903, %v663
      %v1920 = vmax.f32 %v1904, %v663
      %v1921 = vmax.f32 %v1905, %v663
      %v1922 = vmax.f32 %v1906, %v663
      %v1923 = vmax.f32 %v1907, %v663
      %v1924 = vmax.f32 %v1908, %v663
      %v1925 = vmax.f32 %v1909, %v663
      %v1926 = vmax.f32 %v1910, %v663
      %v1927 = vmax.f32 %v1911, %v663
      %v1928 = vmax.f32 %v1912, %v663
      %v1929 = vmax.f32 %v1913, %v663
      %v1930 = vmax.f32 %v1914, %v663
      %v1931 = vmax.f32 %v1915, %v663
      %v1932 = vmax.f32 %v1916, %v663
      %1933 = vmatprep.subr.mxu0 0.0
      %1934 = vmatpush1.msra.mxu0 %v1932
      %1935 = vmatprep.subr.mxu0 0.0
      %1936 = vmatpush1.msra.mxu0 %v1931
      %1937 = vmatprep.subr.mxu0 0.0
      %1938 = vmatpush1.msra.mxu0 %v1930
      %1939 = vmatprep.subr.mxu0 0.0
      %1940 = vmatpush1.msra.mxu0 %v1929
      %1941 = vmatprep.subr.mxu0 0.0
      %1942 = vmatpush1.msra.mxu0 %v1928
      %1943 = vmatprep.subr.mxu0 0.0
      %1944 = vmatpush1.msra.mxu0 %v1927
      %1945 = vmatprep.subr.mxu0 0.0
      %1946 = vmatpush1.msra.mxu0 %v1926
      %1947 = vmatprep.subr.mxu0 0.0
      %1948 = vmatpush1.msra.mxu0 %v1925
      %1949 = vmatprep.subr.mxu0 0.0
      %1950 = vmatpush1.msra.mxu0 %v1924
      %1951 = vmatprep.subr.mxu0 0.0
      %1952 = vmatpush1.msra.mxu0 %v1923
      %1953 = vmatprep.subr.mxu0 0.0
      %1954 = vmatpush1.msra.mxu0 %v1922
      %1955 = vmatprep.subr.mxu0 0.0
      %1956 = vmatpush1.msra.mxu0 %v1921
      %1957 = vmatprep.subr.mxu0 0.0
      %1958 = vmatpush1.msra.mxu0 %v1920
      %1959 = vmatprep.subr.mxu0 0.0
      %1960 = vmatpush1.msra.mxu0 %v1919
      %1961 = vmatprep.subr.mxu0 0.0
      %1962 = vmatpush1.msra.mxu0 %v1918
      %1963 = vmatprep.subr.mxu0 0.0
      %1964 = vmatpush1.msra.mxu0 %v1917
      %1965 = vmatprep.subr.mxu0 0.0
      %1966 = vmatpush2.msra.mxu0 0.0
      %1967 = vmatprep.subr.mxu0 0.0
      %1968 = vmatpush2.msra.mxu0 0.0
      %1969 = vmatprep.subr.mxu0 0.0
      %1970 = vmatpush2.msra.mxu0 0.0
      %1971 = vmatprep.subr.mxu0 0.0
      %1972 = vmatpush2.msra.mxu0 0.0
      %1973 = vmatprep.subr.mxu0 0.0
      %1974 = vmatpush2.msra.mxu0 0.0
      %1975 = vmatprep.subr.mxu0 0.0
      %1976 = vmatpush2.msra.mxu0 0.0
      %1977 = vmatprep.subr.mxu0 0.0
      %1978 = vmatpush2.msra.mxu0 0.0
      %1979 = vmatprep.subr.mxu0 0.0
      %1980 = vmatpush2.msra.mxu0 0.0
      %1981 = vmatprep.subr.mxu0 0.0
      %1982 = vmatpush2.msra.mxu0 0.0
      %1983 = vmatprep.subr.mxu0 0.0
      %1984 = vmatpush2.msra.mxu0 0.0
      %1985 = vmatprep.subr.mxu0 0.0
      %1986 = vmatpush2.msra.mxu0 0.0
      %1987 = vmatprep.subr.mxu0 0.0
      %1988 = vmatpush2.msra.mxu0 0.0
      %1989 = vmatprep.subr.mxu0 0.0
      %1990 = vmatpush2.msra.mxu0 0.0
      %1991 = vmatprep.subr.mxu0 0.0
      %1992 = vmatpush2.msra.mxu0 0.0
      %1993 = vmatprep.subr.mxu0 0.0
      %1994 = vmatpush2.msra.mxu0 0.0
      %1995 = vmatprep.subr.mxu0 0.0
      %1996 = vmatpush2.msra.mxu0 0.0
      %1997 = vmatprep.mubr.f32.mxu0 0.0
      %1998 = vmatmul.mubr.f32.gmra.mxu0 %v263
      %v1999 = vpop.f32.mrf.mxu0
      %v2000 = vadd.f32 0.0, %v1999
      %v2001 = vpop.f32.mrf.mxu0
      %2002 = vmatprep.mubr.f32.mxu0 0.0
      %2003 = vmatmul.mubr.f32.gmra.mxu0 %v264
      %v2004 = vpop.f32.mrf.mxu0
      %v2005 = vadd.f32 0.0, %v2004
      %v2006 = vpop.f32.mrf.mxu0
      %2007 = vmatprep.mubr.f32.mxu0 0.0
      %2008 = vmatmul.mubr.f32.gmra.mxu0 %v265
      %v2009 = vpop.f32.mrf.mxu0
      %v2010 = vadd.f32 0.0, %v2009
      %v2011 = vpop.f32.mrf.mxu0
      %2012 = vmatprep.mubr.f32.mxu0 0.0
      %2013 = vmatmul.mubr.f32.gmra.mxu0 %v266
      %v2014 = vpop.f32.mrf.mxu0
      %v2015 = vadd.f32 0.0, %v2014
      %v2016 = vpop.f32.mrf.mxu0
      %2017 = vmatprep.mubr.f32.mxu0 0.0
      %2018 = vmatmul.mubr.f32.gmra.mxu0 %v267
      %v2019 = vpop.f32.mrf.mxu0
      %v2020 = vadd.f32 0.0, %v2019
      %v2021 = vpop.f32.mrf.mxu0
      %2022 = vdwg.mxu0
      %s2023 = scalar_lea.vmem %s245, 120
      %2024 = vst [vmem:[%s2023] sm:$0xff] %v2000
      %2025 = vst [vmem:[%s2023 + $0x8] sm:$0xff] %v2005
      %2026 = vst [vmem:[%s2023 + $0x10] sm:$0xff] %v2010
      %2027 = vst [vmem:[%s2023 + $0x18] sm:$0xff] %v2015
      %2028 = vst [vmem:[%s2023 + $0x20] sm:$0xff] %v2020
      %p2029 = scmp.lt.s32.totalorder %s19, 1
      %s2030 = scalar_select %p2029, %s19, 1
      %p2031 = scmp.lt.s32.totalorder %s20, 0
      %s2032 = scalar_select %p2031, %s20, 0
      %s2033 = smul.addr %s2030, 20
      %s2034 = sadd.s32 %s2032, %s2033
      %s2035 = smul.addr %s2034, 8
      %s2036 = scalar_lea.vmem %s4, %s2035
      // Predicated region
      $region37: #{specto_mfcc.3} parent=35 // pred_check
        %p2037 = pneg %p143
      $region38: #{specto_mfcc.3} parent=35 // pred_check_branch
        %2039 = sbr.rel (%p2037) target = $region40
      $region39: #{specto_mfcc.3} parent=35 // pred_region
        _
      $region40: #{specto_mfcc.3} parent=35 // pred_fallthru
        _
    $region36: #{specto_mfcc.3} parent=5 // pred_fallthru
      _
    %p2040 = scmp.le.s32.totalorder 2, %s10
    // Predicated region
    $region41: #{specto_mfcc.3} parent=5 // pred_check
      %p2041 = pneg %p2040
    $region42: #{specto_mfcc.3} parent=5 // pred_check_branch
      %2043 = sbr.rel (%p2041) target = $region44
    $region43: #{specto_mfcc.3} parent=5 // pred_region
      %s2044 = ssub.s32 %s10, 2
      // Predicated region
      $region45: #{specto_mfcc.3} parent=43 // pred_check
        %p2045 = pneg %p149
      $region46: #{specto_mfcc.3} parent=43 // pred_check_branch
        %2047 = sbr.rel (%p2045) target = $region48
      $region47: #{specto_mfcc.3} parent=43 // pred_region
        %p2048 = scmp.lt.s32.totalorder %s21, 1
        %s2049 = scalar_select %p2048, %s21, 1
        %p2050 = scmp.lt.s32.totalorder %s22, 0
        %s2051 = scalar_select %p2050, %s22, 0
        %s2052 = smul.addr %s2049, 20
        %s2053 = sadd.s32 %s2051, %s2052
        %s2054 = smul.addr %s2053, 8
        %s2055 = scalar_lea.vmem %s4, %s2054
      $region48: #{specto_mfcc.3} parent=43 // pred_fallthru
        _
    $region44: #{specto_mfcc.3} parent=5 // pred_fallthru
      _
  $region6: #{specto_mfcc.3} parent=0 // loop_footer
    %s14 = sadd.s32 1, %s10
  $region7: #{specto_mfcc.3} parent=0 // loop_footer_branch
    %9 = sbr.rel target = $region3
  $region8: #{specto_mfcc.3} parent=0 // loop_exit
    _

</llo_original>
